<compile_context>
chip_gen: v7x
topology: tpu7x:2x2x1
jax: 0.10.0
libtpu: 0.0.40
codegen_flags: <defaults>
</compile_context>

<pallas_src>
import numpy as np
import jax
import jax.numpy as jnp
from jax.experimental import pallas as pl
from jax.experimental.pallas import tpu as pltpu


def _round_up(x, m):
    return (x + m - 1) // m * m


def deepfwfm_kernel(x_ref, w1_ref, rhs1_ref, sdiag_ref,
                    bd1_ref, wd2_ref, bd2_ref, wd3_ref, bias_ref, out_ref):
    din_pad = rhs1_ref.shape[0]

    x = x_ref[...]                                   # (TB, DIN_PAD) f32
    xb = x.astype(jnp.bfloat16)                      # bf16 operand for the MXU

    # ---- ONE wide MXU matmul against the fused RHS [ 0.5*sym (x) I_E | Wd1 ]
    #      (bf16 x bf16 -> f32 accumulation)
    z = jnp.dot(xb, rhs1_ref[...], preferred_element_type=jnp.float32)
    y = z[:, :din_pad]                               # FwFM quadratic, 0.5 folded
    h1 = jnp.maximum(z[:, din_pad:] + bd1_ref[...], 0.0)    # (TB, HID_PAD)

    # ---- FwFM first + second order folded into ONE f32 VPU mul + lane reduce:
    #   fs[b] = sum_j x*w1  +  0.5*(sum_j x*(x@Mbig) - sum_j x*x*diag(sym))
    mix = w1_ref[...] + y - x * sdiag_ref[...]
    fs = jnp.sum(x * mix, axis=1, keepdims=True)     # (TB, 1)

    # ---- Deep part: [Linear+ReLU]*2 -> Linear(.,1,no bias); dropout = identity
    h2 = jnp.maximum(
        jnp.dot(h1.astype(jnp.bfloat16), wd2_ref[...],
                preferred_element_type=jnp.float32) + bd2_ref[...], 0.0)
    # (HID,1) output layer stays a VPU multiply + lane reduce (no N=1 MXU op).
    deep = jnp.sum(h2 * wd3_ref[...], axis=1, keepdims=True)         # (TB, 1)

    out_ref[...] = fs + deep + bias_ref[0]


def _resident(shape):
    """BlockSpec for a weight pinned in VMEM: constant block index => the
    pipeline fetches it once and never re-DMAs it across grid steps."""
    nd = len(shape)
    return pl.BlockSpec(shape, lambda i, _nd=nd: (0,) * _nd)


def prepare_params(W1, cov, Wd1, bd1, Wd2, bd2, Wd3, bias, E,
                   din_pad, hid_pad):
    """Wrapper-side layout plumbing: symmetrize, fold 0.5, Kronecker-expand,
    pad, fuse [Mbig | Wd1], and cast MXU weights to bf16."""
    F_ = W1.shape[0]
    din = F_ * E
    hid = Wd2.shape[0]
    sym = 0.5 * (cov + cov.T)                                   # (F, F)
    # 0.5 second-order factor folded into the matmul weights (review item).
    mbig = 0.5 * jnp.kron(sym, jnp.eye(E, dtype=sym.dtype))     # (F*E, F*E)
    mbig = jnp.pad(mbig, ((0, din_pad - din), (0, din_pad - din)))
    wd1p = jnp.pad(Wd1, ((0, din_pad - din), (0, hid_pad - hid)))
    # Fused RHS shared by the FwFM quadratic and deep layer 1 (same LHS x).
    rhs1 = jnp.concatenate([mbig, wd1p], axis=1).astype(jnp.bfloat16)

    sdiag = 0.5 * jnp.repeat(jnp.diagonal(sym), E)              # (F*E,)
    sdiag = jnp.pad(sdiag, (0, din_pad - din)).reshape(1, din_pad)
    w1row = jnp.pad(W1.reshape(-1), (0, din_pad - din)).reshape(1, din_pad)
    bd1p = jnp.pad(bd1, (0, hid_pad - hid)).reshape(1, hid_pad)
    wd2p = jnp.pad(Wd2, ((0, hid_pad - hid), (0, hid_pad - hid))
                   ).astype(jnp.bfloat16)
    bd2p = jnp.pad(bd2, (0, hid_pad - hid)).reshape(1, hid_pad)
    wd3row = jnp.pad(Wd3[:, 0], (0, hid_pad - hid)).reshape(1, hid_pad)
    bias1 = bias.reshape(1).astype(jnp.float32)                 # SMEM scalar
    return (w1row, rhs1, sdiag, bd1p, wd2p, bd2p, wd3row, bias1)


def deepfwfm_forward(X_deep, params, *, tb=None):
    """X_deep: (B, F*E) concatenated field embeddings.  Returns (B,) logits."""
    B, din = X_deep.shape
    (w1row, rhs1, sdiag, bd1p, wd2p, bd2p, wd3row, bias1) = params
    din_pad = rhs1.shape[0]
    hid_pad = wd2p.shape[0]

    if tb is None:
        # Big tiles amortize per-step overhead and fill the MXU's M dim.
        # For large B keep >= 2 grid steps (v7x: 2 TCs share the parallel axis)
        # and cap the tile so intermediates stay small vs. v7x's 64 MiB VMEM.
        if B <= 512:
            tb = _round_up(max(B, 8), 8)
        elif B <= 4096:
            tb = 512
        else:
            tb = 1024
    b_pad = _round_up(B, tb)
    x = jnp.pad(X_deep, ((0, b_pad - B), (0, din_pad - din)))

    flops = (2 * b_pad * (din_pad * (din_pad + hid_pad) + hid_pad * hid_pad)
             + b_pad * (6 * din_pad + 5 * hid_pad))
    bytes_accessed = (2 * (din_pad * (din_pad + hid_pad) + hid_pad * hid_pad)
                      + 4 * (2 * din_pad + 3 * hid_pad + 1)
                      + 4 * b_pad * (din_pad + 1))

    out = pl.pallas_call(
        deepfwfm_kernel,
        out_shape=jax.ShapeDtypeStruct((b_pad, 1), jnp.float32),
        grid=(b_pad // tb,),
        in_specs=[
            pl.BlockSpec((tb, din_pad), lambda i: (i, 0)),      # X batch tile
            _resident((1, din_pad)),                            # w1 row (f32)
            _resident((din_pad, din_pad + hid_pad)),            # [Mbig|Wd1] bf16
            _resident((1, din_pad)),                            # 0.5*diag(sym)
            _resident((1, hid_pad)),                            # bd1
            _resident((hid_pad, hid_pad)),                      # Wd2 bf16
            _resident((1, hid_pad)),                            # bd2
            _resident((1, hid_pad)),                            # wd3 row
            pl.BlockSpec(memory_space=pltpu.MemorySpace.SMEM),  # global bias
        ],
        out_specs=pl.BlockSpec((tb, 1), lambda i: (i, 0)),
        compiler_params=pltpu.CompilerParams(
            dimension_semantics=("parallel",),
            vmem_limit_bytes=64 * 1024 * 1024),
        cost_estimate=pl.CostEstimate(
            flops=flops, transcendentals=0, bytes_accessed=bytes_accessed),
    )(x, w1row, rhs1, sdiag, bd1p, wd2p, bd2p, wd3row, bias1)
    return out[:B, 0]


def embed_fields(Xi, Xv, emb_weights, num):
    """JAX glue replicating the EmbeddingBag loop of DeepFwFM.forward."""
    # TODO(synk): the data-dependent EmbeddingBag gathers stay outside the
    # Pallas kernel (irregular per-row gather has no clean BlockSpec form).
    emb_out = []
    for i in range(len(emb_weights)):
        if i < num:
            # EmbeddingBag(1, E)(zeros) == weight row 0, scaled by numerical value
            V = emb_weights[i][0][None, :] * Xv[:, i][:, None]      # (B, E)
        else:
            idx = Xi[:, i - num, 0]
            V = emb_weights[i][idx]                                 # (B, E)
        emb_out.append(V)
    X_deep = jnp.concatenate(emb_out, axis=1)                       # (B, F*E)
    T = jnp.stack(emb_out, axis=0)                                  # (F, B, E)
    return X_deep, T


def reference_forward(T, W1, cov, X, Wd1, bd1, Wd2, bd2, Wd3, bias):
    """Direct transcription of the PyTorch forward (eval mode), pure JAX f32."""
    sym = 0.5 * (cov + cov.T)
    first = jnp.sum(T * W1[:, None, :], axis=(0, 2))                # (B,)
    outer = jnp.einsum('kbe,lbe->klbe', T, T)
    wo = outer * sym[:, :, None, None]
    q = jnp.sum(wo, axis=(0, 1))
    dpart = jnp.sum(jnp.einsum('kkbe->kbe', wo), axis=0)
    second = jnp.sum(0.5 * (q - dpart), axis=1)                     # (B,)
    h1 = jax.nn.relu(X @ Wd1 + bd1)
    h2 = jax.nn.relu(h1 @ Wd2 + bd2)
    deep = (h2 @ Wd3)[:, 0]
    return first + second + deep + bias[0]


if __name__ == "__main__":
    # --- small, module-consistent config ----------------------------------
    num = 3                                 # numerical fields
    cat_sizes = [11, 7, 5, 9, 13]           # categorical vocab sizes
    feature_sizes = [1] * num + cat_sizes   # as in __init__
    field_size = len(feature_sizes)         # 8 (== num_fea, fc_sparsity='0')
    E = 10                                  # embedding_size (module default)
    deep_hidden = 400                       # deep_layers = [F*E, 400, 400]
    B = 256

    DIN = field_size * E                    # 80
    DIN_PAD = _round_up(DIN, 128)           # 128
    HID_PAD = _round_up(deep_hidden, 128)   # 512

    key = jax.random.PRNGKey(0)
    kit = iter(jax.random.split(key, 40))

    # --- deterministic parameter init (shapes from __init__) ---------------
    emb_weights = []
    for n in feature_sizes:
        s = 1.0 / np.sqrt(n)
        emb_weights.append(
            jax.random.uniform(next(kit), (n, E), jnp.float32, -s, s))

    s = 1.0 / np.sqrt(E)
    W1 = jax.random.uniform(next(kit), (field_size, E), jnp.float32, -s, s)
    s = 1.0 / np.sqrt(field_size)
    cov = jax.random.uniform(next(kit), (field_size, field_size),
                             jnp.float32, -s, s)

    s = 1.0 / np.sqrt(DIN)
    Wd1 = jax.random.uniform(next(kit), (DIN, deep_hidden), jnp.float32, -s, s)
    bd1 = jax.random.uniform(next(kit), (deep_hidden,), jnp.float32, -s, s)
    s = 1.0 / np.sqrt(deep_hidden)
    Wd2 = jax.random.uniform(next(kit), (deep_hidden, deep_hidden),
                             jnp.float32, -s, s)
    bd2 = jax.random.uniform(next(kit), (deep_hidden,), jnp.float32, -s, s)
    Wd3 = jax.random.uniform(next(kit), (deep_hidden, 1), jnp.float32, -s, s)
    bias = jnp.array([0.01], dtype=jnp.float32)

    # --- deterministic example inputs --------------------------------------
    xi_cols = [jax.random.randint(next(kit), (B,), 0, n) for n in cat_sizes]
    Xi = jnp.stack(xi_cols, axis=1)[:, :, None].astype(jnp.int32)  # (B, n_cat, 1)
    Xv = jax.random.uniform(next(kit), (B, field_size), jnp.float32)  # (B, F)

    # --- run ----------------------------------------------------------------
    X_deep, T = embed_fields(Xi, Xv, emb_weights, num)
    params = prepare_params(W1, cov, Wd1, bd1, Wd2, bd2, Wd3, bias, E,
                            DIN_PAD, HID_PAD)
    out = deepfwfm_forward(X_deep, params)
    out = jax.block_until_ready(out)

    ref = reference_forward(T, W1, cov, X_deep, Wd1, bd1, Wd2, bd2, Wd3, bias)
    # Tolerance sized for bf16 MXU operands (f32 accumulation): ~2^-9 relative
    # rounding per operand on the matmul paths vs. the pure-f32 reference.
    np.testing.assert_allclose(np.asarray(out), np.asarray(ref),
                               rtol=1e-2, atol=1e-2)
    print("KERNEL_OK")
</pallas_src>

<mosaic_0001>
module attributes {stable_mosaic.version = 11 : i64} {
  func.func @deepfwfm_kernel(%arg0: i32, %arg1: memref<256x128xf32, #tpu.memory_space<vmem>>, %arg2: memref<1x128xf32, #tpu.memory_space<vmem>>, %arg3: memref<128x640xbf16, #tpu.memory_space<vmem>>, %arg4: memref<1x128xf32, #tpu.memory_space<vmem>>, %arg5: memref<1x512xf32, #tpu.memory_space<vmem>>, %arg6: memref<512x512xbf16, #tpu.memory_space<vmem>>, %arg7: memref<1x512xf32, #tpu.memory_space<vmem>>, %arg8: memref<1x512xf32, #tpu.memory_space<vmem>>, %arg9: memref<1xf32, #tpu.memory_space<smem>>, %arg10: memref<256x1xf32, #tpu.memory_space<vmem>>) attributes {dimension_semantics = [#tpu.dimension_semantics<parallel>], iteration_bounds = array<i64: 1>, scalar_prefetch = 0 : i64, scratch_operands = 0 : i64, tpu.core_type = #tpu.core_type<tc>, window_params = [{transform_indices = @transform_0, window_bounds = array<i64: 256, 128>}, {pipeline_mode = #tpu.pipeline_mode<synchronous>, transform_indices = @transform_1, window_bounds = array<i64: 1, 128>}, {pipeline_mode = #tpu.pipeline_mode<synchronous>, transform_indices = @transform_2, window_bounds = array<i64: 128, 640>}, {pipeline_mode = #tpu.pipeline_mode<synchronous>, transform_indices = @transform_3, window_bounds = array<i64: 1, 128>}, {pipeline_mode = #tpu.pipeline_mode<synchronous>, transform_indices = @transform_4, window_bounds = array<i64: 1, 512>}, {pipeline_mode = #tpu.pipeline_mode<synchronous>, transform_indices = @transform_5, window_bounds = array<i64: 512, 512>}, {pipeline_mode = #tpu.pipeline_mode<synchronous>, transform_indices = @transform_6, window_bounds = array<i64: 1, 512>}, {pipeline_mode = #tpu.pipeline_mode<synchronous>, transform_indices = @transform_7, window_bounds = array<i64: 1, 512>}, {transform_indices = @transform_8, window_bounds = array<i64: 1>}, {transform_indices = @transform_9, window_bounds = array<i64: 256, 1>}]} {
    %c0 = arith.constant 0 : index
    %c0_0 = arith.constant 0 : index
    %0 = vector.load %arg1[%c0, %c0_0] : memref<256x128xf32, #tpu.memory_space<vmem>>, vector<256x128xf32>
    %1 = arith.truncf %0 : vector<256x128xf32> to vector<256x128xbf16>
    %c0_1 = arith.constant 0 : index
    %c0_2 = arith.constant 0 : index
    %2 = vector.load %arg3[%c0_1, %c0_2] : memref<128x640xbf16, #tpu.memory_space<vmem>>, vector<128x640xbf16>
    %cst = arith.constant dense<0.000000e+00> : vector<256x640xf32>
    %3 = tpu.matmul %1, %2, %cst {dimension_numbers = #tpu.dot_dimension_numbers<[1], [0], [0], [1], [0, 0, 1, 1], [], []>} : vector<256x128xbf16>, vector<128x640xbf16>, vector<256x640xf32> -> vector<256x640xf32>
    %4 = vector.extract_strided_slice %3 {offsets = [0, 0], sizes = [256, 128], strides = [1, 1]} : vector<256x640xf32> to vector<256x128xf32>
    %5 = vector.extract_strided_slice %3 {offsets = [0, 128], sizes = [256, 512], strides = [1, 1]} : vector<256x640xf32> to vector<256x512xf32>
    %c0_3 = arith.constant 0 : index
    %c0_4 = arith.constant 0 : index
    %6 = vector.load %arg5[%c0_3, %c0_4] : memref<1x512xf32, #tpu.memory_space<vmem>>, vector<1x512xf32>
    %7 = vector.broadcast %6 : vector<1x512xf32> to vector<256x512xf32>
    %8 = arith.addf %5, %7 : vector<256x512xf32>
    %cst_5 = arith.constant 0.000000e+00 : f32
    %9 = vector.broadcast %cst_5 : f32 to vector<256x512xf32>
    %10 = arith.maximumf %8, %9 : vector<256x512xf32>
    %c0_6 = arith.constant 0 : index
    %c0_7 = arith.constant 0 : index
    %11 = vector.load %arg2[%c0_6, %c0_7] : memref<1x128xf32, #tpu.memory_space<vmem>>, vector<1x128xf32>
    %12 = vector.broadcast %11 : vector<1x128xf32> to vector<256x128xf32>
    %13 = arith.addf %12, %4 : vector<256x128xf32>
    %c0_8 = arith.constant 0 : index
    %c0_9 = arith.constant 0 : index
    %14 = vector.load %arg4[%c0_8, %c0_9] : memref<1x128xf32, #tpu.memory_space<vmem>>, vector<1x128xf32>
    %15 = vector.broadcast %14 : vector<1x128xf32> to vector<256x128xf32>
    %16 = arith.mulf %0, %15 : vector<256x128xf32>
    %17 = arith.subf %13, %16 : vector<256x128xf32>
    %18 = arith.mulf %0, %17 : vector<256x128xf32>
    %cst_10 = arith.constant dense<0.000000e+00> : vector<256xf32>
    %19 = vector.multi_reduction <add>, %18, %cst_10 [1] : vector<256x128xf32> to vector<256xf32>
    %20 = vector.shape_cast %19 : vector<256xf32> to vector<256x1xf32>
    %21 = arith.truncf %10 : vector<256x512xf32> to vector<256x512xbf16>
    %c0_11 = arith.constant 0 : index
    %c0_12 = arith.constant 0 : index
    %22 = vector.load %arg6[%c0_11, %c0_12] : memref<512x512xbf16, #tpu.memory_space<vmem>>, vector<512x512xbf16>
    %cst_13 = arith.constant dense<0.000000e+00> : vector<256x512xf32>
    %23 = tpu.matmul %21, %22, %cst_13 {dimension_numbers = #tpu.dot_dimension_numbers<[1], [0], [0], [1], [0, 0, 1, 1], [], []>} : vector<256x512xbf16>, vector<512x512xbf16>, vector<256x512xf32> -> vector<256x512xf32>
    %c0_14 = arith.constant 0 : index
    %c0_15 = arith.constant 0 : index
    %24 = vector.load %arg7[%c0_14, %c0_15] : memref<1x512xf32, #tpu.memory_space<vmem>>, vector<1x512xf32>
    %25 = vector.broadcast %24 : vector<1x512xf32> to vector<256x512xf32>
    %26 = arith.addf %23, %25 : vector<256x512xf32>
    %cst_16 = arith.constant 0.000000e+00 : f32
    %27 = vector.broadcast %cst_16 : f32 to vector<256x512xf32>
    %28 = arith.maximumf %26, %27 : vector<256x512xf32>
    %c0_17 = arith.constant 0 : index
    %c0_18 = arith.constant 0 : index
    %29 = vector.load %arg8[%c0_17, %c0_18] : memref<1x512xf32, #tpu.memory_space<vmem>>, vector<1x512xf32>
    %30 = vector.broadcast %29 : vector<1x512xf32> to vector<256x512xf32>
    %31 = arith.mulf %28, %30 : vector<256x512xf32>
    %cst_19 = arith.constant dense<0.000000e+00> : vector<256xf32>
    %32 = vector.multi_reduction <add>, %31, %cst_19 [1] : vector<256x512xf32> to vector<256xf32>
    %33 = vector.shape_cast %32 : vector<256xf32> to vector<256x1xf32>
    %34 = arith.addf %20, %33 : vector<256x1xf32>
    %c0_20 = arith.constant 0 : index
    %35 = memref.load %arg9[%c0_20] : memref<1xf32, #tpu.memory_space<smem>>
    %36 = vector.broadcast %35 : f32 to vector<256x1xf32>
    %37 = arith.addf %34, %36 : vector<256x1xf32>
    %c0_21 = arith.constant 0 : index
    %c0_22 = arith.constant 0 : index
    %38 = vector.load %arg10[%c0_21, %c0_22] : memref<256x1xf32, #tpu.memory_space<vmem>>, vector<256x1xf32>
    tpu.vector_store %arg10[%c0_21, %c0_22], %37 {strides = array<i32>} : memref<256x1xf32, #tpu.memory_space<vmem>>, vector<256x1xf32>,
    return
  }
  func.func @transform_0(%arg0: i32) -> (i32, i32) {
    %c0_i32 = arith.constant 0 : i32
    %c0_i32_0 = arith.constant 0 : i32
    return %arg0, %c0_i32 : i32, i32
  }
  func.func @transform_1(%arg0: i32) -> (i32, i32) {
    %c0_i32 = arith.constant 0 : i32
    %c0_i32_0 = arith.constant 0 : i32
    %c0_i32_1 = arith.constant 0 : i32
    return %c0_i32, %c0_i32_0 : i32, i32
  }
  func.func @transform_2(%arg0: i32) -> (i32, i32) {
    %c0_i32 = arith.constant 0 : i32
    %c0_i32_0 = arith.constant 0 : i32
    %c0_i32_1 = arith.constant 0 : i32
    return %c0_i32, %c0_i32_0 : i32, i32
  }
  func.func @transform_3(%arg0: i32) -> (i32, i32) {
    %c0_i32 = arith.constant 0 : i32
    %c0_i32_0 = arith.constant 0 : i32
    %c0_i32_1 = arith.constant 0 : i32
    return %c0_i32, %c0_i32_0 : i32, i32
  }
  func.func @transform_4(%arg0: i32) -> (i32, i32) {
    %c0_i32 = arith.constant 0 : i32
    %c0_i32_0 = arith.constant 0 : i32
    %c0_i32_1 = arith.constant 0 : i32
    return %c0_i32, %c0_i32_0 : i32, i32
  }
  func.func @transform_5(%arg0: i32) -> (i32, i32) {
    %c0_i32 = arith.constant 0 : i32
    %c0_i32_0 = arith.constant 0 : i32
    %c0_i32_1 = arith.constant 0 : i32
    return %c0_i32, %c0_i32_0 : i32, i32
  }
  func.func @transform_6(%arg0: i32) -> (i32, i32) {
    %c0_i32 = arith.constant 0 : i32
    %c0_i32_0 = arith.constant 0 : i32
    %c0_i32_1 = arith.constant 0 : i32
    return %c0_i32, %c0_i32_0 : i32, i32
  }
  func.func @transform_7(%arg0: i32) -> (i32, i32) {
    %c0_i32 = arith.constant 0 : i32
    %c0_i32_0 = arith.constant 0 : i32
    %c0_i32_1 = arith.constant 0 : i32
    return %c0_i32, %c0_i32_0 : i32, i32
  }
  func.func @transform_8(%arg0: i32) -> i32 {
    %c0_i32 = arith.constant 0 : i32
    %c0_i32_0 = arith.constant 0 : i32
    return %c0_i32 : i32
  }
  func.func @transform_9(%arg0: i32) -> (i32, i32) {
    %c0_i32 = arith.constant 0 : i32
    %c0_i32_0 = arith.constant 0 : i32
    return %arg0, %c0_i32 : i32, i32
  }
}

</mosaic_0001>

<llo_original>
// kernel: tpu_custom_call.1
$region0: #{tpu_custom_call.1}
  #allocation0 [shape = 'u32[]', space=smem, size = 0x4, offset = 0x4, fixed_abs, tag = 'smem constant byte address 0x4 - core index']
  #allocation1 [shape = 'u32[144,128]{1,0:T(1,128)}', space=vmem, size = 0x12000, scoped, tag = 'internal scratch']
  #allocation2 [shape = 'f32[1]{0:T(128)S(6)}', space=smem, size = 0x200, scoped, tag = 'scoped memory for tpu_custom_call.1']
  %s0 = inlined_call_operand.hbm [shape: f32[256,128], index: 0, kind: input, shape index: {}]
  %s1 = inlined_call_operand.hbm [shape: f32[1,128], index: 1, kind: input, shape index: {}]
  %s2 = inlined_call_operand.hbm [shape: bf16[128,640], index: 2, kind: input, shape index: {}]
  %s3 = inlined_call_operand.hbm [shape: f32[1,128], index: 3, kind: input, shape index: {}]
  %s4 = inlined_call_operand.hbm [shape: f32[1,512], index: 4, kind: input, shape index: {}]
  %s5 = inlined_call_operand.hbm [shape: bf16[512,512], index: 5, kind: input, shape index: {}]
  %s6 = inlined_call_operand.hbm [shape: f32[1,512], index: 6, kind: input, shape index: {}]
  %s7 = inlined_call_operand.hbm [shape: f32[1,512], index: 7, kind: input, shape index: {}]
  %s8 = inlined_call_operand.<no memory space> [shape: f32[1], index: 8, kind: input, shape index: {}]
  %s9 = inlined_call_operand.hbm [shape: f32[256,1], index: 9, kind: output, shape index: {}]
  %s10 = sld [smem:[#allocation0]]
  $region78: #{tpu_custom_call.1} parent=0
    _
  %s12 = ssub.s32 1, %s10
  %s13 = scalar_select 0, %s12, %s10
  %14 = sst [smem:[#allocation2]] %s8
  $region1: #{tpu_custom_call.1} parent=0
    #allocation3 [shape = 'u8[131072]{0}', space=vmem, size = 0x20000, scoped, tag = 'input window, operand 0, single buffered']
    #allocation4 [shape = 's32[1]{0}', space=sflag, size = 0x4, scoped, tag = 'scoped memory for tpu_custom_call.1']
    #allocation5 [shape = 's32[1]{0}', space=sflag, size = 0x4, scoped, tag = 'scoped memory for tpu_custom_call.1']
    #allocation6 [shape = 'u8[512]{0}', space=vmem, size = 0x400, scoped, tag = 'input window, operand 1, single buffered']
    #allocation7 [shape = 's32[1]{0}', space=sflag, size = 0x4, scoped, tag = 'scoped memory for tpu_custom_call.1']
    #allocation8 [shape = 'u8[163840]{0}', space=vmem, size = 0x28000, scoped, tag = 'input window, operand 2, single buffered']
    #allocation9 [shape = 'u8[512]{0}', space=vmem, size = 0x400, scoped, tag = 'input window, operand 3, single buffered']
    #allocation10 [shape = 's32[1]{0}', space=sflag, size = 0x4, scoped, tag = 'scoped memory for tpu_custom_call.1']
    #allocation11 [shape = 'u8[2048]{0}', space=vmem, size = 0x800, scoped, tag = 'input window, operand 4, single buffered']
    #allocation12 [shape = 'u8[524288]{0}', space=vmem, size = 0x80000, scoped, tag = 'input window, operand 5, single buffered']
    #allocation13 [shape = 's32[1]{0}', space=sflag, size = 0x4, scoped, tag = 'scoped memory for tpu_custom_call.1']
    #allocation14 [shape = 'u8[2048]{0}', space=vmem, size = 0x800, scoped, tag = 'input window, operand 6, single buffered']
    #allocation15 [shape = 'u8[2048]{0}', space=vmem, size = 0x800, scoped, tag = 'input window, operand 7, single buffered']
    #allocation16 [shape = 's32[1]{0}', space=sflag, size = 0x4, scoped, tag = 'scoped memory for tpu_custom_call.1']
    #allocation17 [shape = 'u8[131072]{0}', space=vmem, size = 0x20000, scoped, tag = 'output window, operand 0, single buffered']
    %15 = vsyncpa [#allocation4], 0
    %16 = vsyncpa [#allocation7], 0
    %17 = vsyncpa [#allocation10], 0
    %18 = vsyncpa [#allocation13], 0
    %19 = vsyncpa [#allocation16], 0
    %20 = vsyncpa [#allocation5], 0
    // Predicated region
    $region2: #{tpu_custom_call.1} parent=1 // pred_check
      _
    $region3: #{tpu_custom_call.1} parent=1 // pred_check_branch
      %22 = sbr.rel (0) target = $region5
    $region4: #{tpu_custom_call.1} parent=1 // pred_region
      %s24 = ssub.s32 4096, 4096
      %25 = vsyncadd [#allocation4], %s24
      %s26 = sshll.u32 [#allocation3], 4
      %s27 = int_to_ptr.vmem [resolvable:$true] %s26
      %32 = dma.hbm_to_vmem [thread:$0]  %s0, 4096, %s27, [#allocation4], 128, 128, 8
    $region5: #{tpu_custom_call.1} parent=1 // pred_fallthru
      _
    // Predicated region
    $region6: #{tpu_custom_call.1} parent=1 // pred_check
      _
    $region7: #{tpu_custom_call.1} parent=1 // pred_check_branch
      %34 = sbr.rel (0) target = $region9
    $region8: #{tpu_custom_call.1} parent=1 // pred_region
      %s36 = ssub.s32 16, 16
      %37 = vsyncadd [#allocation7], %s36
      %s39 = sshll.u32 [#allocation6], 4
      %s40 = int_to_ptr.vmem [resolvable:$true] %s39
      %42 = dma.hbm_to_vmem [thread:$0]  %s1, 16, %s40, [#allocation7]
    $region9: #{tpu_custom_call.1} parent=1 // pred_fallthru
      _
    // Predicated region
    $region10: #{tpu_custom_call.1} parent=1 // pred_check
      _
    $region11: #{tpu_custom_call.1} parent=1 // pred_check_branch
      %44 = sbr.rel (0) target = $region13
    $region12: #{tpu_custom_call.1} parent=1 // pred_region
      %s46 = ssub.s32 5120, 5120
      %47 = vsyncadd [#allocation7], %s46
      %s48 = sshll.u32 [#allocation8], 4
      %s49 = int_to_ptr.vmem [resolvable:$true] %s48
      %54 = dma.hbm_to_vmem [thread:$0]  %s2, 5120, %s49, [#allocation7], 320, 320, 20
    $region13: #{tpu_custom_call.1} parent=1 // pred_fallthru
      _
    // Predicated region
    $region14: #{tpu_custom_call.1} parent=1 // pred_check
      _
    $region15: #{tpu_custom_call.1} parent=1 // pred_check_branch
      %56 = sbr.rel (0) target = $region17
    $region16: #{tpu_custom_call.1} parent=1 // pred_region
      %s58 = ssub.s32 16, 16
      %59 = vsyncadd [#allocation10], %s58
      %s61 = sshll.u32 [#allocation9], 4
      %s62 = int_to_ptr.vmem [resolvable:$true] %s61
      %64 = dma.hbm_to_vmem [thread:$0]  %s3, 16, %s62, [#allocation10]
    $region17: #{tpu_custom_call.1} parent=1 // pred_fallthru
      _
    // Predicated region
    $region18: #{tpu_custom_call.1} parent=1 // pred_check
      _
    $region19: #{tpu_custom_call.1} parent=1 // pred_check_branch
      %66 = sbr.rel (0) target = $region21
    $region20: #{tpu_custom_call.1} parent=1 // pred_region
      %s68 = ssub.s32 64, 64
      %69 = vsyncadd [#allocation10], %s68
      %s71 = sshll.u32 [#allocation11], 4
      %s72 = int_to_ptr.vmem [resolvable:$true] %s71
      %74 = dma.hbm_to_vmem [thread:$0]  %s4, 64, %s72, [#allocation10]
    $region21: #{tpu_custom_call.1} parent=1 // pred_fallthru
      _
    // Predicated region
    $region22: #{tpu_custom_call.1} parent=1 // pred_check
      _
    $region23: #{tpu_custom_call.1} parent=1 // pred_check_branch
      %76 = sbr.rel (0) target = $region25
    $region24: #{tpu_custom_call.1} parent=1 // pred_region
      %s78 = ssub.s32 16384, 16384
      %79 = vsyncadd [#allocation13], %s78
      %s80 = sshll.u32 [#allocation12], 4
      %s81 = int_to_ptr.vmem [resolvable:$true] %s80
      %86 = dma.hbm_to_vmem [thread:$0]  %s5, 16384, %s81, [#allocation13], 256, 256, 16
    $region25: #{tpu_custom_call.1} parent=1 // pred_fallthru
      _
    // Predicated region
    $region26: #{tpu_custom_call.1} parent=1 // pred_check
      _
    $region27: #{tpu_custom_call.1} parent=1 // pred_check_branch
      %88 = sbr.rel (0) target = $region29
    $region28: #{tpu_custom_call.1} parent=1 // pred_region
      %s90 = ssub.s32 64, 64
      %91 = vsyncadd [#allocation13], %s90
      %s93 = sshll.u32 [#allocation14], 4
      %s94 = int_to_ptr.vmem [resolvable:$true] %s93
      %96 = dma.hbm_to_vmem [thread:$0]  %s6, 64, %s94, [#allocation13]
    $region29: #{tpu_custom_call.1} parent=1 // pred_fallthru
      _
    // Predicated region
    $region30: #{tpu_custom_call.1} parent=1 // pred_check
      _
    $region31: #{tpu_custom_call.1} parent=1 // pred_check_branch
      %98 = sbr.rel (0) target = $region33
    $region32: #{tpu_custom_call.1} parent=1 // pred_region
      %s100 = ssub.s32 64, 64
      %101 = vsyncadd [#allocation16], %s100
      %s103 = sshll.u32 [#allocation15], 4
      %s104 = int_to_ptr.vmem [resolvable:$true] %s103
      %106 = dma.hbm_to_vmem [thread:$0]  %s7, 64, %s104, [#allocation16]
    $region33: #{tpu_custom_call.1} parent=1 // pred_fallthru
      _
    // Predicated region
    $region34: #{tpu_custom_call.1} parent=1 // pred_check
      _
    $region35: #{tpu_custom_call.1} parent=1 // pred_check_branch
      %108 = sbr.rel (0) target = $region37
    $region36: #{tpu_custom_call.1} parent=1 // pred_region
      _
    $region37: #{tpu_custom_call.1} parent=1 // pred_fallthru
      _
    // Predicated region
    $region38: #{tpu_custom_call.1} parent=1 // pred_check
      _
    $region39: #{tpu_custom_call.1} parent=1 // pred_check_branch
      %110 = sbr.rel (0) target = $region41
    $region40: #{tpu_custom_call.1} parent=1 // pred_region
      %111 = dma.done [#allocation4], 4096
    $region41: #{tpu_custom_call.1} parent=1 // pred_fallthru
      _
    // Predicated region
    $region42: #{tpu_custom_call.1} parent=1 // pred_check
      _
    $region43: #{tpu_custom_call.1} parent=1 // pred_check_branch
      %113 = sbr.rel (0) target = $region45
    $region44: #{tpu_custom_call.1} parent=1 // pred_region
      %114 = dma.done [#allocation7], 16
    $region45: #{tpu_custom_call.1} parent=1 // pred_fallthru
      _
    // Predicated region
    $region46: #{tpu_custom_call.1} parent=1 // pred_check
      _
    $region47: #{tpu_custom_call.1} parent=1 // pred_check_branch
      %116 = sbr.rel (0) target = $region49
    $region48: #{tpu_custom_call.1} parent=1 // pred_region
      %117 = dma.done [#allocation7], 5120
    $region49: #{tpu_custom_call.1} parent=1 // pred_fallthru
      _
    // Predicated region
    $region50: #{tpu_custom_call.1} parent=1 // pred_check
      _
    $region51: #{tpu_custom_call.1} parent=1 // pred_check_branch
      %119 = sbr.rel (0) target = $region53
    $region52: #{tpu_custom_call.1} parent=1 // pred_region
      %120 = dma.done [#allocation10], 16
    $region53: #{tpu_custom_call.1} parent=1 // pred_fallthru
      _
    // Predicated region
    $region54: #{tpu_custom_call.1} parent=1 // pred_check
      _
    $region55: #{tpu_custom_call.1} parent=1 // pred_check_branch
      %122 = sbr.rel (0) target = $region57
    $region56: #{tpu_custom_call.1} parent=1 // pred_region
      %123 = dma.done [#allocation10], 64
    $region57: #{tpu_custom_call.1} parent=1 // pred_fallthru
      _
    // Predicated region
    $region58: #{tpu_custom_call.1} parent=1 // pred_check
      _
    $region59: #{tpu_custom_call.1} parent=1 // pred_check_branch
      %125 = sbr.rel (0) target = $region61
    $region60: #{tpu_custom_call.1} parent=1 // pred_region
      %126 = dma.done [#allocation13], 16384
    $region61: #{tpu_custom_call.1} parent=1 // pred_fallthru
      _
    // Predicated region
    $region62: #{tpu_custom_call.1} parent=1 // pred_check
      _
    $region63: #{tpu_custom_call.1} parent=1 // pred_check_branch
      %128 = sbr.rel (0) target = $region65
    $region64: #{tpu_custom_call.1} parent=1 // pred_region
      %129 = dma.done [#allocation13], 64
    $region65: #{tpu_custom_call.1} parent=1 // pred_fallthru
      _
    // Predicated region
    $region66: #{tpu_custom_call.1} parent=1 // pred_check
      _
    $region67: #{tpu_custom_call.1} parent=1 // pred_check_branch
      %131 = sbr.rel (0) target = $region69
    $region68: #{tpu_custom_call.1} parent=1 // pred_region
      %132 = dma.done [#allocation16], 64
    $region69: #{tpu_custom_call.1} parent=1 // pred_fallthru
      _
    %v134 = vld [vmem:[#allocation3] sm:$0xff]
    %v135 = vld [vmem:[#allocation3 + $0x8] sm:$0xff]
    %v136 = vld [vmem:[#allocation3 + $0x10] sm:$0xff]
    %v137 = vld [vmem:[#allocation3 + $0x18] sm:$0xff]
    %v138 = vld [vmem:[#allocation3 + $0x20] sm:$0xff]
    %v139 = vld [vmem:[#allocation3 + $0x28] sm:$0xff]
    %v140 = vld [vmem:[#allocation3 + $0x30] sm:$0xff]
    %v141 = vld [vmem:[#allocation3 + $0x38] sm:$0xff]
    %v142 = vld [vmem:[#allocation3 + $0x40] sm:$0xff]
    %v143 = vld [vmem:[#allocation3 + $0x48] sm:$0xff]
    %v144 = vld [vmem:[#allocation3 + $0x50] sm:$0xff]
    %v145 = vld [vmem:[#allocation3 + $0x58] sm:$0xff]
    %v146 = vld [vmem:[#allocation3 + $0x60] sm:$0xff]
    %v147 = vld [vmem:[#allocation3 + $0x68] sm:$0xff]
    %v148 = vld [vmem:[#allocation3 + $0x70] sm:$0xff]
    %v149 = vld [vmem:[#allocation3 + $0x78] sm:$0xff]
    %v150 = vld [vmem:[#allocation3 + $0x80] sm:$0xff]
    %v151 = vld [vmem:[#allocation3 + $0x88] sm:$0xff]
    %v152 = vld [vmem:[#allocation3 + $0x90] sm:$0xff]
    %v153 = vld [vmem:[#allocation3 + $0x98] sm:$0xff]
    %v154 = vld [vmem:[#allocation3 + $0xa0] sm:$0xff]
    %v155 = vld [vmem:[#allocation3 + $0xa8] sm:$0xff]
    %v156 = vld [vmem:[#allocation3 + $0xb0] sm:$0xff]
    %v157 = vld [vmem:[#allocation3 + $0xb8] sm:$0xff]
    %v158 = vld [vmem:[#allocation3 + $0xc0] sm:$0xff]
    %v159 = vld [vmem:[#allocation3 + $0xc8] sm:$0xff]
    %v160 = vld [vmem:[#allocation3 + $0xd0] sm:$0xff]
    %v161 = vld [vmem:[#allocation3 + $0xd8] sm:$0xff]
    %v162 = vld [vmem:[#allocation3 + $0xe0] sm:$0xff]
    %v163 = vld [vmem:[#allocation3 + $0xe8] sm:$0xff]
    %v164 = vld [vmem:[#allocation3 + $0xf0] sm:$0xff]
    %v165 = vld [vmem:[#allocation3 + $0xf8] sm:$0xff]
    %v166 = vpack.c.bf16 %v135, %v134
    %v167 = vpack.c.bf16 %v137, %v136
    %v168 = vpack.c.bf16 %v139, %v138
    %v169 = vpack.c.bf16 %v141, %v140
    %v170 = vpack.c.bf16 %v143, %v142
    %v171 = vpack.c.bf16 %v145, %v144
    %v172 = vpack.c.bf16 %v147, %v146
    %v173 = vpack.c.bf16 %v149, %v148
    %v174 = vpack.c.bf16 %v151, %v150
    %v175 = vpack.c.bf16 %v153, %v152
    %v176 = vpack.c.bf16 %v155, %v154
    %v177 = vpack.c.bf16 %v157, %v156
    %v178 = vpack.c.bf16 %v159, %v158
    %v179 = vpack.c.bf16 %v161, %v160
    %v180 = vpack.c.bf16 %v163, %v162
    %v181 = vpack.c.bf16 %v165, %v164
    %v182 = vld [vmem:[#allocation8] sm:$0xff]
    %v183 = vld [vmem:[#allocation8 + $0x8] sm:$0xff]
    %v184 = vld [vmem:[#allocation8 + $0x10] sm:$0xf]
    %v185 = vld [vmem:[#allocation8 + $0x14] sm:$0xff]
    %v186 = vld [vmem:[#allocation8 + $0x1c] sm:$0xff]
    %v187 = vld [vmem:[#allocation8 + $0x24] sm:$0xf]
    %v188 = vld [vmem:[#allocation8 + $0x28] sm:$0xff]
    %v189 = vld [vmem:[#allocation8 + $0x30] sm:$0xff]
    %v190 = vld [vmem:[#allocation8 + $0x38] sm:$0xf]
    %v191 = vld [vmem:[#allocation8 + $0x3c] sm:$0xff]
    %v192 = vld [vmem:[#allocation8 + $0x44] sm:$0xff]
    %v193 = vld [vmem:[#allocation8 + $0x4c] sm:$0xf]
    %v194 = vld [vmem:[#allocation8 + $0x50] sm:$0xff]
    %v195 = vld [vmem:[#allocation8 + $0x58] sm:$0xff]
    %v196 = vld [vmem:[#allocation8 + $0x60] sm:$0xf]
    %v197 = vld [vmem:[#allocation8 + $0x64] sm:$0xff]
    %v198 = vld [vmem:[#allocation8 + $0x6c] sm:$0xff]
    %v199 = vld [vmem:[#allocation8 + $0x74] sm:$0xf]
    %v200 = vld [vmem:[#allocation8 + $0x78] sm:$0xff]
    %v201 = vld [vmem:[#allocation8 + $0x80] sm:$0xff]
    %v202 = vld [vmem:[#allocation8 + $0x88] sm:$0xf]
    %v203 = vld [vmem:[#allocation8 + $0x8c] sm:$0xff]
    %v204 = vld [vmem:[#allocation8 + $0x94] sm:$0xff]
    %v205 = vld [vmem:[#allocation8 + $0x9c] sm:$0xf]
    %v206 = vld [vmem:[#allocation8 + $0xa0] sm:$0xff]
    %v207 = vld [vmem:[#allocation8 + $0xa8] sm:$0xff]
    %v208 = vld [vmem:[#allocation8 + $0xb0] sm:$0xf]
    %v209 = vld [vmem:[#allocation8 + $0xb4] sm:$0xff]
    %v210 = vld [vmem:[#allocation8 + $0xbc] sm:$0xff]
    %v211 = vld [vmem:[#allocation8 + $0xc4] sm:$0xf]
    %v212 = vld [vmem:[#allocation8 + $0xc8] sm:$0xff]
    %v213 = vld [vmem:[#allocation8 + $0xd0] sm:$0xff]
    %v214 = vld [vmem:[#allocation8 + $0xd8] sm:$0xf]
    %v215 = vld [vmem:[#allocation8 + $0xdc] sm:$0xff]
    %v216 = vld [vmem:[#allocation8 + $0xe4] sm:$0xff]
    %v217 = vld [vmem:[#allocation8 + $0xec] sm:$0xf]
    %v218 = vld [vmem:[#allocation8 + $0xf0] sm:$0xff]
    %v219 = vld [vmem:[#allocation8 + $0xf8] sm:$0xff]
    %v220 = vld [vmem:[#allocation8 + $0x100] sm:$0xf]
    %v221 = vld [vmem:[#allocation8 + $0x104] sm:$0xff]
    %v222 = vld [vmem:[#allocation8 + $0x10c] sm:$0xff]
    %v223 = vld [vmem:[#allocation8 + $0x114] sm:$0xf]
    %v224 = vld [vmem:[#allocation8 + $0x118] sm:$0xff]
    %v225 = vld [vmem:[#allocation8 + $0x120] sm:$0xff]
    %v226 = vld [vmem:[#allocation8 + $0x128] sm:$0xf]
    %v227 = vld [vmem:[#allocation8 + $0x12c] sm:$0xff]
    %v228 = vld [vmem:[#allocation8 + $0x134] sm:$0xff]
    %v229 = vld [vmem:[#allocation8 + $0x13c] sm:$0xf]
    %v278 = vunpack.c.l.b16 %v182
    %v279 = vunpack.c.h.b16 %v182
    %v280 = vunpack.c.l.b16 %v183
    %v281 = vunpack.c.h.b16 %v183
    %v282 = vunpack.c.l.b16 %v184
    %v283 = vunpack.c.l.b16 %v185
    %v284 = vunpack.c.h.b16 %v185
    %v285 = vunpack.c.l.b16 %v186
    %v286 = vunpack.c.h.b16 %v186
    %v287 = vunpack.c.l.b16 %v187
    %v288 = vunpack.c.l.b16 %v188
    %v289 = vunpack.c.h.b16 %v188
    %v290 = vunpack.c.l.b16 %v189
    %v291 = vunpack.c.h.b16 %v189
    %v292 = vunpack.c.l.b16 %v190
    %v293 = vunpack.c.l.b16 %v191
    %v294 = vunpack.c.h.b16 %v191
    %v295 = vunpack.c.l.b16 %v192
    %v296 = vunpack.c.h.b16 %v192
    %v297 = vunpack.c.l.b16 %v193
    %v298 = vunpack.c.l.b16 %v194
    %v299 = vunpack.c.h.b16 %v194
    %v300 = vunpack.c.l.b16 %v195
    %v301 = vunpack.c.h.b16 %v195
    %v302 = vunpack.c.l.b16 %v196
    %v303 = vunpack.c.l.b16 %v197
    %v304 = vunpack.c.h.b16 %v197
    %v305 = vunpack.c.l.b16 %v198
    %v306 = vunpack.c.h.b16 %v198
    %v307 = vunpack.c.l.b16 %v199
    %v308 = vunpack.c.l.b16 %v200
    %v309 = vunpack.c.h.b16 %v200
    %v310 = vunpack.c.l.b16 %v201
    %v311 = vunpack.c.h.b16 %v201
    %v312 = vunpack.c.l.b16 %v202
    %v313 = vunpack.c.l.b16 %v203
    %v314 = vunpack.c.h.b16 %v203
    %v315 = vunpack.c.l.b16 %v204
    %v316 = vunpack.c.h.b16 %v204
    %v317 = vunpack.c.l.b16 %v205
    %v318 = vunpack.c.l.b16 %v206
    %v319 = vunpack.c.h.b16 %v206
    %v320 = vunpack.c.l.b16 %v207
    %v321 = vunpack.c.h.b16 %v207
    %v322 = vunpack.c.l.b16 %v208
    %v323 = vunpack.c.l.b16 %v209
    %v324 = vunpack.c.h.b16 %v209
    %v325 = vunpack.c.l.b16 %v210
    %v326 = vunpack.c.h.b16 %v210
    %v327 = vunpack.c.l.b16 %v211
    %v328 = vunpack.c.l.b16 %v212
    %v329 = vunpack.c.h.b16 %v212
    %v330 = vunpack.c.l.b16 %v213
    %v331 = vunpack.c.h.b16 %v213
    %v332 = vunpack.c.l.b16 %v214
    %v333 = vunpack.c.l.b16 %v215
    %v334 = vunpack.c.h.b16 %v215
    %v335 = vunpack.c.l.b16 %v216
    %v336 = vunpack.c.h.b16 %v216
    %v337 = vunpack.c.l.b16 %v217
    %v338 = vunpack.c.l.b16 %v218
    %v339 = vunpack.c.h.b16 %v218
    %v340 = vunpack.c.l.b16 %v219
    %v341 = vunpack.c.h.b16 %v219
    %v342 = vunpack.c.l.b16 %v220
    %v343 = vunpack.c.l.b16 %v221
    %v344 = vunpack.c.h.b16 %v221
    %v345 = vunpack.c.l.b16 %v222
    %v346 = vunpack.c.h.b16 %v222
    %v347 = vunpack.c.l.b16 %v223
    %v348 = vunpack.c.l.b16 %v224
    %v349 = vunpack.c.h.b16 %v224
    %v350 = vunpack.c.l.b16 %v225
    %v351 = vunpack.c.h.b16 %v225
    %v352 = vunpack.c.l.b16 %v226
    %v353 = vunpack.c.l.b16 %v227
    %v354 = vunpack.c.h.b16 %v227
    %v355 = vunpack.c.l.b16 %v228
    %v356 = vunpack.c.h.b16 %v228
    %v357 = vunpack.c.l.b16 %v229
    %v358 = vpack.c.b16 %v283, %v278
    %v359 = vpack.c.b16 %v284, %v279
    %v360 = vpack.c.b16 %v285, %v280
    %v361 = vpack.c.b16 %v286, %v281
    %v362 = vpack.c.b16 %v287, %v282
    %v363 = vpack.c.b16 %v293, %v288
    %v364 = vpack.c.b16 %v294, %v289
    %v365 = vpack.c.b16 %v295, %v290
    %v366 = vpack.c.b16 %v296, %v291
    %v367 = vpack.c.b16 %v297, %v292
    %v368 = vpack.c.b16 %v303, %v298
    %v369 = vpack.c.b16 %v304, %v299
    %v370 = vpack.c.b16 %v305, %v300
    %v371 = vpack.c.b16 %v306, %v301
    %v372 = vpack.c.b16 %v307, %v302
    %v373 = vpack.c.b16 %v313, %v308
    %v374 = vpack.c.b16 %v314, %v309
    %v375 = vpack.c.b16 %v315, %v310
    %v376 = vpack.c.b16 %v316, %v311
    %v377 = vpack.c.b16 %v317, %v312
    %v378 = vpack.c.b16 %v323, %v318
    %v379 = vpack.c.b16 %v324, %v319
    %v380 = vpack.c.b16 %v325, %v320
    %v381 = vpack.c.b16 %v326, %v321
    %v382 = vpack.c.b16 %v327, %v322
    %v383 = vpack.c.b16 %v333, %v328
    %v384 = vpack.c.b16 %v334, %v329
    %v385 = vpack.c.b16 %v335, %v330
    %v386 = vpack.c.b16 %v336, %v331
    %v387 = vpack.c.b16 %v337, %v332
    %v388 = vpack.c.b16 %v343, %v338
    %v389 = vpack.c.b16 %v344, %v339
    %v390 = vpack.c.b16 %v345, %v340
    %v391 = vpack.c.b16 %v346, %v341
    %v392 = vpack.c.b16 %v347, %v342
    %v393 = vpack.c.b16 %v353, %v348
    %v394 = vpack.c.b16 %v354, %v349
    %v395 = vpack.c.b16 %v355, %v350
    %v396 = vpack.c.b16 %v356, %v351
    %v397 = vpack.c.b16 %v357, %v352
    %438 = vmatprep.subr.bf16.mxu0 %v359
    %439 = vmatpush1.bf16.msra.mxu0 %v358
    %440 = vmatprep.subr.bf16.mxu0 %v364
    %441 = vmatpush1.bf16.msra.mxu0 %v363
    %442 = vmatprep.subr.bf16.mxu0 %v369
    %443 = vmatpush1.bf16.msra.mxu0 %v368
    %444 = vmatprep.subr.bf16.mxu0 %v374
    %445 = vmatpush1.bf16.msra.mxu0 %v373
    %446 = vmatprep.subr.bf16.mxu0 %v379
    %447 = vmatpush1.bf16.msra.mxu0 %v378
    %448 = vmatprep.subr.bf16.mxu0 %v384
    %449 = vmatpush1.bf16.msra.mxu0 %v383
    %450 = vmatprep.subr.bf16.mxu0 %v389
    %451 = vmatpush1.bf16.msra.mxu0 %v388
    %452 = vmatprep.subr.bf16.mxu0 %v394
    %453 = vmatpush1.bf16.msra.mxu0 %v393
    %454 = vmatprep.subr.bf16.mxu0 0
    %455 = vmatpush1.bf16.msra.mxu0 0
    %456 = vmatprep.subr.bf16.mxu0 0
    %457 = vmatpush1.bf16.msra.mxu0 0
    %458 = vmatprep.subr.bf16.mxu0 0
    %459 = vmatpush1.bf16.msra.mxu0 0
    %460 = vmatprep.subr.bf16.mxu0 0
    %461 = vmatpush1.bf16.msra.mxu0 0
    %462 = vmatprep.subr.bf16.mxu0 0
    %463 = vmatpush1.bf16.msra.mxu0 0
    %464 = vmatprep.subr.bf16.mxu0 0
    %465 = vmatpush1.bf16.msra.mxu0 0
    %466 = vmatprep.subr.bf16.mxu0 0
    %467 = vmatpush1.bf16.msra.mxu0 0
    %468 = vmatprep.subr.bf16.mxu0 0
    %469 = vmatpush1.bf16.msra.mxu0 0
    %470 = vmatprep.mubr.bf16.mxu0 0
    %471 = vmatmul.mubr.bf16.gmra.mrb[0].mxu0 %v166
    %v472 = vpop.f32.mrb[0].mxu0
    %v473 = vadd.f32 0.0, %v472
    %v474 = vpop.f32.mrb[0].mxu0
    %v475 = vadd.f32 0.0, %v474
    %v476 = vpop.f32.mrb[0].mxu0
    %v477 = vadd.f32 0.0, %v476
    %v478 = vpop.f32.mrb[0].mxu0
    %v479 = vadd.f32 0.0, %v478
    %480 = vmatprep.mubr.bf16.mxu0 0
    %481 = vmatmul.mubr.bf16.gmra.mrb[0].mxu0 %v167
    %v482 = vpop.f32.mrb[0].mxu0
    %v483 = vadd.f32 0.0, %v482
    %v484 = vpop.f32.mrb[0].mxu0
    %v485 = vadd.f32 0.0, %v484
    %v486 = vpop.f32.mrb[0].mxu0
    %v487 = vadd.f32 0.0, %v486
    %v488 = vpop.f32.mrb[0].mxu0
    %v489 = vadd.f32 0.0, %v488
    %490 = vmatprep.mubr.bf16.mxu0 0
    %491 = vmatmul.mubr.bf16.gmra.mrb[0].mxu0 %v168
    %v492 = vpop.f32.mrb[0].mxu0
    %v493 = vadd.f32 0.0, %v492
    %v494 = vpop.f32.mrb[0].mxu0
    %v495 = vadd.f32 0.0, %v494
    %v496 = vpop.f32.mrb[0].mxu0
    %v497 = vadd.f32 0.0, %v496
    %v498 = vpop.f32.mrb[0].mxu0
    %v499 = vadd.f32 0.0, %v498
    %500 = vmatprep.mubr.bf16.mxu0 0
    %501 = vmatmul.mubr.bf16.gmra.mrb[0].mxu0 %v169
    %v502 = vpop.f32.mrb[0].mxu0
    %v503 = vadd.f32 0.0, %v502
    %v504 = vpop.f32.mrb[0].mxu0
    %v505 = vadd.f32 0.0, %v504
    %v506 = vpop.f32.mrb[0].mxu0
    %v507 = vadd.f32 0.0, %v506
    %v508 = vpop.f32.mrb[0].mxu0
    %v509 = vadd.f32 0.0, %v508
    %510 = vmatprep.mubr.bf16.mxu0 0
    %511 = vmatmul.mubr.bf16.gmra.mrb[0].mxu0 %v170
    %v512 = vpop.f32.mrb[0].mxu0
    %v513 = vadd.f32 0.0, %v512
    %v514 = vpop.f32.mrb[0].mxu0
    %v515 = vadd.f32 0.0, %v514
    %v516 = vpop.f32.mrb[0].mxu0
    %v517 = vadd.f32 0.0, %v516
    %v518 = vpop.f32.mrb[0].mxu0
    %v519 = vadd.f32 0.0, %v518
    %520 = vmatprep.mubr.bf16.mxu0 0
    %521 = vmatmul.mubr.bf16.gmra.mrb[0].mxu0 %v171
    %v522 = vpop.f32.mrb[0].mxu0
    %v523 = vadd.f32 0.0, %v522
    %v524 = vpop.f32.mrb[0].mxu0
    %v525 = vadd.f32 0.0, %v524
    %v526 = vpop.f32.mrb[0].mxu0
    %v527 = vadd.f32 0.0, %v526
    %v528 = vpop.f32.mrb[0].mxu0
    %v529 = vadd.f32 0.0, %v528
    %530 = vmatprep.mubr.bf16.mxu0 0
    %531 = vmatmul.mubr.bf16.gmra.mrb[0].mxu0 %v172
    %v532 = vpop.f32.mrb[0].mxu0
    %v533 = vadd.f32 0.0, %v532
    %v534 = vpop.f32.mrb[0].mxu0
    %v535 = vadd.f32 0.0, %v534
    %v536 = vpop.f32.mrb[0].mxu0
    %v537 = vadd.f32 0.0, %v536
    %v538 = vpop.f32.mrb[0].mxu0
    %v539 = vadd.f32 0.0, %v538
    %540 = vmatprep.mubr.bf16.mxu0 0
    %541 = vmatmul.mubr.bf16.gmra.mrb[0].mxu0 %v173
    %v542 = vpop.f32.mrb[0].mxu0
    %v543 = vadd.f32 0.0, %v542
    %v544 = vpop.f32.mrb[0].mxu0
    %v545 = vadd.f32 0.0, %v544
    %v546 = vpop.f32.mrb[0].mxu0
    %v547 = vadd.f32 0.0, %v546
    %v548 = vpop.f32.mrb[0].mxu0
    %v549 = vadd.f32 0.0, %v548
    %550 = vmatprep.mubr.bf16.mxu0 0
    %551 = vmatmul.mubr.bf16.gmra.mrb[0].mxu0 %v174
    %v552 = vpop.f32.mrb[0].mxu0
    %v553 = vadd.f32 0.0, %v552
    %v554 = vpop.f32.mrb[0].mxu0
    %v555 = vadd.f32 0.0, %v554
    %v556 = vpop.f32.mrb[0].mxu0
    %v557 = vadd.f32 0.0, %v556
    %v558 = vpop.f32.mrb[0].mxu0
    %v559 = vadd.f32 0.0, %v558
    %560 = vmatprep.mubr.bf16.mxu0 0
    %561 = vmatmul.mubr.bf16.gmra.mrb[0].mxu0 %v175
    %v562 = vpop.f32.mrb[0].mxu0
    %v563 = vadd.f32 0.0, %v562
    %v564 = vpop.f32.mrb[0].mxu0
    %v565 = vadd.f32 0.0, %v564
    %v566 = vpop.f32.mrb[0].mxu0
    %v567 = vadd.f32 0.0, %v566
    %v568 = vpop.f32.mrb[0].mxu0
    %v569 = vadd.f32 0.0, %v568
    %570 = vmatprep.mubr.bf16.mxu0 0
    %571 = vmatmul.mubr.bf16.gmra.mrb[0].mxu0 %v176
    %v572 = vpop.f32.mrb[0].mxu0
    %v573 = vadd.f32 0.0, %v572
    %v574 = vpop.f32.mrb[0].mxu0
    %v575 = vadd.f32 0.0, %v574
    %v576 = vpop.f32.mrb[0].mxu0
    %v577 = vadd.f32 0.0, %v576
    %v578 = vpop.f32.mrb[0].mxu0
    %v579 = vadd.f32 0.0, %v578
    %580 = vmatprep.mubr.bf16.mxu0 0
    %581 = vmatmul.mubr.bf16.gmra.mrb[0].mxu0 %v177
    %v582 = vpop.f32.mrb[0].mxu0
    %v583 = vadd.f32 0.0, %v582
    %v584 = vpop.f32.mrb[0].mxu0
    %v585 = vadd.f32 0.0, %v584
    %v586 = vpop.f32.mrb[0].mxu0
    %v587 = vadd.f32 0.0, %v586
    %v588 = vpop.f32.mrb[0].mxu0
    %v589 = vadd.f32 0.0, %v588
    %590 = vmatprep.mubr.bf16.mxu0 0
    %591 = vmatmul.mubr.bf16.gmra.mrb[0].mxu0 %v178
    %v592 = vpop.f32.mrb[0].mxu0
    %v593 = vadd.f32 0.0, %v592
    %v594 = vpop.f32.mrb[0].mxu0
    %v595 = vadd.f32 0.0, %v594
    %v596 = vpop.f32.mrb[0].mxu0
    %v597 = vadd.f32 0.0, %v596
    %v598 = vpop.f32.mrb[0].mxu0
    %v599 = vadd.f32 0.0, %v598
    %600 = vmatprep.mubr.bf16.mxu0 0
    %601 = vmatmul.mubr.bf16.gmra.mrb[0].mxu0 %v179
    %v602 = vpop.f32.mrb[0].mxu0
    %v603 = vadd.f32 0.0, %v602
    %v604 = vpop.f32.mrb[0].mxu0
    %v605 = vadd.f32 0.0, %v604
    %v606 = vpop.f32.mrb[0].mxu0
    %v607 = vadd.f32 0.0, %v606
    %v608 = vpop.f32.mrb[0].mxu0
    %v609 = vadd.f32 0.0, %v608
    %610 = vmatprep.mubr.bf16.mxu0 0
    %611 = vmatmul.mubr.bf16.gmra.mrb[0].mxu0 %v180
    %v612 = vpop.f32.mrb[0].mxu0
    %v613 = vadd.f32 0.0, %v612
    %v614 = vpop.f32.mrb[0].mxu0
    %v615 = vadd.f32 0.0, %v614
    %v616 = vpop.f32.mrb[0].mxu0
    %v617 = vadd.f32 0.0, %v616
    %v618 = vpop.f32.mrb[0].mxu0
    %v619 = vadd.f32 0.0, %v618
    %620 = vmatprep.mubr.bf16.mxu0 0
    %621 = vmatmul.mubr.bf16.gmra.mrb[0].mxu0 %v181
    %v622 = vpop.f32.mrb[0].mxu0
    %v623 = vadd.f32 0.0, %v622
    %v624 = vpop.f32.mrb[0].mxu0
    %v625 = vadd.f32 0.0, %v624
    %v626 = vpop.f32.mrb[0].mxu0
    %v627 = vadd.f32 0.0, %v626
    %v628 = vpop.f32.mrb[0].mxu0
    %v629 = vadd.f32 0.0, %v628
    %630 = vdwg.mxu0
    %631 = vmatprep.subr.bf16.mxu0 %v361
    %632 = vmatpush1.bf16.msra.mxu0 %v360
    %633 = vmatprep.subr.bf16.mxu0 %v366
    %634 = vmatpush1.bf16.msra.mxu0 %v365
    %635 = vmatprep.subr.bf16.mxu0 %v371
    %636 = vmatpush1.bf16.msra.mxu0 %v370
    %637 = vmatprep.subr.bf16.mxu0 %v376
    %638 = vmatpush1.bf16.msra.mxu0 %v375
    %639 = vmatprep.subr.bf16.mxu0 %v381
    %640 = vmatpush1.bf16.msra.mxu0 %v380
    %641 = vmatprep.subr.bf16.mxu0 %v386
    %642 = vmatpush1.bf16.msra.mxu0 %v385
    %643 = vmatprep.subr.bf16.mxu0 %v391
    %644 = vmatpush1.bf16.msra.mxu0 %v390
    %645 = vmatprep.subr.bf16.mxu0 %v396
    %646 = vmatpush1.bf16.msra.mxu0 %v395
    %647 = vmatprep.subr.bf16.mxu0 0
    %648 = vmatpush1.bf16.msra.mxu0 0
    %649 = vmatprep.subr.bf16.mxu0 0
    %650 = vmatpush1.bf16.msra.mxu0 0
    %651 = vmatprep.subr.bf16.mxu0 0
    %652 = vmatpush1.bf16.msra.mxu0 0
    %653 = vmatprep.subr.bf16.mxu0 0
    %654 = vmatpush1.bf16.msra.mxu0 0
    %655 = vmatprep.subr.bf16.mxu0 0
    %656 = vmatpush1.bf16.msra.mxu0 0
    %657 = vmatprep.subr.bf16.mxu0 0
    %658 = vmatpush1.bf16.msra.mxu0 0
    %659 = vmatprep.subr.bf16.mxu0 0
    %660 = vmatpush1.bf16.msra.mxu0 0
    %661 = vmatprep.subr.bf16.mxu0 0
    %662 = vmatpush1.bf16.msra.mxu0 0
    %663 = vmatprep.mubr.bf16.mxu0 0
    %664 = vmatmul.mubr.bf16.gmra.mrb[0].mxu0 %v166
    %v665 = vpop.f32.mrb[0].mxu0
    %v666 = vadd.f32 0.0, %v665
    %v667 = vpop.f32.mrb[0].mxu0
    %v668 = vadd.f32 0.0, %v667
    %v669 = vpop.f32.mrb[0].mxu0
    %v670 = vadd.f32 0.0, %v669
    %v671 = vpop.f32.mrb[0].mxu0
    %v672 = vadd.f32 0.0, %v671
    %673 = vmatprep.mubr.bf16.mxu0 0
    %674 = vmatmul.mubr.bf16.gmra.mrb[0].mxu0 %v167
    %v675 = vpop.f32.mrb[0].mxu0
    %v676 = vadd.f32 0.0, %v675
    %v677 = vpop.f32.mrb[0].mxu0
    %v678 = vadd.f32 0.0, %v677
    %v679 = vpop.f32.mrb[0].mxu0
    %v680 = vadd.f32 0.0, %v679
    %v681 = vpop.f32.mrb[0].mxu0
    %v682 = vadd.f32 0.0, %v681
    %683 = vmatprep.mubr.bf16.mxu0 0
    %684 = vmatmul.mubr.bf16.gmra.mrb[0].mxu0 %v168
    %v685 = vpop.f32.mrb[0].mxu0
    %v686 = vadd.f32 0.0, %v685
    %v687 = vpop.f32.mrb[0].mxu0
    %v688 = vadd.f32 0.0, %v687
    %v689 = vpop.f32.mrb[0].mxu0
    %v690 = vadd.f32 0.0, %v689
    %v691 = vpop.f32.mrb[0].mxu0
    %v692 = vadd.f32 0.0, %v691
    %693 = vmatprep.mubr.bf16.mxu0 0
    %694 = vmatmul.mubr.bf16.gmra.mrb[0].mxu0 %v169
    %v695 = vpop.f32.mrb[0].mxu0
    %v696 = vadd.f32 0.0, %v695
    %v697 = vpop.f32.mrb[0].mxu0
    %v698 = vadd.f32 0.0, %v697
    %v699 = vpop.f32.mrb[0].mxu0
    %v700 = vadd.f32 0.0, %v699
    %v701 = vpop.f32.mrb[0].mxu0
    %v702 = vadd.f32 0.0, %v701
    %703 = vmatprep.mubr.bf16.mxu0 0
    %704 = vmatmul.mubr.bf16.gmra.mrb[0].mxu0 %v170
    %v705 = vpop.f32.mrb[0].mxu0
    %v706 = vadd.f32 0.0, %v705
    %v707 = vpop.f32.mrb[0].mxu0
    %v708 = vadd.f32 0.0, %v707
    %v709 = vpop.f32.mrb[0].mxu0
    %v710 = vadd.f32 0.0, %v709
    %v711 = vpop.f32.mrb[0].mxu0
    %v712 = vadd.f32 0.0, %v711
    %713 = vmatprep.mubr.bf16.mxu0 0
    %714 = vmatmul.mubr.bf16.gmra.mrb[0].mxu0 %v171
    %v715 = vpop.f32.mrb[0].mxu0
    %v716 = vadd.f32 0.0, %v715
    %v717 = vpop.f32.mrb[0].mxu0
    %v718 = vadd.f32 0.0, %v717
    %v719 = vpop.f32.mrb[0].mxu0
    %v720 = vadd.f32 0.0, %v719
    %v721 = vpop.f32.mrb[0].mxu0
    %v722 = vadd.f32 0.0, %v721
    %723 = vmatprep.mubr.bf16.mxu0 0
    %724 = vmatmul.mubr.bf16.gmra.mrb[0].mxu0 %v172
    %v725 = vpop.f32.mrb[0].mxu0
    %v726 = vadd.f32 0.0, %v725
    %v727 = vpop.f32.mrb[0].mxu0
    %v728 = vadd.f32 0.0, %v727
    %v729 = vpop.f32.mrb[0].mxu0
    %v730 = vadd.f32 0.0, %v729
    %v731 = vpop.f32.mrb[0].mxu0
    %v732 = vadd.f32 0.0, %v731
    %733 = vmatprep.mubr.bf16.mxu0 0
    %734 = vmatmul.mubr.bf16.gmra.mrb[0].mxu0 %v173
    %v735 = vpop.f32.mrb[0].mxu0
    %v736 = vadd.f32 0.0, %v735
    %v737 = vpop.f32.mrb[0].mxu0
    %v738 = vadd.f32 0.0, %v737
    %v739 = vpop.f32.mrb[0].mxu0
    %v740 = vadd.f32 0.0, %v739
    %v741 = vpop.f32.mrb[0].mxu0
    %v742 = vadd.f32 0.0, %v741
    %743 = vmatprep.mubr.bf16.mxu0 0
    %744 = vmatmul.mubr.bf16.gmra.mrb[0].mxu0 %v174
    %v745 = vpop.f32.mrb[0].mxu0
    %v746 = vadd.f32 0.0, %v745
    %v747 = vpop.f32.mrb[0].mxu0
    %v748 = vadd.f32 0.0, %v747
    %v749 = vpop.f32.mrb[0].mxu0
    %v750 = vadd.f32 0.0, %v749
    %v751 = vpop.f32.mrb[0].mxu0
    %v752 = vadd.f32 0.0, %v751
    %753 = vmatprep.mubr.bf16.mxu0 0
    %754 = vmatmul.mubr.bf16.gmra.mrb[0].mxu0 %v175
    %v755 = vpop.f32.mrb[0].mxu0
    %v756 = vadd.f32 0.0, %v755
    %v757 = vpop.f32.mrb[0].mxu0
    %v758 = vadd.f32 0.0, %v757
    %v759 = vpop.f32.mrb[0].mxu0
    %v760 = vadd.f32 0.0, %v759
    %v761 = vpop.f32.mrb[0].mxu0
    %v762 = vadd.f32 0.0, %v761
    %763 = vmatprep.mubr.bf16.mxu0 0
    %764 = vmatmul.mubr.bf16.gmra.mrb[0].mxu0 %v176
    %v765 = vpop.f32.mrb[0].mxu0
    %v766 = vadd.f32 0.0, %v765
    %v767 = vpop.f32.mrb[0].mxu0
    %v768 = vadd.f32 0.0, %v767
    %v769 = vpop.f32.mrb[0].mxu0
    %v770 = vadd.f32 0.0, %v769
    %v771 = vpop.f32.mrb[0].mxu0
    %v772 = vadd.f32 0.0, %v771
    %773 = vmatprep.mubr.bf16.mxu0 0
    %774 = vmatmul.mubr.bf16.gmra.mrb[0].mxu0 %v177
    %v775 = vpop.f32.mrb[0].mxu0
    %v776 = vadd.f32 0.0, %v775
    %v777 = vpop.f32.mrb[0].mxu0
    %v778 = vadd.f32 0.0, %v777
    %v779 = vpop.f32.mrb[0].mxu0
    %v780 = vadd.f32 0.0, %v779
    %v781 = vpop.f32.mrb[0].mxu0
    %v782 = vadd.f32 0.0, %v781
    %783 = vmatprep.mubr.bf16.mxu0 0
    %784 = vmatmul.mubr.bf16.gmra.mrb[0].mxu0 %v178
    %v785 = vpop.f32.mrb[0].mxu0
    %v786 = vadd.f32 0.0, %v785
    %v787 = vpop.f32.mrb[0].mxu0
    %v788 = vadd.f32 0.0, %v787
    %v789 = vpop.f32.mrb[0].mxu0
    %v790 = vadd.f32 0.0, %v789
    %v791 = vpop.f32.mrb[0].mxu0
    %v792 = vadd.f32 0.0, %v791
    %793 = vmatprep.mubr.bf16.mxu0 0
    %794 = vmatmul.mubr.bf16.gmra.mrb[0].mxu0 %v179
    %v795 = vpop.f32.mrb[0].mxu0
    %v796 = vadd.f32 0.0, %v795
    %v797 = vpop.f32.mrb[0].mxu0
    %v798 = vadd.f32 0.0, %v797
    %v799 = vpop.f32.mrb[0].mxu0
    %v800 = vadd.f32 0.0, %v799
    %v801 = vpop.f32.mrb[0].mxu0
    %v802 = vadd.f32 0.0, %v801
    %803 = vmatprep.mubr.bf16.mxu0 0
    %804 = vmatmul.mubr.bf16.gmra.mrb[0].mxu0 %v180
    %v805 = vpop.f32.mrb[0].mxu0
    %v806 = vadd.f32 0.0, %v805
    %v807 = vpop.f32.mrb[0].mxu0
    %v808 = vadd.f32 0.0, %v807
    %v809 = vpop.f32.mrb[0].mxu0
    %v810 = vadd.f32 0.0, %v809
    %v811 = vpop.f32.mrb[0].mxu0
    %v812 = vadd.f32 0.0, %v811
    %813 = vmatprep.mubr.bf16.mxu0 0
    %814 = vmatmul.mubr.bf16.gmra.mrb[0].mxu0 %v181
    %v815 = vpop.f32.mrb[0].mxu0
    %v816 = vadd.f32 0.0, %v815
    %v817 = vpop.f32.mrb[0].mxu0
    %v818 = vadd.f32 0.0, %v817
    %v819 = vpop.f32.mrb[0].mxu0
    %v820 = vadd.f32 0.0, %v819
    %v821 = vpop.f32.mrb[0].mxu0
    %v822 = vadd.f32 0.0, %v821
    %823 = vdwg.mxu0
    %824 = vmatprep.subr.bf16.mxu0 0
    %825 = vmatpush1.bf16.msra.mxu0 %v362
    %826 = vmatprep.subr.bf16.mxu0 0
    %827 = vmatpush1.bf16.msra.mxu0 %v367
    %828 = vmatprep.subr.bf16.mxu0 0
    %829 = vmatpush1.bf16.msra.mxu0 %v372
    %830 = vmatprep.subr.bf16.mxu0 0
    %831 = vmatpush1.bf16.msra.mxu0 %v377
    %832 = vmatprep.subr.bf16.mxu0 0
    %833 = vmatpush1.bf16.msra.mxu0 %v382
    %834 = vmatprep.subr.bf16.mxu0 0
    %835 = vmatpush1.bf16.msra.mxu0 %v387
    %836 = vmatprep.subr.bf16.mxu0 0
    %837 = vmatpush1.bf16.msra.mxu0 %v392
    %838 = vmatprep.subr.bf16.mxu0 0
    %839 = vmatpush1.bf16.msra.mxu0 %v397
    %840 = vmatprep.subr.bf16.mxu0 0
    %841 = vmatpush1.bf16.msra.mxu0 0
    %842 = vmatprep.subr.bf16.mxu0 0
    %843 = vmatpush1.bf16.msra.mxu0 0
    %844 = vmatprep.subr.bf16.mxu0 0
    %845 = vmatpush1.bf16.msra.mxu0 0
    %846 = vmatprep.subr.bf16.mxu0 0
    %847 = vmatpush1.bf16.msra.mxu0 0
    %848 = vmatprep.subr.bf16.mxu0 0
    %849 = vmatpush1.bf16.msra.mxu0 0
    %850 = vmatprep.subr.bf16.mxu0 0
    %851 = vmatpush1.bf16.msra.mxu0 0
    %852 = vmatprep.subr.bf16.mxu0 0
    %853 = vmatpush1.bf16.msra.mxu0 0
    %854 = vmatprep.subr.bf16.mxu0 0
    %855 = vmatpush1.bf16.msra.mxu0 0
    %856 = vmatprep.mubr.bf16.mxu0 0
    %857 = vmatmul.mubr.bf16.gmra.mrb[0].mxu0 %v166
    %v858 = vpop.f32.mrb[0].mxu0
    %v859 = vadd.f32 0.0, %v858
    %v860 = vpop.f32.mrb[0].mxu0
    %v861 = vpop.f32.mrb[0].mxu0
    %v862 = vadd.f32 0.0, %v861
    %v863 = vpop.f32.mrb[0].mxu0
    %864 = vmatprep.mubr.bf16.mxu0 0
    %865 = vmatmul.mubr.bf16.gmra.mrb[0].mxu0 %v167
    %v866 = vpop.f32.mrb[0].mxu0
    %v867 = vadd.f32 0.0, %v866
    %v868 = vpop.f32.mrb[0].mxu0
    %v869 = vpop.f32.mrb[0].mxu0
    %v870 = vadd.f32 0.0, %v869
    %v871 = vpop.f32.mrb[0].mxu0
    %872 = vmatprep.mubr.bf16.mxu0 0
    %873 = vmatmul.mubr.bf16.gmra.mrb[0].mxu0 %v168
    %v874 = vpop.f32.mrb[0].mxu0
    %v875 = vadd.f32 0.0, %v874
    %v876 = vpop.f32.mrb[0].mxu0
    %v877 = vpop.f32.mrb[0].mxu0
    %v878 = vadd.f32 0.0, %v877
    %v879 = vpop.f32.mrb[0].mxu0
    %880 = vmatprep.mubr.bf16.mxu0 0
    %881 = vmatmul.mubr.bf16.gmra.mrb[0].mxu0 %v169
    %v882 = vpop.f32.mrb[0].mxu0
    %v883 = vadd.f32 0.0, %v882
    %v884 = vpop.f32.mrb[0].mxu0
    %v885 = vpop.f32.mrb[0].mxu0
    %v886 = vadd.f32 0.0, %v885
    %v887 = vpop.f32.mrb[0].mxu0
    %888 = vmatprep.mubr.bf16.mxu0 0
    %889 = vmatmul.mubr.bf16.gmra.mrb[0].mxu0 %v170
    %v890 = vpop.f32.mrb[0].mxu0
    %v891 = vadd.f32 0.0, %v890
    %v892 = vpop.f32.mrb[0].mxu0
    %v893 = vpop.f32.mrb[0].mxu0
    %v894 = vadd.f32 0.0, %v893
    %v895 = vpop.f32.mrb[0].mxu0
    %896 = vmatprep.mubr.bf16.mxu0 0
    %897 = vmatmul.mubr.bf16.gmra.mrb[0].mxu0 %v171
    %v898 = vpop.f32.mrb[0].mxu0
    %v899 = vadd.f32 0.0, %v898
    %v900 = vpop.f32.mrb[0].mxu0
    %v901 = vpop.f32.mrb[0].mxu0
    %v902 = vadd.f32 0.0, %v901
    %v903 = vpop.f32.mrb[0].mxu0
    %904 = vmatprep.mubr.bf16.mxu0 0
    %905 = vmatmul.mubr.bf16.gmra.mrb[0].mxu0 %v172
    %v906 = vpop.f32.mrb[0].mxu0
    %v907 = vadd.f32 0.0, %v906
    %v908 = vpop.f32.mrb[0].mxu0
    %v909 = vpop.f32.mrb[0].mxu0
    %v910 = vadd.f32 0.0, %v909
    %v911 = vpop.f32.mrb[0].mxu0
    %912 = vmatprep.mubr.bf16.mxu0 0
    %913 = vmatmul.mubr.bf16.gmra.mrb[0].mxu0 %v173
    %v914 = vpop.f32.mrb[0].mxu0
    %v915 = vadd.f32 0.0, %v914
    %v916 = vpop.f32.mrb[0].mxu0
    %v917 = vpop.f32.mrb[0].mxu0
    %v918 = vadd.f32 0.0, %v917
    %v919 = vpop.f32.mrb[0].mxu0
    %920 = vmatprep.mubr.bf16.mxu0 0
    %921 = vmatmul.mubr.bf16.gmra.mrb[0].mxu0 %v174
    %v922 = vpop.f32.mrb[0].mxu0
    %v923 = vadd.f32 0.0, %v922
    %v924 = vpop.f32.mrb[0].mxu0
    %v925 = vpop.f32.mrb[0].mxu0
    %v926 = vadd.f32 0.0, %v925
    %v927 = vpop.f32.mrb[0].mxu0
    %928 = vmatprep.mubr.bf16.mxu0 0
    %929 = vmatmul.mubr.bf16.gmra.mrb[0].mxu0 %v175
    %v930 = vpop.f32.mrb[0].mxu0
    %v931 = vadd.f32 0.0, %v930
    %v932 = vpop.f32.mrb[0].mxu0
    %v933 = vpop.f32.mrb[0].mxu0
    %v934 = vadd.f32 0.0, %v933
    %v935 = vpop.f32.mrb[0].mxu0
    %936 = vmatprep.mubr.bf16.mxu0 0
    %937 = vmatmul.mubr.bf16.gmra.mrb[0].mxu0 %v176
    %v938 = vpop.f32.mrb[0].mxu0
    %v939 = vadd.f32 0.0, %v938
    %v940 = vpop.f32.mrb[0].mxu0
    %v941 = vpop.f32.mrb[0].mxu0
    %v942 = vadd.f32 0.0, %v941
    %v943 = vpop.f32.mrb[0].mxu0
    %944 = vmatprep.mubr.bf16.mxu0 0
    %945 = vmatmul.mubr.bf16.gmra.mrb[0].mxu0 %v177
    %v946 = vpop.f32.mrb[0].mxu0
    %v947 = vadd.f32 0.0, %v946
    %v948 = vpop.f32.mrb[0].mxu0
    %v949 = vpop.f32.mrb[0].mxu0
    %v950 = vadd.f32 0.0, %v949
    %v951 = vpop.f32.mrb[0].mxu0
    %952 = vmatprep.mubr.bf16.mxu0 0
    %953 = vmatmul.mubr.bf16.gmra.mrb[0].mxu0 %v178
    %v954 = vpop.f32.mrb[0].mxu0
    %v955 = vadd.f32 0.0, %v954
    %v956 = vpop.f32.mrb[0].mxu0
    %v957 = vpop.f32.mrb[0].mxu0
    %v958 = vadd.f32 0.0, %v957
    %v959 = vpop.f32.mrb[0].mxu0
    %960 = vmatprep.mubr.bf16.mxu0 0
    %961 = vmatmul.mubr.bf16.gmra.mrb[0].mxu0 %v179
    %v962 = vpop.f32.mrb[0].mxu0
    %v963 = vadd.f32 0.0, %v962
    %v964 = vpop.f32.mrb[0].mxu0
    %v965 = vpop.f32.mrb[0].mxu0
    %v966 = vadd.f32 0.0, %v965
    %v967 = vpop.f32.mrb[0].mxu0
    %968 = vmatprep.mubr.bf16.mxu0 0
    %969 = vmatmul.mubr.bf16.gmra.mrb[0].mxu0 %v180
    %v970 = vpop.f32.mrb[0].mxu0
    %v971 = vadd.f32 0.0, %v970
    %v972 = vpop.f32.mrb[0].mxu0
    %v973 = vpop.f32.mrb[0].mxu0
    %v974 = vadd.f32 0.0, %v973
    %v975 = vpop.f32.mrb[0].mxu0
    %976 = vmatprep.mubr.bf16.mxu0 0
    %977 = vmatmul.mubr.bf16.gmra.mrb[0].mxu0 %v181
    %v978 = vpop.f32.mrb[0].mxu0
    %v979 = vadd.f32 0.0, %v978
    %v980 = vpop.f32.mrb[0].mxu0
    %v981 = vpop.f32.mrb[0].mxu0
    %v982 = vadd.f32 0.0, %v981
    %v983 = vpop.f32.mrb[0].mxu0
    %984 = vdwg.mxu0
    %v985 = vld [vmem:[#allocation11] sm:$0xf]
    %v987 = vlaneseq
    %v988 = vshrl.u32 %v987, 7
    %v989 = vsub.s32 0, %v988
    %v990 = vrot.slane %v985, %v989
    %v991 = vlaneseq
    %v992 = vshrl.u32 %v991, 7
    %v993 = vsub.s32 1, %v992
    %v994 = vrot.slane %v985, %v993
    %v995 = vlaneseq
    %v996 = vshrl.u32 %v995, 7
    %v997 = vsub.s32 2, %v996
    %v998 = vrot.slane %v985, %v997
    %v999 = vlaneseq
    %v1000 = vshrl.u32 %v999, 7
    %v1001 = vsub.s32 3, %v1000
    %v1002 = vrot.slane %v985, %v1001
    %v1007 = vadd.f32 %v475, %v990
    %v1008 = vadd.f32 %v666, %v994
    %v1009 = vadd.f32 %v668, %v998
    %v1010 = vadd.f32 %v859, %v1002
    %v1011 = vadd.f32 %v479, %v990
    %v1012 = vadd.f32 %v670, %v994
    %v1013 = vadd.f32 %v672, %v998
    %v1014 = vadd.f32 %v862, %v1002
    %v1015 = vadd.f32 %v485, %v990
    %v1016 = vadd.f32 %v676, %v994
    %v1017 = vadd.f32 %v678, %v998
    %v1018 = vadd.f32 %v867, %v1002
    %v1019 = vadd.f32 %v489, %v990
    %v1020 = vadd.f32 %v680, %v994
    %v1021 = vadd.f32 %v682, %v998
    %v1022 = vadd.f32 %v870, %v1002
    %v1023 = vadd.f32 %v495, %v990
    %v1024 = vadd.f32 %v686, %v994
    %v1025 = vadd.f32 %v688, %v998
    %v1026 = vadd.f32 %v875, %v1002
    %v1027 = vadd.f32 %v499, %v990
    %v1028 = vadd.f32 %v690, %v994
    %v1029 = vadd.f32 %v692, %v998
    %v1030 = vadd.f32 %v878, %v1002
    %v1031 = vadd.f32 %v505, %v990
    %v1032 = vadd.f32 %v696, %v994
    %v1033 = vadd.f32 %v698, %v998
    %v1034 = vadd.f32 %v883, %v1002
    %v1035 = vadd.f32 %v509, %v990
    %v1036 = vadd.f32 %v700, %v994
    %v1037 = vadd.f32 %v702, %v998
    %v1038 = vadd.f32 %v886, %v1002
    %v1039 = vadd.f32 %v515, %v990
    %v1040 = vadd.f32 %v706, %v994
    %v1041 = vadd.f32 %v708, %v998
    %v1042 = vadd.f32 %v891, %v1002
    %v1043 = vadd.f32 %v519, %v990
    %v1044 = vadd.f32 %v710, %v994
    %v1045 = vadd.f32 %v712, %v998
    %v1046 = vadd.f32 %v894, %v1002
    %v1047 = vadd.f32 %v525, %v990
    %v1048 = vadd.f32 %v716, %v994
    %v1049 = vadd.f32 %v718, %v998
    %v1050 = vadd.f32 %v899, %v1002
    %v1051 = vadd.f32 %v529, %v990
    %v1052 = vadd.f32 %v720, %v994
    %v1053 = vadd.f32 %v722, %v998
    %v1054 = vadd.f32 %v902, %v1002
    %v1055 = vadd.f32 %v535, %v990
    %v1056 = vadd.f32 %v726, %v994
    %v1057 = vadd.f32 %v728, %v998
    %v1058 = vadd.f32 %v907, %v1002
    %v1059 = vadd.f32 %v539, %v990
    %v1060 = vadd.f32 %v730, %v994
    %v1061 = vadd.f32 %v732, %v998
    %v1062 = vadd.f32 %v910, %v1002
    %v1063 = vadd.f32 %v545, %v990
    %v1064 = vadd.f32 %v736, %v994
    %v1065 = vadd.f32 %v738, %v998
    %v1066 = vadd.f32 %v915, %v1002
    %v1067 = vadd.f32 %v549, %v990
    %v1068 = vadd.f32 %v740, %v994
    %v1069 = vadd.f32 %v742, %v998
    %v1070 = vadd.f32 %v918, %v1002
    %v1071 = vadd.f32 %v555, %v990
    %v1072 = vadd.f32 %v746, %v994
    %v1073 = vadd.f32 %v748, %v998
    %v1074 = vadd.f32 %v923, %v1002
    %v1075 = vadd.f32 %v559, %v990
    %v1076 = vadd.f32 %v750, %v994
    %v1077 = vadd.f32 %v752, %v998
    %v1078 = vadd.f32 %v926, %v1002
    %v1079 = vadd.f32 %v565, %v990
    %v1080 = vadd.f32 %v756, %v994
    %v1081 = vadd.f32 %v758, %v998
    %v1082 = vadd.f32 %v931, %v1002
    %v1083 = vadd.f32 %v569, %v990
    %v1084 = vadd.f32 %v760, %v994
    %v1085 = vadd.f32 %v762, %v998
    %v1086 = vadd.f32 %v934, %v1002
    %v1087 = vadd.f32 %v575, %v990
    %v1088 = vadd.f32 %v766, %v994
    %v1089 = vadd.f32 %v768, %v998
    %v1090 = vadd.f32 %v939, %v1002
    %v1091 = vadd.f32 %v579, %v990
    %v1092 = vadd.f32 %v770, %v994
    %v1093 = vadd.f32 %v772, %v998
    %v1094 = vadd.f32 %v942, %v1002
    %v1095 = vadd.f32 %v585, %v990
    %v1096 = vadd.f32 %v776, %v994
    %v1097 = vadd.f32 %v778, %v998
    %v1098 = vadd.f32 %v947, %v1002
    %v1099 = vadd.f32 %v589, %v990
    %v1100 = vadd.f32 %v780, %v994
    %v1101 = vadd.f32 %v782, %v998
    %v1102 = vadd.f32 %v950, %v1002
    %v1103 = vadd.f32 %v595, %v990
    %v1104 = vadd.f32 %v786, %v994
    %v1105 = vadd.f32 %v788, %v998
    %v1106 = vadd.f32 %v955, %v1002
    %v1107 = vadd.f32 %v599, %v990
    %v1108 = vadd.f32 %v790, %v994
    %v1109 = vadd.f32 %v792, %v998
    %v1110 = vadd.f32 %v958, %v1002
    %v1111 = vadd.f32 %v605, %v990
    %v1112 = vadd.f32 %v796, %v994
    %v1113 = vadd.f32 %v798, %v998
    %v1114 = vadd.f32 %v963, %v1002
    %v1115 = vadd.f32 %v609, %v990
    %v1116 = vadd.f32 %v800, %v994
    %v1117 = vadd.f32 %v802, %v998
    %v1118 = vadd.f32 %v966, %v1002
    %v1119 = vadd.f32 %v615, %v990
    %v1120 = vadd.f32 %v806, %v994
    %v1121 = vadd.f32 %v808, %v998
    %v1122 = vadd.f32 %v971, %v1002
    %v1123 = vadd.f32 %v619, %v990
    %v1124 = vadd.f32 %v810, %v994
    %v1125 = vadd.f32 %v812, %v998
    %v1126 = vadd.f32 %v974, %v1002
    %v1127 = vadd.f32 %v625, %v990
    %v1128 = vadd.f32 %v816, %v994
    %v1129 = vadd.f32 %v818, %v998
    %v1130 = vadd.f32 %v979, %v1002
    %v1131 = vadd.f32 %v629, %v990
    %v1132 = vadd.f32 %v820, %v994
    %v1133 = vadd.f32 %v822, %v998
    %v1134 = vadd.f32 %v982, %v1002
    %v1135 = vmax.f32 %v1007, 0.0
    %v1136 = vmax.f32 %v1008, 0.0
    %v1137 = vmax.f32 %v1009, 0.0
    %v1138 = vmax.f32 %v1010, 0.0
    %v1139 = vmax.f32 %v1011, 0.0
    %v1140 = vmax.f32 %v1012, 0.0
    %v1141 = vmax.f32 %v1013, 0.0
    %v1142 = vmax.f32 %v1014, 0.0
    %v1143 = vmax.f32 %v1015, 0.0
    %v1144 = vmax.f32 %v1016, 0.0
    %v1145 = vmax.f32 %v1017, 0.0
    %v1146 = vmax.f32 %v1018, 0.0
    %v1147 = vmax.f32 %v1019, 0.0
    %v1148 = vmax.f32 %v1020, 0.0
    %v1149 = vmax.f32 %v1021, 0.0
    %v1150 = vmax.f32 %v1022, 0.0
    %v1151 = vmax.f32 %v1023, 0.0
    %v1152 = vmax.f32 %v1024, 0.0
    %v1153 = vmax.f32 %v1025, 0.0
    %v1154 = vmax.f32 %v1026, 0.0
    %v1155 = vmax.f32 %v1027, 0.0
    %v1156 = vmax.f32 %v1028, 0.0
    %v1157 = vmax.f32 %v1029, 0.0
    %v1158 = vmax.f32 %v1030, 0.0
    %v1159 = vmax.f32 %v1031, 0.0
    %v1160 = vmax.f32 %v1032, 0.0
    %v1161 = vmax.f32 %v1033, 0.0
    %v1162 = vmax.f32 %v1034, 0.0
    %v1163 = vmax.f32 %v1035, 0.0
    %v1164 = vmax.f32 %v1036, 0.0
    %v1165 = vmax.f32 %v1037, 0.0
    %v1166 = vmax.f32 %v1038, 0.0
    %v1167 = vmax.f32 %v1039, 0.0
    %v1168 = vmax.f32 %v1040, 0.0
    %v1169 = vmax.f32 %v1041, 0.0
    %v1170 = vmax.f32 %v1042, 0.0
    %v1171 = vmax.f32 %v1043, 0.0
    %v1172 = vmax.f32 %v1044, 0.0
    %v1173 = vmax.f32 %v1045, 0.0
    %v1174 = vmax.f32 %v1046, 0.0
    %v1175 = vmax.f32 %v1047, 0.0
    %v1176 = vmax.f32 %v1048, 0.0
    %v1177 = vmax.f32 %v1049, 0.0
    %v1178 = vmax.f32 %v1050, 0.0
    %v1179 = vmax.f32 %v1051, 0.0
    %v1180 = vmax.f32 %v1052, 0.0
    %v1181 = vmax.f32 %v1053, 0.0
    %v1182 = vmax.f32 %v1054, 0.0
    %v1183 = vmax.f32 %v1055, 0.0
    %v1184 = vmax.f32 %v1056, 0.0
    %v1185 = vmax.f32 %v1057, 0.0
    %v1186 = vmax.f32 %v1058, 0.0
    %v1187 = vmax.f32 %v1059, 0.0
    %v1188 = vmax.f32 %v1060, 0.0
    %v1189 = vmax.f32 %v1061, 0.0
    %v1190 = vmax.f32 %v1062, 0.0
    %v1191 = vmax.f32 %v1063, 0.0
    %v1192 = vmax.f32 %v1064, 0.0
    %v1193 = vmax.f32 %v1065, 0.0
    %v1194 = vmax.f32 %v1066, 0.0
    %v1195 = vmax.f32 %v1067, 0.0
    %v1196 = vmax.f32 %v1068, 0.0
    %v1197 = vmax.f32 %v1069, 0.0
    %v1198 = vmax.f32 %v1070, 0.0
    %v1199 = vmax.f32 %v1071, 0.0
    %v1200 = vmax.f32 %v1072, 0.0
    %v1201 = vmax.f32 %v1073, 0.0
    %v1202 = vmax.f32 %v1074, 0.0
    %v1203 = vmax.f32 %v1075, 0.0
    %v1204 = vmax.f32 %v1076, 0.0
    %v1205 = vmax.f32 %v1077, 0.0
    %v1206 = vmax.f32 %v1078, 0.0
    %v1207 = vmax.f32 %v1079, 0.0
    %v1208 = vmax.f32 %v1080, 0.0
    %v1209 = vmax.f32 %v1081, 0.0
    %v1210 = vmax.f32 %v1082, 0.0
    %v1211 = vmax.f32 %v1083, 0.0
    %v1212 = vmax.f32 %v1084, 0.0
    %v1213 = vmax.f32 %v1085, 0.0
    %v1214 = vmax.f32 %v1086, 0.0
    %v1215 = vmax.f32 %v1087, 0.0
    %v1216 = vmax.f32 %v1088, 0.0
    %v1217 = vmax.f32 %v1089, 0.0
    %v1218 = vmax.f32 %v1090, 0.0
    %v1219 = vmax.f32 %v1091, 0.0
    %v1220 = vmax.f32 %v1092, 0.0
    %v1221 = vmax.f32 %v1093, 0.0
    %v1222 = vmax.f32 %v1094, 0.0
    %v1223 = vmax.f32 %v1095, 0.0
    %v1224 = vmax.f32 %v1096, 0.0
    %v1225 = vmax.f32 %v1097, 0.0
    %v1226 = vmax.f32 %v1098, 0.0
    %v1227 = vmax.f32 %v1099, 0.0
    %v1228 = vmax.f32 %v1100, 0.0
    %v1229 = vmax.f32 %v1101, 0.0
    %v1230 = vmax.f32 %v1102, 0.0
    %v1231 = vmax.f32 %v1103, 0.0
    %v1232 = vmax.f32 %v1104, 0.0
    %v1233 = vmax.f32 %v1105, 0.0
    %v1234 = vmax.f32 %v1106, 0.0
    %v1235 = vmax.f32 %v1107, 0.0
    %v1236 = vmax.f32 %v1108, 0.0
    %v1237 = vmax.f32 %v1109, 0.0
    %v1238 = vmax.f32 %v1110, 0.0
    %v1239 = vmax.f32 %v1111, 0.0
    %v1240 = vmax.f32 %v1112, 0.0
    %v1241 = vmax.f32 %v1113, 0.0
    %v1242 = vmax.f32 %v1114, 0.0
    %v1243 = vmax.f32 %v1115, 0.0
    %v1244 = vmax.f32 %v1116, 0.0
    %v1245 = vmax.f32 %v1117, 0.0
    %v1246 = vmax.f32 %v1118, 0.0
    %v1247 = vmax.f32 %v1119, 0.0
    %v1248 = vmax.f32 %v1120, 0.0
    %v1249 = vmax.f32 %v1121, 0.0
    %v1250 = vmax.f32 %v1122, 0.0
    %v1251 = vmax.f32 %v1123, 0.0
    %v1252 = vmax.f32 %v1124, 0.0
    %v1253 = vmax.f32 %v1125, 0.0
    %v1254 = vmax.f32 %v1126, 0.0
    %v1255 = vmax.f32 %v1127, 0.0
    %v1256 = vmax.f32 %v1128, 0.0
    %v1257 = vmax.f32 %v1129, 0.0
    %v1258 = vmax.f32 %v1130, 0.0
    %v1259 = vmax.f32 %v1131, 0.0
    %v1260 = vmax.f32 %v1132, 0.0
    %v1261 = vmax.f32 %v1133, 0.0
    %v1262 = vmax.f32 %v1134, 0.0
    %v1263 = vld [vmem:[#allocation6] sm:$0x1]
    %v1265 = vlaneseq
    %v1266 = vshrl.u32 %v1265, 7
    %v1267 = vsub.s32 0, %v1266
    %v1268 = vrot.slane %v1263, %v1267
    %v1270 = vadd.f32 %v1268, %v473
    %v1271 = vadd.f32 %v1268, %v477
    %v1272 = vadd.f32 %v1268, %v483
    %v1273 = vadd.f32 %v1268, %v487
    %v1274 = vadd.f32 %v1268, %v493
    %v1275 = vadd.f32 %v1268, %v497
    %v1276 = vadd.f32 %v1268, %v503
    %v1277 = vadd.f32 %v1268, %v507
    %v1278 = vadd.f32 %v1268, %v513
    %v1279 = vadd.f32 %v1268, %v517
    %v1280 = vadd.f32 %v1268, %v523
    %v1281 = vadd.f32 %v1268, %v527
    %v1282 = vadd.f32 %v1268, %v533
    %v1283 = vadd.f32 %v1268, %v537
    %v1284 = vadd.f32 %v1268, %v543
    %v1285 = vadd.f32 %v1268, %v547
    %v1286 = vadd.f32 %v1268, %v553
    %v1287 = vadd.f32 %v1268, %v557
    %v1288 = vadd.f32 %v1268, %v563
    %v1289 = vadd.f32 %v1268, %v567
    %v1290 = vadd.f32 %v1268, %v573
    %v1291 = vadd.f32 %v1268, %v577
    %v1292 = vadd.f32 %v1268, %v583
    %v1293 = vadd.f32 %v1268, %v587
    %v1294 = vadd.f32 %v1268, %v593
    %v1295 = vadd.f32 %v1268, %v597
    %v1296 = vadd.f32 %v1268, %v603
    %v1297 = vadd.f32 %v1268, %v607
    %v1298 = vadd.f32 %v1268, %v613
    %v1299 = vadd.f32 %v1268, %v617
    %v1300 = vadd.f32 %v1268, %v623
    %v1301 = vadd.f32 %v1268, %v627
    %v1302 = vld [vmem:[#allocation9] sm:$0x1]
    %v1304 = vlaneseq
    %v1305 = vshrl.u32 %v1304, 7
    %v1306 = vsub.s32 0, %v1305
    %v1307 = vrot.slane %v1302, %v1306
    %v1309 = vmul.f32 %v134, %v1307
    %v1310 = vmul.f32 %v135, %v1307
    %v1311 = vmul.f32 %v136, %v1307
    %v1312 = vmul.f32 %v137, %v1307
    %v1313 = vmul.f32 %v138, %v1307
    %v1314 = vmul.f32 %v139, %v1307
    %v1315 = vmul.f32 %v140, %v1307
    %v1316 = vmul.f32 %v141, %v1307
    %v1317 = vmul.f32 %v142, %v1307
    %v1318 = vmul.f32 %v143, %v1307
    %v1319 = vmul.f32 %v144, %v1307
    %v1320 = vmul.f32 %v145, %v1307
    %v1321 = vmul.f32 %v146, %v1307
    %v1322 = vmul.f32 %v147, %v1307
    %v1323 = vmul.f32 %v148, %v1307
    %v1324 = vmul.f32 %v149, %v1307
    %v1325 = vmul.f32 %v150, %v1307
    %v1326 = vmul.f32 %v151, %v1307
    %v1327 = vmul.f32 %v152, %v1307
    %v1328 = vmul.f32 %v153, %v1307
    %v1329 = vmul.f32 %v154, %v1307
    %v1330 = vmul.f32 %v155, %v1307
    %v1331 = vmul.f32 %v156, %v1307
    %v1332 = vmul.f32 %v157, %v1307
    %v1333 = vmul.f32 %v158, %v1307
    %v1334 = vmul.f32 %v159, %v1307
    %v1335 = vmul.f32 %v160, %v1307
    %v1336 = vmul.f32 %v161, %v1307
    %v1337 = vmul.f32 %v162, %v1307
    %v1338 = vmul.f32 %v163, %v1307
    %v1339 = vmul.f32 %v164, %v1307
    %v1340 = vmul.f32 %v165, %v1307
    %v1341 = vsub.f32 %v1270, %v1309
    %v1342 = vsub.f32 %v1271, %v1310
    %v1343 = vsub.f32 %v1272, %v1311
    %v1344 = vsub.f32 %v1273, %v1312
    %v1345 = vsub.f32 %v1274, %v1313
    %v1346 = vsub.f32 %v1275, %v1314
    %v1347 = vsub.f32 %v1276, %v1315
    %v1348 = vsub.f32 %v1277, %v1316
    %v1349 = vsub.f32 %v1278, %v1317
    %v1350 = vsub.f32 %v1279, %v1318
    %v1351 = vsub.f32 %v1280, %v1319
    %v1352 = vsub.f32 %v1281, %v1320
    %v1353 = vsub.f32 %v1282, %v1321
    %v1354 = vsub.f32 %v1283, %v1322
    %v1355 = vsub.f32 %v1284, %v1323
    %v1356 = vsub.f32 %v1285, %v1324
    %v1357 = vsub.f32 %v1286, %v1325
    %v1358 = vsub.f32 %v1287, %v1326
    %v1359 = vsub.f32 %v1288, %v1327
    %v1360 = vsub.f32 %v1289, %v1328
    %v1361 = vsub.f32 %v1290, %v1329
    %v1362 = vsub.f32 %v1291, %v1330
    %v1363 = vsub.f32 %v1292, %v1331
    %v1364 = vsub.f32 %v1293, %v1332
    %v1365 = vsub.f32 %v1294, %v1333
    %v1366 = vsub.f32 %v1295, %v1334
    %v1367 = vsub.f32 %v1296, %v1335
    %v1368 = vsub.f32 %v1297, %v1336
    %v1369 = vsub.f32 %v1298, %v1337
    %v1370 = vsub.f32 %v1299, %v1338
    %v1371 = vsub.f32 %v1300, %v1339
    %v1372 = vsub.f32 %v1301, %v1340
    %v1373 = vmul.f32 %v134, %v1341
    %v1374 = vmul.f32 %v135, %v1342
    %v1375 = vmul.f32 %v136, %v1343
    %v1376 = vmul.f32 %v137, %v1344
    %v1377 = vmul.f32 %v138, %v1345
    %v1378 = vmul.f32 %v139, %v1346
    %v1379 = vmul.f32 %v140, %v1347
    %v1380 = vmul.f32 %v141, %v1348
    %v1381 = vmul.f32 %v142, %v1349
    %v1382 = vmul.f32 %v143, %v1350
    %v1383 = vmul.f32 %v144, %v1351
    %v1384 = vmul.f32 %v145, %v1352
    %v1385 = vmul.f32 %v146, %v1353
    %v1386 = vmul.f32 %v147, %v1354
    %v1387 = vmul.f32 %v148, %v1355
    %v1388 = vmul.f32 %v149, %v1356
    %v1389 = vmul.f32 %v150, %v1357
    %v1390 = vmul.f32 %v151, %v1358
    %v1391 = vmul.f32 %v152, %v1359
    %v1392 = vmul.f32 %v153, %v1360
    %v1393 = vmul.f32 %v154, %v1361
    %v1394 = vmul.f32 %v155, %v1362
    %v1395 = vmul.f32 %v156, %v1363
    %v1396 = vmul.f32 %v157, %v1364
    %v1397 = vmul.f32 %v158, %v1365
    %v1398 = vmul.f32 %v159, %v1366
    %v1399 = vmul.f32 %v160, %v1367
    %v1400 = vmul.f32 %v161, %v1368
    %v1401 = vmul.f32 %v162, %v1369
    %v1402 = vmul.f32 %v163, %v1370
    %v1403 = vmul.f32 %v164, %v1371
    %v1404 = vmul.f32 %v165, %v1372
    %1405 = vadd.xlane.f32.xlu0 %v1373
    %v1406 = vpop.xlane.xlu0 %1405
    %1407 = vadd.xlane.f32.xlu0 %v1374
    %v1408 = vpop.xlane.xlu0 %1407
    %1409 = vadd.xlane.f32.xlu0 %v1375
    %v1410 = vpop.xlane.xlu0 %1409
    %1411 = vadd.xlane.f32.xlu0 %v1376
    %v1412 = vpop.xlane.xlu0 %1411
    %1413 = vadd.xlane.f32.xlu0 %v1377
    %v1414 = vpop.xlane.xlu0 %1413
    %1415 = vadd.xlane.f32.xlu0 %v1378
    %v1416 = vpop.xlane.xlu0 %1415
    %1417 = vadd.xlane.f32.xlu0 %v1379
    %v1418 = vpop.xlane.xlu0 %1417
    %1419 = vadd.xlane.f32.xlu0 %v1380
    %v1420 = vpop.xlane.xlu0 %1419
    %1421 = vadd.xlane.f32.xlu0 %v1381
    %v1422 = vpop.xlane.xlu0 %1421
    %1423 = vadd.xlane.f32.xlu0 %v1382
    %v1424 = vpop.xlane.xlu0 %1423
    %1425 = vadd.xlane.f32.xlu0 %v1383
    %v1426 = vpop.xlane.xlu0 %1425
    %1427 = vadd.xlane.f32.xlu0 %v1384
    %v1428 = vpop.xlane.xlu0 %1427
    %1429 = vadd.xlane.f32.xlu0 %v1385
    %v1430 = vpop.xlane.xlu0 %1429
    %1431 = vadd.xlane.f32.xlu0 %v1386
    %v1432 = vpop.xlane.xlu0 %1431
    %1433 = vadd.xlane.f32.xlu0 %v1387
    %v1434 = vpop.xlane.xlu0 %1433
    %1435 = vadd.xlane.f32.xlu0 %v1388
    %v1436 = vpop.xlane.xlu0 %1435
    %1437 = vadd.xlane.f32.xlu0 %v1389
    %v1438 = vpop.xlane.xlu0 %1437
    %1439 = vadd.xlane.f32.xlu0 %v1390
    %v1440 = vpop.xlane.xlu0 %1439
    %1441 = vadd.xlane.f32.xlu0 %v1391
    %v1442 = vpop.xlane.xlu0 %1441
    %1443 = vadd.xlane.f32.xlu0 %v1392
    %v1444 = vpop.xlane.xlu0 %1443
    %1445 = vadd.xlane.f32.xlu0 %v1393
    %v1446 = vpop.xlane.xlu0 %1445
    %1447 = vadd.xlane.f32.xlu0 %v1394
    %v1448 = vpop.xlane.xlu0 %1447
    %1449 = vadd.xlane.f32.xlu0 %v1395
    %v1450 = vpop.xlane.xlu0 %1449
    %1451 = vadd.xlane.f32.xlu0 %v1396
    %v1452 = vpop.xlane.xlu0 %1451
    %1453 = vadd.xlane.f32.xlu0 %v1397
    %v1454 = vpop.xlane.xlu0 %1453
    %1455 = vadd.xlane.f32.xlu0 %v1398
    %v1456 = vpop.xlane.xlu0 %1455
    %1457 = vadd.xlane.f32.xlu0 %v1399
    %v1458 = vpop.xlane.xlu0 %1457
    %1459 = vadd.xlane.f32.xlu0 %v1400
    %v1460 = vpop.xlane.xlu0 %1459
    %1461 = vadd.xlane.f32.xlu0 %v1401
    %v1462 = vpop.xlane.xlu0 %1461
    %1463 = vadd.xlane.f32.xlu0 %v1402
    %v1464 = vpop.xlane.xlu0 %1463
    %1465 = vadd.xlane.f32.xlu0 %v1403
    %v1466 = vpop.xlane.xlu0 %1465
    %1467 = vadd.xlane.f32.xlu0 %v1404
    %v1468 = vpop.xlane.xlu0 %1467
    %v1469 = vpack.c.bf16 %v1139, %v1135
    %v1470 = vpack.c.bf16 %v1140, %v1136
    %v1471 = vpack.c.bf16 %v1141, %v1137
    %v1472 = vpack.c.bf16 %v1142, %v1138
    %v1473 = vpack.c.bf16 %v1147, %v1143
    %v1474 = vpack.c.bf16 %v1148, %v1144
    %v1475 = vpack.c.bf16 %v1149, %v1145
    %v1476 = vpack.c.bf16 %v1150, %v1146
    %v1477 = vpack.c.bf16 %v1155, %v1151
    %v1478 = vpack.c.bf16 %v1156, %v1152
    %v1479 = vpack.c.bf16 %v1157, %v1153
    %v1480 = vpack.c.bf16 %v1158, %v1154
    %v1481 = vpack.c.bf16 %v1163, %v1159
    %v1482 = vpack.c.bf16 %v1164, %v1160
    %v1483 = vpack.c.bf16 %v1165, %v1161
    %v1484 = vpack.c.bf16 %v1166, %v1162
    %v1485 = vpack.c.bf16 %v1171, %v1167
    %v1486 = vpack.c.bf16 %v1172, %v1168
    %v1487 = vpack.c.bf16 %v1173, %v1169
    %v1488 = vpack.c.bf16 %v1174, %v1170
    %v1489 = vpack.c.bf16 %v1179, %v1175
    %v1490 = vpack.c.bf16 %v1180, %v1176
    %v1491 = vpack.c.bf16 %v1181, %v1177
    %v1492 = vpack.c.bf16 %v1182, %v1178
    %v1493 = vpack.c.bf16 %v1187, %v1183
    %v1494 = vpack.c.bf16 %v1188, %v1184
    %v1495 = vpack.c.bf16 %v1189, %v1185
    %v1496 = vpack.c.bf16 %v1190, %v1186
    %v1497 = vpack.c.bf16 %v1195, %v1191
    %v1498 = vpack.c.bf16 %v1196, %v1192
    %v1499 = vpack.c.bf16 %v1197, %v1193
    %v1500 = vpack.c.bf16 %v1198, %v1194
    %v1501 = vpack.c.bf16 %v1203, %v1199
    %v1502 = vpack.c.bf16 %v1204, %v1200
    %v1503 = vpack.c.bf16 %v1205, %v1201
    %v1504 = vpack.c.bf16 %v1206, %v1202
    %v1505 = vpack.c.bf16 %v1211, %v1207
    %v1506 = vpack.c.bf16 %v1212, %v1208
    %v1507 = vpack.c.bf16 %v1213, %v1209
    %v1508 = vpack.c.bf16 %v1214, %v1210
    %v1509 = vpack.c.bf16 %v1219, %v1215
    %v1510 = vpack.c.bf16 %v1220, %v1216
    %v1511 = vpack.c.bf16 %v1221, %v1217
    %v1512 = vpack.c.bf16 %v1222, %v1218
    %v1513 = vpack.c.bf16 %v1227, %v1223
    %v1514 = vpack.c.bf16 %v1228, %v1224
    %v1515 = vpack.c.bf16 %v1229, %v1225
    %v1516 = vpack.c.bf16 %v1230, %v1226
    %v1517 = vpack.c.bf16 %v1235, %v1231
    %v1518 = vpack.c.bf16 %v1236, %v1232
    %v1519 = vpack.c.bf16 %v1237, %v1233
    %v1520 = vpack.c.bf16 %v1238, %v1234
    %v1521 = vpack.c.bf16 %v1243, %v1239
    %v1522 = vpack.c.bf16 %v1244, %v1240
    %v1523 = vpack.c.bf16 %v1245, %v1241
    %v1524 = vpack.c.bf16 %v1246, %v1242
    %v1525 = vpack.c.bf16 %v1251, %v1247
    %v1526 = vpack.c.bf16 %v1252, %v1248
    %v1527 = vpack.c.bf16 %v1253, %v1249
    %v1528 = vpack.c.bf16 %v1254, %v1250
    %v1529 = vpack.c.bf16 %v1259, %v1255
    %v1530 = vpack.c.bf16 %v1260, %v1256
    %v1531 = vpack.c.bf16 %v1261, %v1257
    %v1532 = vpack.c.bf16 %v1262, %v1258
    %v1533 = vld [vmem:[#allocation12] sm:$0xff]
    %v1534 = vld [vmem:[#allocation12 + $0x8] sm:$0xff]
    %v1535 = vld [vmem:[#allocation12 + $0x10] sm:$0xff]
    %v1536 = vld [vmem:[#allocation12 + $0x18] sm:$0xff]
    %v1537 = vld [vmem:[#allocation12 + $0x20] sm:$0xff]
    %v1538 = vld [vmem:[#allocation12 + $0x28] sm:$0xff]
    %v1539 = vld [vmem:[#allocation12 + $0x30] sm:$0xff]
    %v1540 = vld [vmem:[#allocation12 + $0x38] sm:$0xff]
    %v1541 = vld [vmem:[#allocation12 + $0x40] sm:$0xff]
    %v1542 = vld [vmem:[#allocation12 + $0x48] sm:$0xff]
    %v1543 = vld [vmem:[#allocation12 + $0x50] sm:$0xff]
    %v1544 = vld [vmem:[#allocation12 + $0x58] sm:$0xff]
    %v1545 = vld [vmem:[#allocation12 + $0x60] sm:$0xff]
    %v1546 = vld [vmem:[#allocation12 + $0x68] sm:$0xff]
    %v1547 = vld [vmem:[#allocation12 + $0x70] sm:$0xff]
    %v1548 = vld [vmem:[#allocation12 + $0x78] sm:$0xff]
    %v1549 = vld [vmem:[#allocation12 + $0x80] sm:$0xff]
    %v1550 = vld [vmem:[#allocation12 + $0x88] sm:$0xff]
    %v1551 = vld [vmem:[#allocation12 + $0x90] sm:$0xff]
    %v1552 = vld [vmem:[#allocation12 + $0x98] sm:$0xff]
    %v1553 = vld [vmem:[#allocation12 + $0xa0] sm:$0xff]
    %v1554 = vld [vmem:[#allocation12 + $0xa8] sm:$0xff]
    %v1555 = vld [vmem:[#allocation12 + $0xb0] sm:$0xff]
    %v1556 = vld [vmem:[#allocation12 + $0xb8] sm:$0xff]
    %v1557 = vld [vmem:[#allocation12 + $0xc0] sm:$0xff]
    %v1558 = vld [vmem:[#allocation12 + $0xc8] sm:$0xff]
    %v1559 = vld [vmem:[#allocation12 + $0xd0] sm:$0xff]
    %v1560 = vld [vmem:[#allocation12 + $0xd8] sm:$0xff]
    %v1561 = vld [vmem:[#allocation12 + $0xe0] sm:$0xff]
    %v1562 = vld [vmem:[#allocation12 + $0xe8] sm:$0xff]
    %v1563 = vld [vmem:[#allocation12 + $0xf0] sm:$0xff]
    %v1564 = vld [vmem:[#allocation12 + $0xf8] sm:$0xff]
    %v1565 = vld [vmem:[#allocation12 + $0x100] sm:$0xff]
    %v1566 = vld [vmem:[#allocation12 + $0x108] sm:$0xff]
    %v1567 = vld [vmem:[#allocation12 + $0x110] sm:$0xff]
    %v1568 = vld [vmem:[#allocation12 + $0x118] sm:$0xff]
    %v1569 = vld [vmem:[#allocation12 + $0x120] sm:$0xff]
    %v1570 = vld [vmem:[#allocation12 + $0x128] sm:$0xff]
    %v1571 = vld [vmem:[#allocation12 + $0x130] sm:$0xff]
    %v1572 = vld [vmem:[#allocation12 + $0x138] sm:$0xff]
    %v1573 = vld [vmem:[#allocation12 + $0x140] sm:$0xff]
    %v1574 = vld [vmem:[#allocation12 + $0x148] sm:$0xff]
    %v1575 = vld [vmem:[#allocation12 + $0x150] sm:$0xff]
    %v1576 = vld [vmem:[#allocation12 + $0x158] sm:$0xff]
    %v1577 = vld [vmem:[#allocation12 + $0x160] sm:$0xff]
    %v1578 = vld [vmem:[#allocation12 + $0x168] sm:$0xff]
    %v1579 = vld [vmem:[#allocation12 + $0x170] sm:$0xff]
    %v1580 = vld [vmem:[#allocation12 + $0x178] sm:$0xff]
    %v1581 = vld [vmem:[#allocation12 + $0x180] sm:$0xff]
    %v1582 = vld [vmem:[#allocation12 + $0x188] sm:$0xff]
    %v1583 = vld [vmem:[#allocation12 + $0x190] sm:$0xff]
    %v1584 = vld [vmem:[#allocation12 + $0x198] sm:$0xff]
    %v1585 = vld [vmem:[#allocation12 + $0x1a0] sm:$0xff]
    %v1586 = vld [vmem:[#allocation12 + $0x1a8] sm:$0xff]
    %v1587 = vld [vmem:[#allocation12 + $0x1b0] sm:$0xff]
    %v1588 = vld [vmem:[#allocation12 + $0x1b8] sm:$0xff]
    %v1589 = vld [vmem:[#allocation12 + $0x1c0] sm:$0xff]
    %v1590 = vld [vmem:[#allocation12 + $0x1c8] sm:$0xff]
    %v1591 = vld [vmem:[#allocation12 + $0x1d0] sm:$0xff]
    %v1592 = vld [vmem:[#allocation12 + $0x1d8] sm:$0xff]
    %v1593 = vld [vmem:[#allocation12 + $0x1e0] sm:$0xff]
    %v1594 = vld [vmem:[#allocation12 + $0x1e8] sm:$0xff]
    %v1595 = vld [vmem:[#allocation12 + $0x1f0] sm:$0xff]
    %v1596 = vld [vmem:[#allocation12 + $0x1f8] sm:$0xff]
    %v1597 = vld [vmem:[#allocation12 + $0x200] sm:$0xff]
    %v1598 = vld [vmem:[#allocation12 + $0x208] sm:$0xff]
    %v1599 = vld [vmem:[#allocation12 + $0x210] sm:$0xff]
    %v1600 = vld [vmem:[#allocation12 + $0x218] sm:$0xff]
    %v1601 = vld [vmem:[#allocation12 + $0x220] sm:$0xff]
    %v1602 = vld [vmem:[#allocation12 + $0x228] sm:$0xff]
    %v1603 = vld [vmem:[#allocation12 + $0x230] sm:$0xff]
    %v1604 = vld [vmem:[#allocation12 + $0x238] sm:$0xff]
    %v1605 = vld [vmem:[#allocation12 + $0x240] sm:$0xff]
    %v1606 = vld [vmem:[#allocation12 + $0x248] sm:$0xff]
    %v1607 = vld [vmem:[#allocation12 + $0x250] sm:$0xff]
    %v1608 = vld [vmem:[#allocation12 + $0x258] sm:$0xff]
    %v1609 = vld [vmem:[#allocation12 + $0x260] sm:$0xff]
    %v1610 = vld [vmem:[#allocation12 + $0x268] sm:$0xff]
    %v1611 = vld [vmem:[#allocation12 + $0x270] sm:$0xff]
    %v1612 = vld [vmem:[#allocation12 + $0x278] sm:$0xff]
    %v1613 = vld [vmem:[#allocation12 + $0x280] sm:$0xff]
    %v1614 = vld [vmem:[#allocation12 + $0x288] sm:$0xff]
    %v1615 = vld [vmem:[#allocation12 + $0x290] sm:$0xff]
    %v1616 = vld [vmem:[#allocation12 + $0x298] sm:$0xff]
    %v1617 = vld [vmem:[#allocation12 + $0x2a0] sm:$0xff]
    %v1618 = vld [vmem:[#allocation12 + $0x2a8] sm:$0xff]
    %v1619 = vld [vmem:[#allocation12 + $0x2b0] sm:$0xff]
    %v1620 = vld [vmem:[#allocation12 + $0x2b8] sm:$0xff]
    %v1621 = vld [vmem:[#allocation12 + $0x2c0] sm:$0xff]
    %v1622 = vld [vmem:[#allocation12 + $0x2c8] sm:$0xff]
    %v1623 = vld [vmem:[#allocation12 + $0x2d0] sm:$0xff]
    %v1624 = vld [vmem:[#allocation12 + $0x2d8] sm:$0xff]
    %v1625 = vld [vmem:[#allocation12 + $0x2e0] sm:$0xff]
    %v1626 = vld [vmem:[#allocation12 + $0x2e8] sm:$0xff]
    %v1627 = vld [vmem:[#allocation12 + $0x2f0] sm:$0xff]
    %v1628 = vld [vmem:[#allocation12 + $0x2f8] sm:$0xff]
    %v1629 = vld [vmem:[#allocation12 + $0x300] sm:$0xff]
    %v1630 = vld [vmem:[#allocation12 + $0x308] sm:$0xff]
    %v1631 = vld [vmem:[#allocation12 + $0x310] sm:$0xff]
    %v1632 = vld [vmem:[#allocation12 + $0x318] sm:$0xff]
    %v1633 = vld [vmem:[#allocation12 + $0x320] sm:$0xff]
    %v1634 = vld [vmem:[#allocation12 + $0x328] sm:$0xff]
    %v1635 = vld [vmem:[#allocation12 + $0x330] sm:$0xff]
    %v1636 = vld [vmem:[#allocation12 + $0x338] sm:$0xff]
    %v1637 = vld [vmem:[#allocation12 + $0x340] sm:$0xff]
    %v1638 = vld [vmem:[#allocation12 + $0x348] sm:$0xff]
    %v1639 = vld [vmem:[#allocation12 + $0x350] sm:$0xff]
    %v1640 = vld [vmem:[#allocation12 + $0x358] sm:$0xff]
    %v1641 = vld [vmem:[#allocation12 + $0x360] sm:$0xff]
    %v1642 = vld [vmem:[#allocation12 + $0x368] sm:$0xff]
    %v1643 = vld [vmem:[#allocation12 + $0x370] sm:$0xff]
    %v1644 = vld [vmem:[#allocation12 + $0x378] sm:$0xff]
    %v1645 = vld [vmem:[#allocation12 + $0x380] sm:$0xff]
    %v1646 = vld [vmem:[#allocation12 + $0x388] sm:$0xff]
    %v1647 = vld [vmem:[#allocation12 + $0x390] sm:$0xff]
    %v1648 = vld [vmem:[#allocation12 + $0x398] sm:$0xff]
    %v1649 = vld [vmem:[#allocation12 + $0x3a0] sm:$0xff]
    %v1650 = vld [vmem:[#allocation12 + $0x3a8] sm:$0xff]
    %v1651 = vld [vmem:[#allocation12 + $0x3b0] sm:$0xff]
    %v1652 = vld [vmem:[#allocation12 + $0x3b8] sm:$0xff]
    %v1653 = vld [vmem:[#allocation12 + $0x3c0] sm:$0xff]
    %v1654 = vld [vmem:[#allocation12 + $0x3c8] sm:$0xff]
    %v1655 = vld [vmem:[#allocation12 + $0x3d0] sm:$0xff]
    %v1656 = vld [vmem:[#allocation12 + $0x3d8] sm:$0xff]
    %v1657 = vld [vmem:[#allocation12 + $0x3e0] sm:$0xff]
    %v1658 = vld [vmem:[#allocation12 + $0x3e8] sm:$0xff]
    %v1659 = vld [vmem:[#allocation12 + $0x3f0] sm:$0xff]
    %v1660 = vld [vmem:[#allocation12 + $0x3f8] sm:$0xff]
    %v1661 = vld [vmem:[#allocation14] sm:$0xf]
    %v1663 = vlaneseq
    %v1664 = vshrl.u32 %v1663, 7
    %v1665 = vsub.s32 0, %v1664
    %v1666 = vrot.slane %v1661, %v1665
    %v1667 = vlaneseq
    %v1668 = vshrl.u32 %v1667, 7
    %v1669 = vsub.s32 1, %v1668
    %v1670 = vrot.slane %v1661, %v1669
    %v1671 = vlaneseq
    %v1672 = vshrl.u32 %v1671, 7
    %v1673 = vsub.s32 2, %v1672
    %v1674 = vrot.slane %v1661, %v1673
    %v1675 = vlaneseq
    %v1676 = vshrl.u32 %v1675, 7
    %v1677 = vsub.s32 3, %v1676
    %v1678 = vrot.slane %v1661, %v1677
    %v1811 = vunpack.c.l.b16 %v1533
    %v1812 = vunpack.c.h.b16 %v1533
    %v1813 = vunpack.c.l.b16 %v1534
    %v1814 = vunpack.c.h.b16 %v1534
    %v1815 = vunpack.c.l.b16 %v1535
    %v1816 = vunpack.c.h.b16 %v1535
    %v1817 = vunpack.c.l.b16 %v1536
    %v1818 = vunpack.c.h.b16 %v1536
    %v1819 = vunpack.c.l.b16 %v1537
    %v1820 = vunpack.c.h.b16 %v1537
    %v1821 = vunpack.c.l.b16 %v1538
    %v1822 = vunpack.c.h.b16 %v1538
    %v1823 = vunpack.c.l.b16 %v1539
    %v1824 = vunpack.c.h.b16 %v1539
    %v1825 = vunpack.c.l.b16 %v1540
    %v1826 = vunpack.c.h.b16 %v1540
    %v1827 = vunpack.c.l.b16 %v1541
    %v1828 = vunpack.c.h.b16 %v1541
    %v1829 = vunpack.c.l.b16 %v1542
    %v1830 = vunpack.c.h.b16 %v1542
    %v1831 = vunpack.c.l.b16 %v1543
    %v1832 = vunpack.c.h.b16 %v1543
    %v1833 = vunpack.c.l.b16 %v1544
    %v1834 = vunpack.c.h.b16 %v1544
    %v1835 = vunpack.c.l.b16 %v1545
    %v1836 = vunpack.c.h.b16 %v1545
    %v1837 = vunpack.c.l.b16 %v1546
    %v1838 = vunpack.c.h.b16 %v1546
    %v1839 = vunpack.c.l.b16 %v1547
    %v1840 = vunpack.c.h.b16 %v1547
    %v1841 = vunpack.c.l.b16 %v1548
    %v1842 = vunpack.c.h.b16 %v1548
    %v1843 = vunpack.c.l.b16 %v1549
    %v1844 = vunpack.c.h.b16 %v1549
    %v1845 = vunpack.c.l.b16 %v1550
    %v1846 = vunpack.c.h.b16 %v1550
    %v1847 = vunpack.c.l.b16 %v1551
    %v1848 = vunpack.c.h.b16 %v1551
    %v1849 = vunpack.c.l.b16 %v1552
    %v1850 = vunpack.c.h.b16 %v1552
    %v1851 = vunpack.c.l.b16 %v1553
    %v1852 = vunpack.c.h.b16 %v1553
    %v1853 = vunpack.c.l.b16 %v1554
    %v1854 = vunpack.c.h.b16 %v1554
    %v1855 = vunpack.c.l.b16 %v1555
    %v1856 = vunpack.c.h.b16 %v1555
    %v1857 = vunpack.c.l.b16 %v1556
    %v1858 = vunpack.c.h.b16 %v1556
    %v1859 = vunpack.c.l.b16 %v1557
    %v1860 = vunpack.c.h.b16 %v1557
    %v1861 = vunpack.c.l.b16 %v1558
    %v1862 = vunpack.c.h.b16 %v1558
    %v1863 = vunpack.c.l.b16 %v1559
    %v1864 = vunpack.c.h.b16 %v1559
    %v1865 = vunpack.c.l.b16 %v1560
    %v1866 = vunpack.c.h.b16 %v1560
    %v1867 = vunpack.c.l.b16 %v1561
    %v1868 = vunpack.c.h.b16 %v1561
    %v1869 = vunpack.c.l.b16 %v1562
    %v1870 = vunpack.c.h.b16 %v1562
    %v1871 = vunpack.c.l.b16 %v1563
    %v1872 = vunpack.c.h.b16 %v1563
    %v1873 = vunpack.c.l.b16 %v1564
    %v1874 = vunpack.c.h.b16 %v1564
    %v1875 = vunpack.c.l.b16 %v1565
    %v1876 = vunpack.c.h.b16 %v1565
    %v1877 = vunpack.c.l.b16 %v1566
    %v1878 = vunpack.c.h.b16 %v1566
    %v1879 = vunpack.c.l.b16 %v1567
    %v1880 = vunpack.c.h.b16 %v1567
    %v1881 = vunpack.c.l.b16 %v1568
    %v1882 = vunpack.c.h.b16 %v1568
    %v1883 = vunpack.c.l.b16 %v1569
    %v1884 = vunpack.c.h.b16 %v1569
    %v1885 = vunpack.c.l.b16 %v1570
    %v1886 = vunpack.c.h.b16 %v1570
    %v1887 = vunpack.c.l.b16 %v1571
    %v1888 = vunpack.c.h.b16 %v1571
    %v1889 = vunpack.c.l.b16 %v1572
    %v1890 = vunpack.c.h.b16 %v1572
    %v1891 = vunpack.c.l.b16 %v1573
    %v1892 = vunpack.c.h.b16 %v1573
    %v1893 = vunpack.c.l.b16 %v1574
    %v1894 = vunpack.c.h.b16 %v1574
    %v1895 = vunpack.c.l.b16 %v1575
    %v1896 = vunpack.c.h.b16 %v1575
    %v1897 = vunpack.c.l.b16 %v1576
    %v1898 = vunpack.c.h.b16 %v1576
    %v1899 = vunpack.c.l.b16 %v1577
    %v1900 = vunpack.c.h.b16 %v1577
    %v1901 = vunpack.c.l.b16 %v1578
    %v1902 = vunpack.c.h.b16 %v1578
    %v1903 = vunpack.c.l.b16 %v1579
    %v1904 = vunpack.c.h.b16 %v1579
    %v1905 = vunpack.c.l.b16 %v1580
    %v1906 = vunpack.c.h.b16 %v1580
    %v1907 = vunpack.c.l.b16 %v1581
    %v1908 = vunpack.c.h.b16 %v1581
    %v1909 = vunpack.c.l.b16 %v1582
    %v1910 = vunpack.c.h.b16 %v1582
    %v1911 = vunpack.c.l.b16 %v1583
    %v1912 = vunpack.c.h.b16 %v1583
    %v1913 = vunpack.c.l.b16 %v1584
    %v1914 = vunpack.c.h.b16 %v1584
    %v1915 = vunpack.c.l.b16 %v1585
    %v1916 = vunpack.c.h.b16 %v1585
    %v1917 = vunpack.c.l.b16 %v1586
    %v1918 = vunpack.c.h.b16 %v1586
    %v1919 = vunpack.c.l.b16 %v1587
    %v1920 = vunpack.c.h.b16 %v1587
    %v1921 = vunpack.c.l.b16 %v1588
    %v1922 = vunpack.c.h.b16 %v1588
    %v1923 = vunpack.c.l.b16 %v1589
    %v1924 = vunpack.c.h.b16 %v1589
    %v1925 = vunpack.c.l.b16 %v1590
    %v1926 = vunpack.c.h.b16 %v1590
    %v1927 = vunpack.c.l.b16 %v1591
    %v1928 = vunpack.c.h.b16 %v1591
    %v1929 = vunpack.c.l.b16 %v1592
    %v1930 = vunpack.c.h.b16 %v1592
    %v1931 = vunpack.c.l.b16 %v1593
    %v1932 = vunpack.c.h.b16 %v1593
    %v1933 = vunpack.c.l.b16 %v1594
    %v1934 = vunpack.c.h.b16 %v1594
    %v1935 = vunpack.c.l.b16 %v1595
    %v1936 = vunpack.c.h.b16 %v1595
    %v1937 = vunpack.c.l.b16 %v1596
    %v1938 = vunpack.c.h.b16 %v1596
    %v1939 = vunpack.c.l.b16 %v1597
    %v1940 = vunpack.c.h.b16 %v1597
    %v1941 = vunpack.c.l.b16 %v1598
    %v1942 = vunpack.c.h.b16 %v1598
    %v1943 = vunpack.c.l.b16 %v1599
    %v1944 = vunpack.c.h.b16 %v1599
    %v1945 = vunpack.c.l.b16 %v1600
    %v1946 = vunpack.c.h.b16 %v1600
    %v1947 = vunpack.c.l.b16 %v1601
    %v1948 = vunpack.c.h.b16 %v1601
    %v1949 = vunpack.c.l.b16 %v1602
    %v1950 = vunpack.c.h.b16 %v1602
    %v1951 = vunpack.c.l.b16 %v1603
    %v1952 = vunpack.c.h.b16 %v1603
    %v1953 = vunpack.c.l.b16 %v1604
    %v1954 = vunpack.c.h.b16 %v1604
    %v1955 = vunpack.c.l.b16 %v1605
    %v1956 = vunpack.c.h.b16 %v1605
    %v1957 = vunpack.c.l.b16 %v1606
    %v1958 = vunpack.c.h.b16 %v1606
    %v1959 = vunpack.c.l.b16 %v1607
    %v1960 = vunpack.c.h.b16 %v1607
    %v1961 = vunpack.c.l.b16 %v1608
    %v1962 = vunpack.c.h.b16 %v1608
    %v1963 = vunpack.c.l.b16 %v1609
    %v1964 = vunpack.c.h.b16 %v1609
    %v1965 = vunpack.c.l.b16 %v1610
    %v1966 = vunpack.c.h.b16 %v1610
    %v1967 = vunpack.c.l.b16 %v1611
    %v1968 = vunpack.c.h.b16 %v1611
    %v1969 = vunpack.c.l.b16 %v1612
    %v1970 = vunpack.c.h.b16 %v1612
    %v1971 = vunpack.c.l.b16 %v1613
    %v1972 = vunpack.c.h.b16 %v1613
    %v1973 = vunpack.c.l.b16 %v1614
    %v1974 = vunpack.c.h.b16 %v1614
    %v1975 = vunpack.c.l.b16 %v1615
    %v1976 = vunpack.c.h.b16 %v1615
    %v1977 = vunpack.c.l.b16 %v1616
    %v1978 = vunpack.c.h.b16 %v1616
    %v1979 = vunpack.c.l.b16 %v1617
    %v1980 = vunpack.c.h.b16 %v1617
    %v1981 = vunpack.c.l.b16 %v1618
    %v1982 = vunpack.c.h.b16 %v1618
    %v1983 = vunpack.c.l.b16 %v1619
    %v1984 = vunpack.c.h.b16 %v1619
    %v1985 = vunpack.c.l.b16 %v1620
    %v1986 = vunpack.c.h.b16 %v1620
    %v1987 = vunpack.c.l.b16 %v1621
    %v1988 = vunpack.c.h.b16 %v1621
    %v1989 = vunpack.c.l.b16 %v1622
    %v1990 = vunpack.c.h.b16 %v1622
    %v1991 = vunpack.c.l.b16 %v1623
    %v1992 = vunpack.c.h.b16 %v1623
    %v1993 = vunpack.c.l.b16 %v1624
    %v1994 = vunpack.c.h.b16 %v1624
    %v1995 = vunpack.c.l.b16 %v1625
    %v1996 = vunpack.c.h.b16 %v1625
    %v1997 = vunpack.c.l.b16 %v1626
    %v1998 = vunpack.c.h.b16 %v1626
    %v1999 = vunpack.c.l.b16 %v1627
    %v2000 = vunpack.c.h.b16 %v1627
    %v2001 = vunpack.c.l.b16 %v1628
    %v2002 = vunpack.c.h.b16 %v1628
    %v2003 = vunpack.c.l.b16 %v1629
    %v2004 = vunpack.c.h.b16 %v1629
    %v2005 = vunpack.c.l.b16 %v1630
    %v2006 = vunpack.c.h.b16 %v1630
    %v2007 = vunpack.c.l.b16 %v1631
    %v2008 = vunpack.c.h.b16 %v1631
    %v2009 = vunpack.c.l.b16 %v1632
    %v2010 = vunpack.c.h.b16 %v1632
    %v2011 = vunpack.c.l.b16 %v1633
    %v2012 = vunpack.c.h.b16 %v1633
    %v2013 = vunpack.c.l.b16 %v1634
    %v2014 = vunpack.c.h.b16 %v1634
    %v2015 = vunpack.c.l.b16 %v1635
    %v2016 = vunpack.c.h.b16 %v1635
    %v2017 = vunpack.c.l.b16 %v1636
    %v2018 = vunpack.c.h.b16 %v1636
    %v2019 = vunpack.c.l.b16 %v1637
    %v2020 = vunpack.c.h.b16 %v1637
    %v2021 = vunpack.c.l.b16 %v1638
    %v2022 = vunpack.c.h.b16 %v1638
    %v2023 = vunpack.c.l.b16 %v1639
    %v2024 = vunpack.c.h.b16 %v1639
    %v2025 = vunpack.c.l.b16 %v1640
    %v2026 = vunpack.c.h.b16 %v1640
    %v2027 = vunpack.c.l.b16 %v1641
    %v2028 = vunpack.c.h.b16 %v1641
    %v2029 = vunpack.c.l.b16 %v1642
    %v2030 = vunpack.c.h.b16 %v1642
    %v2031 = vunpack.c.l.b16 %v1643
    %v2032 = vunpack.c.h.b16 %v1643
    %v2033 = vunpack.c.l.b16 %v1644
    %v2034 = vunpack.c.h.b16 %v1644
    %v2035 = vunpack.c.l.b16 %v1645
    %v2036 = vunpack.c.h.b16 %v1645
    %v2037 = vunpack.c.l.b16 %v1646
    %v2038 = vunpack.c.h.b16 %v1646
    %v2039 = vunpack.c.l.b16 %v1647
    %v2040 = vunpack.c.h.b16 %v1647
    %v2041 = vunpack.c.l.b16 %v1648
    %v2042 = vunpack.c.h.b16 %v1648
    %v2043 = vunpack.c.l.b16 %v1649
    %v2044 = vunpack.c.h.b16 %v1649
    %v2045 = vunpack.c.l.b16 %v1650
    %v2046 = vunpack.c.h.b16 %v1650
    %v2047 = vunpack.c.l.b16 %v1651
    %v2048 = vunpack.c.h.b16 %v1651
    %v2049 = vunpack.c.l.b16 %v1652
    %v2050 = vunpack.c.h.b16 %v1652
    %v2051 = vunpack.c.l.b16 %v1653
    %v2052 = vunpack.c.h.b16 %v1653
    %v2053 = vunpack.c.l.b16 %v1654
    %v2054 = vunpack.c.h.b16 %v1654
    %v2055 = vunpack.c.l.b16 %v1655
    %v2056 = vunpack.c.h.b16 %v1655
    %v2057 = vunpack.c.l.b16 %v1656
    %v2058 = vunpack.c.h.b16 %v1656
    %v2059 = vunpack.c.l.b16 %v1657
    %v2060 = vunpack.c.h.b16 %v1657
    %v2061 = vunpack.c.l.b16 %v1658
    %v2062 = vunpack.c.h.b16 %v1658
    %v2063 = vunpack.c.l.b16 %v1659
    %v2064 = vunpack.c.h.b16 %v1659
    %v2065 = vunpack.c.l.b16 %v1660
    %v2066 = vunpack.c.h.b16 %v1660
    %v2067 = vpack.c.b16 %v1815, %v1811
    %v2068 = vpack.c.b16 %v1816, %v1812
    %v2069 = vpack.c.b16 %v1817, %v1813
    %v2070 = vpack.c.b16 %v1818, %v1814
    %v2071 = vpack.c.b16 %v1823, %v1819
    %v2072 = vpack.c.b16 %v1824, %v1820
    %v2073 = vpack.c.b16 %v1825, %v1821
    %v2074 = vpack.c.b16 %v1826, %v1822
    %v2075 = vpack.c.b16 %v1831, %v1827
    %v2076 = vpack.c.b16 %v1832, %v1828
    %v2077 = vpack.c.b16 %v1833, %v1829
    %v2078 = vpack.c.b16 %v1834, %v1830
    %v2079 = vpack.c.b16 %v1839, %v1835
    %v2080 = vpack.c.b16 %v1840, %v1836
    %v2081 = vpack.c.b16 %v1841, %v1837
    %v2082 = vpack.c.b16 %v1842, %v1838
    %v2083 = vpack.c.b16 %v1847, %v1843
    %v2084 = vpack.c.b16 %v1848, %v1844
    %v2085 = vpack.c.b16 %v1849, %v1845
    %v2086 = vpack.c.b16 %v1850, %v1846
    %v2087 = vpack.c.b16 %v1855, %v1851
    %v2088 = vpack.c.b16 %v1856, %v1852
    %v2089 = vpack.c.b16 %v1857, %v1853
    %v2090 = vpack.c.b16 %v1858, %v1854
    %v2091 = vpack.c.b16 %v1863, %v1859
    %v2092 = vpack.c.b16 %v1864, %v1860
    %v2093 = vpack.c.b16 %v1865, %v1861
    %v2094 = vpack.c.b16 %v1866, %v1862
    %v2095 = vpack.c.b16 %v1871, %v1867
    %v2096 = vpack.c.b16 %v1872, %v1868
    %v2097 = vpack.c.b16 %v1873, %v1869
    %v2098 = vpack.c.b16 %v1874, %v1870
    %v2099 = vpack.c.b16 %v1879, %v1875
    %v2100 = vpack.c.b16 %v1880, %v1876
    %v2101 = vpack.c.b16 %v1881, %v1877
    %v2102 = vpack.c.b16 %v1882, %v1878
    %v2103 = vpack.c.b16 %v1887, %v1883
    %v2104 = vpack.c.b16 %v1888, %v1884
    %v2105 = vpack.c.b16 %v1889, %v1885
    %v2106 = vpack.c.b16 %v1890, %v1886
    %v2107 = vpack.c.b16 %v1895, %v1891
    %v2108 = vpack.c.b16 %v1896, %v1892
    %v2109 = vpack.c.b16 %v1897, %v1893
    %v2110 = vpack.c.b16 %v1898, %v1894
    %v2111 = vpack.c.b16 %v1903, %v1899
    %v2112 = vpack.c.b16 %v1904, %v1900
    %v2113 = vpack.c.b16 %v1905, %v1901
    %v2114 = vpack.c.b16 %v1906, %v1902
    %v2115 = vpack.c.b16 %v1911, %v1907
    %v2116 = vpack.c.b16 %v1912, %v1908
    %v2117 = vpack.c.b16 %v1913, %v1909
    %v2118 = vpack.c.b16 %v1914, %v1910
    %v2119 = vpack.c.b16 %v1919, %v1915
    %v2120 = vpack.c.b16 %v1920, %v1916
    %v2121 = vpack.c.b16 %v1921, %v1917
    %v2122 = vpack.c.b16 %v1922, %v1918
    %v2123 = vpack.c.b16 %v1927, %v1923
    %v2124 = vpack.c.b16 %v1928, %v1924
    %v2125 = vpack.c.b16 %v1929, %v1925
    %v2126 = vpack.c.b16 %v1930, %v1926
    %v2127 = vpack.c.b16 %v1935, %v1931
    %v2128 = vpack.c.b16 %v1936, %v1932
    %v2129 = vpack.c.b16 %v1937, %v1933
    %v2130 = vpack.c.b16 %v1938, %v1934
    %v2131 = vpack.c.b16 %v1943, %v1939
    %v2132 = vpack.c.b16 %v1944, %v1940
    %v2133 = vpack.c.b16 %v1945, %v1941
    %v2134 = vpack.c.b16 %v1946, %v1942
    %v2135 = vpack.c.b16 %v1951, %v1947
    %v2136 = vpack.c.b16 %v1952, %v1948
    %v2137 = vpack.c.b16 %v1953, %v1949
    %v2138 = vpack.c.b16 %v1954, %v1950
    %v2139 = vpack.c.b16 %v1959, %v1955
    %v2140 = vpack.c.b16 %v1960, %v1956
    %v2141 = vpack.c.b16 %v1961, %v1957
    %v2142 = vpack.c.b16 %v1962, %v1958
    %v2143 = vpack.c.b16 %v1967, %v1963
    %v2144 = vpack.c.b16 %v1968, %v1964
    %v2145 = vpack.c.b16 %v1969, %v1965
    %v2146 = vpack.c.b16 %v1970, %v1966
    %v2147 = vpack.c.b16 %v1975, %v1971
    %v2148 = vpack.c.b16 %v1976, %v1972
    %v2149 = vpack.c.b16 %v1977, %v1973
    %v2150 = vpack.c.b16 %v1978, %v1974
    %v2151 = vpack.c.b16 %v1983, %v1979
    %v2152 = vpack.c.b16 %v1984, %v1980
    %v2153 = vpack.c.b16 %v1985, %v1981
    %v2154 = vpack.c.b16 %v1986, %v1982
    %v2155 = vpack.c.b16 %v1991, %v1987
    %v2156 = vpack.c.b16 %v1992, %v1988
    %v2157 = vpack.c.b16 %v1993, %v1989
    %v2158 = vpack.c.b16 %v1994, %v1990
    %v2159 = vpack.c.b16 %v1999, %v1995
    %v2160 = vpack.c.b16 %v2000, %v1996
    %v2161 = vpack.c.b16 %v2001, %v1997
    %v2162 = vpack.c.b16 %v2002, %v1998
    %v2163 = vpack.c.b16 %v2007, %v2003
    %v2164 = vpack.c.b16 %v2008, %v2004
    %v2165 = vpack.c.b16 %v2009, %v2005
    %v2166 = vpack.c.b16 %v2010, %v2006
    %v2167 = vpack.c.b16 %v2015, %v2011
    %v2168 = vpack.c.b16 %v2016, %v2012
    %v2169 = vpack.c.b16 %v2017, %v2013
    %v2170 = vpack.c.b16 %v2018, %v2014
    %v2171 = vpack.c.b16 %v2023, %v2019
    %v2172 = vpack.c.b16 %v2024, %v2020
    %v2173 = vpack.c.b16 %v2025, %v2021
    %v2174 = vpack.c.b16 %v2026, %v2022
    %v2175 = vpack.c.b16 %v2031, %v2027
    %v2176 = vpack.c.b16 %v2032, %v2028
    %v2177 = vpack.c.b16 %v2033, %v2029
    %v2178 = vpack.c.b16 %v2034, %v2030
    %v2179 = vpack.c.b16 %v2039, %v2035
    %v2180 = vpack.c.b16 %v2040, %v2036
    %v2181 = vpack.c.b16 %v2041, %v2037
    %v2182 = vpack.c.b16 %v2042, %v2038
    %v2183 = vpack.c.b16 %v2047, %v2043
    %v2184 = vpack.c.b16 %v2048, %v2044
    %v2185 = vpack.c.b16 %v2049, %v2045
    %v2186 = vpack.c.b16 %v2050, %v2046
    %v2187 = vpack.c.b16 %v2055, %v2051
    %v2188 = vpack.c.b16 %v2056, %v2052
    %v2189 = vpack.c.b16 %v2057, %v2053
    %v2190 = vpack.c.b16 %v2058, %v2054
    %v2191 = vpack.c.b16 %v2063, %v2059
    %v2192 = vpack.c.b16 %v2064, %v2060
    %v2193 = vpack.c.b16 %v2065, %v2061
    %v2194 = vpack.c.b16 %v2066, %v2062
    %2323 = vmatprep.subr.bf16.mxu0 %v2068
    %2324 = vmatpush1.bf16.msra.mxu0 %v2067
    %2325 = vmatprep.subr.bf16.mxu0 %v2072
    %2326 = vmatpush1.bf16.msra.mxu0 %v2071
    %2327 = vmatprep.subr.bf16.mxu0 %v2076
    %2328 = vmatpush1.bf16.msra.mxu0 %v2075
    %2329 = vmatprep.subr.bf16.mxu0 %v2080
    %2330 = vmatpush1.bf16.msra.mxu0 %v2079
    %2331 = vmatprep.subr.bf16.mxu0 %v2084
    %2332 = vmatpush1.bf16.msra.mxu0 %v2083
    %2333 = vmatprep.subr.bf16.mxu0 %v2088
    %2334 = vmatpush1.bf16.msra.mxu0 %v2087
    %2335 = vmatprep.subr.bf16.mxu0 %v2092
    %2336 = vmatpush1.bf16.msra.mxu0 %v2091
    %2337 = vmatprep.subr.bf16.mxu0 %v2096
    %2338 = vmatpush1.bf16.msra.mxu0 %v2095
    %2339 = vmatprep.subr.bf16.mxu0 %v2100
    %2340 = vmatpush1.bf16.msra.mxu0 %v2099
    %2341 = vmatprep.subr.bf16.mxu0 %v2104
    %2342 = vmatpush1.bf16.msra.mxu0 %v2103
    %2343 = vmatprep.subr.bf16.mxu0 %v2108
    %2344 = vmatpush1.bf16.msra.mxu0 %v2107
    %2345 = vmatprep.subr.bf16.mxu0 %v2112
    %2346 = vmatpush1.bf16.msra.mxu0 %v2111
    %2347 = vmatprep.subr.bf16.mxu0 %v2116
    %2348 = vmatpush1.bf16.msra.mxu0 %v2115
    %2349 = vmatprep.subr.bf16.mxu0 %v2120
    %2350 = vmatpush1.bf16.msra.mxu0 %v2119
    %2351 = vmatprep.subr.bf16.mxu0 %v2124
    %2352 = vmatpush1.bf16.msra.mxu0 %v2123
    %2353 = vmatprep.subr.bf16.mxu0 %v2128
    %2354 = vmatpush1.bf16.msra.mxu0 %v2127
    %2355 = vmatprep.mubr.bf16.mxu0 %v1470
    %2356 = vmatmul.mubr.bf16.gmra.mrb[0].mxu0 %v1469
    %v2357 = vpop.f32.mrb[0].mxu0
    %v2358 = vadd.f32 %v1666, %v2357
    %v2359 = vpop.f32.mrb[0].mxu0
    %v2360 = vadd.f32 %v1670, %v2359
    %v2361 = vpop.f32.mrb[0].mxu0
    %v2362 = vadd.f32 %v1666, %v2361
    %v2363 = vpop.f32.mrb[0].mxu0
    %v2364 = vadd.f32 %v1670, %v2363
    %2365 = vmatprep.mubr.bf16.mxu0 %v1474
    %2366 = vmatmul.mubr.bf16.gmra.mrb[0].mxu0 %v1473
    %v2367 = vpop.f32.mrb[0].mxu0
    %v2368 = vadd.f32 %v1666, %v2367
    %v2369 = vpop.f32.mrb[0].mxu0
    %v2370 = vadd.f32 %v1670, %v2369
    %v2371 = vpop.f32.mrb[0].mxu0
    %v2372 = vadd.f32 %v1666, %v2371
    %v2373 = vpop.f32.mrb[0].mxu0
    %v2374 = vadd.f32 %v1670, %v2373
    %2375 = vmatprep.mubr.bf16.mxu0 %v1478
    %2376 = vmatmul.mubr.bf16.gmra.mrb[0].mxu0 %v1477
    %v2377 = vpop.f32.mrb[0].mxu0
    %v2378 = vadd.f32 %v1666, %v2377
    %v2379 = vpop.f32.mrb[0].mxu0
    %v2380 = vadd.f32 %v1670, %v2379
    %v2381 = vpop.f32.mrb[0].mxu0
    %v2382 = vadd.f32 %v1666, %v2381
    %v2383 = vpop.f32.mrb[0].mxu0
    %v2384 = vadd.f32 %v1670, %v2383
    %2385 = vmatprep.mubr.bf16.mxu0 %v1482
    %2386 = vmatmul.mubr.bf16.gmra.mrb[0].mxu0 %v1481
    %v2387 = vpop.f32.mrb[0].mxu0
    %v2388 = vadd.f32 %v1666, %v2387
    %v2389 = vpop.f32.mrb[0].mxu0
    %v2390 = vadd.f32 %v1670, %v2389
    %v2391 = vpop.f32.mrb[0].mxu0
    %v2392 = vadd.f32 %v1666, %v2391
    %v2393 = vpop.f32.mrb[0].mxu0
    %v2394 = vadd.f32 %v1670, %v2393
    %2395 = vmatprep.mubr.bf16.mxu0 %v1486
    %2396 = vmatmul.mubr.bf16.gmra.mrb[0].mxu0 %v1485
    %v2397 = vpop.f32.mrb[0].mxu0
    %v2398 = vadd.f32 %v1666, %v2397
    %v2399 = vpop.f32.mrb[0].mxu0
    %v2400 = vadd.f32 %v1670, %v2399
    %v2401 = vpop.f32.mrb[0].mxu0
    %v2402 = vadd.f32 %v1666, %v2401
    %v2403 = vpop.f32.mrb[0].mxu0
    %v2404 = vadd.f32 %v1670, %v2403
    %2405 = vmatprep.mubr.bf16.mxu0 %v1490
    %2406 = vmatmul.mubr.bf16.gmra.mrb[0].mxu0 %v1489
    %v2407 = vpop.f32.mrb[0].mxu0
    %v2408 = vadd.f32 %v1666, %v2407
    %v2409 = vpop.f32.mrb[0].mxu0
    %v2410 = vadd.f32 %v1670, %v2409
    %v2411 = vpop.f32.mrb[0].mxu0
    %v2412 = vadd.f32 %v1666, %v2411
    %v2413 = vpop.f32.mrb[0].mxu0
    %v2414 = vadd.f32 %v1670, %v2413
    %2415 = vmatprep.mubr.bf16.mxu0 %v1494
    %2416 = vmatmul.mubr.bf16.gmra.mrb[0].mxu0 %v1493
    %v2417 = vpop.f32.mrb[0].mxu0
    %v2418 = vadd.f32 %v1666, %v2417
    %v2419 = vpop.f32.mrb[0].mxu0
    %v2420 = vadd.f32 %v1670, %v2419
    %v2421 = vpop.f32.mrb[0].mxu0
    %v2422 = vadd.f32 %v1666, %v2421
    %v2423 = vpop.f32.mrb[0].mxu0
    %v2424 = vadd.f32 %v1670, %v2423
    %2425 = vmatprep.mubr.bf16.mxu0 %v1498
    %2426 = vmatmul.mubr.bf16.gmra.mrb[0].mxu0 %v1497
    %v2427 = vpop.f32.mrb[0].mxu0
    %v2428 = vadd.f32 %v1666, %v2427
    %v2429 = vpop.f32.mrb[0].mxu0
    %v2430 = vadd.f32 %v1670, %v2429
    %v2431 = vpop.f32.mrb[0].mxu0
    %v2432 = vadd.f32 %v1666, %v2431
    %v2433 = vpop.f32.mrb[0].mxu0
    %v2434 = vadd.f32 %v1670, %v2433
    %2435 = vmatprep.mubr.bf16.mxu0 %v1502
    %2436 = vmatmul.mubr.bf16.gmra.mrb[0].mxu0 %v1501
    %v2437 = vpop.f32.mrb[0].mxu0
    %v2438 = vadd.f32 %v1666, %v2437
    %v2439 = vpop.f32.mrb[0].mxu0
    %v2440 = vadd.f32 %v1670, %v2439
    %v2441 = vpop.f32.mrb[0].mxu0
    %v2442 = vadd.f32 %v1666, %v2441
    %v2443 = vpop.f32.mrb[0].mxu0
    %v2444 = vadd.f32 %v1670, %v2443
    %2445 = vmatprep.mubr.bf16.mxu0 %v1506
    %2446 = vmatmul.mubr.bf16.gmra.mrb[0].mxu0 %v1505
    %v2447 = vpop.f32.mrb[0].mxu0
    %v2448 = vadd.f32 %v1666, %v2447
    %v2449 = vpop.f32.mrb[0].mxu0
    %v2450 = vadd.f32 %v1670, %v2449
    %v2451 = vpop.f32.mrb[0].mxu0
    %v2452 = vadd.f32 %v1666, %v2451
    %v2453 = vpop.f32.mrb[0].mxu0
    %v2454 = vadd.f32 %v1670, %v2453
    %2455 = vmatprep.mubr.bf16.mxu0 %v1510
    %2456 = vmatmul.mubr.bf16.gmra.mrb[0].mxu0 %v1509
    %v2457 = vpop.f32.mrb[0].mxu0
    %v2458 = vadd.f32 %v1666, %v2457
    %v2459 = vpop.f32.mrb[0].mxu0
    %v2460 = vadd.f32 %v1670, %v2459
    %v2461 = vpop.f32.mrb[0].mxu0
    %v2462 = vadd.f32 %v1666, %v2461
    %v2463 = vpop.f32.mrb[0].mxu0
    %v2464 = vadd.f32 %v1670, %v2463
    %2465 = vmatprep.mubr.bf16.mxu0 %v1514
    %2466 = vmatmul.mubr.bf16.gmra.mrb[0].mxu0 %v1513
    %v2467 = vpop.f32.mrb[0].mxu0
    %v2468 = vadd.f32 %v1666, %v2467
    %v2469 = vpop.f32.mrb[0].mxu0
    %v2470 = vadd.f32 %v1670, %v2469
    %v2471 = vpop.f32.mrb[0].mxu0
    %v2472 = vadd.f32 %v1666, %v2471
    %v2473 = vpop.f32.mrb[0].mxu0
    %v2474 = vadd.f32 %v1670, %v2473
    %2475 = vmatprep.mubr.bf16.mxu0 %v1518
    %2476 = vmatmul.mubr.bf16.gmra.mrb[0].mxu0 %v1517
    %v2477 = vpop.f32.mrb[0].mxu0
    %v2478 = vadd.f32 %v1666, %v2477
    %v2479 = vpop.f32.mrb[0].mxu0
    %v2480 = vadd.f32 %v1670, %v2479
    %v2481 = vpop.f32.mrb[0].mxu0
    %v2482 = vadd.f32 %v1666, %v2481
    %v2483 = vpop.f32.mrb[0].mxu0
    %v2484 = vadd.f32 %v1670, %v2483
    %2485 = vmatprep.mubr.bf16.mxu0 %v1522
    %2486 = vmatmul.mubr.bf16.gmra.mrb[0].mxu0 %v1521
    %v2487 = vpop.f32.mrb[0].mxu0
    %v2488 = vadd.f32 %v1666, %v2487
    %v2489 = vpop.f32.mrb[0].mxu0
    %v2490 = vadd.f32 %v1670, %v2489
    %v2491 = vpop.f32.mrb[0].mxu0
    %v2492 = vadd.f32 %v1666, %v2491
    %v2493 = vpop.f32.mrb[0].mxu0
    %v2494 = vadd.f32 %v1670, %v2493
    %2495 = vmatprep.mubr.bf16.mxu0 %v1526
    %2496 = vmatmul.mubr.bf16.gmra.mrb[0].mxu0 %v1525
    %v2497 = vpop.f32.mrb[0].mxu0
    %v2498 = vadd.f32 %v1666, %v2497
    %v2499 = vpop.f32.mrb[0].mxu0
    %v2500 = vadd.f32 %v1670, %v2499
    %v2501 = vpop.f32.mrb[0].mxu0
    %v2502 = vadd.f32 %v1666, %v2501
    %v2503 = vpop.f32.mrb[0].mxu0
    %v2504 = vadd.f32 %v1670, %v2503
    %2505 = vmatprep.mubr.bf16.mxu0 %v1530
    %2506 = vmatmul.mubr.bf16.gmra.mrb[0].mxu0 %v1529
    %v2507 = vpop.f32.mrb[0].mxu0
    %v2508 = vadd.f32 %v1666, %v2507
    %v2509 = vpop.f32.mrb[0].mxu0
    %v2510 = vadd.f32 %v1670, %v2509
    %v2511 = vpop.f32.mrb[0].mxu0
    %v2512 = vadd.f32 %v1666, %v2511
    %v2513 = vpop.f32.mrb[0].mxu0
    %v2514 = vadd.f32 %v1670, %v2513
    %2515 = vdwg.mxu0
    %2516 = vmatprep.subr.bf16.mxu0 %v2132
    %2517 = vmatpush1.bf16.msra.mxu0 %v2131
    %2518 = vmatprep.subr.bf16.mxu0 %v2136
    %2519 = vmatpush1.bf16.msra.mxu0 %v2135
    %2520 = vmatprep.subr.bf16.mxu0 %v2140
    %2521 = vmatpush1.bf16.msra.mxu0 %v2139
    %2522 = vmatprep.subr.bf16.mxu0 %v2144
    %2523 = vmatpush1.bf16.msra.mxu0 %v2143
    %2524 = vmatprep.subr.bf16.mxu0 %v2148
    %2525 = vmatpush1.bf16.msra.mxu0 %v2147
    %2526 = vmatprep.subr.bf16.mxu0 %v2152
    %2527 = vmatpush1.bf16.msra.mxu0 %v2151
    %2528 = vmatprep.subr.bf16.mxu0 %v2156
    %2529 = vmatpush1.bf16.msra.mxu0 %v2155
    %2530 = vmatprep.subr.bf16.mxu0 %v2160
    %2531 = vmatpush1.bf16.msra.mxu0 %v2159
    %2532 = vmatprep.subr.bf16.mxu0 %v2164
    %2533 = vmatpush1.bf16.msra.mxu0 %v2163
    %2534 = vmatprep.subr.bf16.mxu0 %v2168
    %2535 = vmatpush1.bf16.msra.mxu0 %v2167
    %2536 = vmatprep.subr.bf16.mxu0 %v2172
    %2537 = vmatpush1.bf16.msra.mxu0 %v2171
    %2538 = vmatprep.subr.bf16.mxu0 %v2176
    %2539 = vmatpush1.bf16.msra.mxu0 %v2175
    %2540 = vmatprep.subr.bf16.mxu0 %v2180
    %2541 = vmatpush1.bf16.msra.mxu0 %v2179
    %2542 = vmatprep.subr.bf16.mxu0 %v2184
    %2543 = vmatpush1.bf16.msra.mxu0 %v2183
    %2544 = vmatprep.subr.bf16.mxu0 %v2188
    %2545 = vmatpush1.bf16.msra.mxu0 %v2187
    %2546 = vmatprep.subr.bf16.mxu0 %v2192
    %2547 = vmatpush1.bf16.msra.mxu0 %v2191
    %2548 = vmatprep.mubr.bf16.mxu0 %v1472
    %2549 = vmatmul.mubr.bf16.gmra.mrb[0].mxu0 %v1471
    %v2550 = vpop.f32.mrb[0].mxu0
    %v2551 = vadd.f32 %v2358, %v2550
    %v2552 = vpop.f32.mrb[0].mxu0
    %v2553 = vadd.f32 %v2360, %v2552
    %v2554 = vpop.f32.mrb[0].mxu0
    %v2555 = vadd.f32 %v2362, %v2554
    %v2556 = vpop.f32.mrb[0].mxu0
    %v2557 = vadd.f32 %v2364, %v2556
    %2558 = vmatprep.mubr.bf16.mxu0 %v1476
    %2559 = vmatmul.mubr.bf16.gmra.mrb[0].mxu0 %v1475
    %v2560 = vpop.f32.mrb[0].mxu0
    %v2561 = vadd.f32 %v2368, %v2560
    %v2562 = vpop.f32.mrb[0].mxu0
    %v2563 = vadd.f32 %v2370, %v2562
    %v2564 = vpop.f32.mrb[0].mxu0
    %v2565 = vadd.f32 %v2372, %v2564
    %v2566 = vpop.f32.mrb[0].mxu0
    %v2567 = vadd.f32 %v2374, %v2566
    %2568 = vmatprep.mubr.bf16.mxu0 %v1480
    %2569 = vmatmul.mubr.bf16.gmra.mrb[0].mxu0 %v1479
    %v2570 = vpop.f32.mrb[0].mxu0
    %v2571 = vadd.f32 %v2378, %v2570
    %v2572 = vpop.f32.mrb[0].mxu0
    %v2573 = vadd.f32 %v2380, %v2572
    %v2574 = vpop.f32.mrb[0].mxu0
    %v2575 = vadd.f32 %v2382, %v2574
    %v2576 = vpop.f32.mrb[0].mxu0
    %v2577 = vadd.f32 %v2384, %v2576
    %2578 = vmatprep.mubr.bf16.mxu0 %v1484
    %2579 = vmatmul.mubr.bf16.gmra.mrb[0].mxu0 %v1483
    %v2580 = vpop.f32.mrb[0].mxu0
    %v2581 = vadd.f32 %v2388, %v2580
    %v2582 = vpop.f32.mrb[0].mxu0
    %v2583 = vadd.f32 %v2390, %v2582
    %v2584 = vpop.f32.mrb[0].mxu0
    %v2585 = vadd.f32 %v2392, %v2584
    %v2586 = vpop.f32.mrb[0].mxu0
    %v2587 = vadd.f32 %v2394, %v2586
    %2588 = vmatprep.mubr.bf16.mxu0 %v1488
    %2589 = vmatmul.mubr.bf16.gmra.mrb[0].mxu0 %v1487
    %v2590 = vpop.f32.mrb[0].mxu0
    %v2591 = vadd.f32 %v2398, %v2590
    %v2592 = vpop.f32.mrb[0].mxu0
    %v2593 = vadd.f32 %v2400, %v2592
    %v2594 = vpop.f32.mrb[0].mxu0
    %v2595 = vadd.f32 %v2402, %v2594
    %v2596 = vpop.f32.mrb[0].mxu0
    %v2597 = vadd.f32 %v2404, %v2596
    %2598 = vmatprep.mubr.bf16.mxu0 %v1492
    %2599 = vmatmul.mubr.bf16.gmra.mrb[0].mxu0 %v1491
    %v2600 = vpop.f32.mrb[0].mxu0
    %v2601 = vadd.f32 %v2408, %v2600
    %v2602 = vpop.f32.mrb[0].mxu0
    %v2603 = vadd.f32 %v2410, %v2602
    %v2604 = vpop.f32.mrb[0].mxu0
    %v2605 = vadd.f32 %v2412, %v2604
    %v2606 = vpop.f32.mrb[0].mxu0
    %v2607 = vadd.f32 %v2414, %v2606
    %2608 = vmatprep.mubr.bf16.mxu0 %v1496
    %2609 = vmatmul.mubr.bf16.gmra.mrb[0].mxu0 %v1495
    %v2610 = vpop.f32.mrb[0].mxu0
    %v2611 = vadd.f32 %v2418, %v2610
    %v2612 = vpop.f32.mrb[0].mxu0
    %v2613 = vadd.f32 %v2420, %v2612
    %v2614 = vpop.f32.mrb[0].mxu0
    %v2615 = vadd.f32 %v2422, %v2614
    %v2616 = vpop.f32.mrb[0].mxu0
    %v2617 = vadd.f32 %v2424, %v2616
    %2618 = vmatprep.mubr.bf16.mxu0 %v1500
    %2619 = vmatmul.mubr.bf16.gmra.mrb[0].mxu0 %v1499
    %v2620 = vpop.f32.mrb[0].mxu0
    %v2621 = vadd.f32 %v2428, %v2620
    %v2622 = vpop.f32.mrb[0].mxu0
    %v2623 = vadd.f32 %v2430, %v2622
    %v2624 = vpop.f32.mrb[0].mxu0
    %v2625 = vadd.f32 %v2432, %v2624
    %v2626 = vpop.f32.mrb[0].mxu0
    %v2627 = vadd.f32 %v2434, %v2626
    %2628 = vmatprep.mubr.bf16.mxu0 %v1504
    %2629 = vmatmul.mubr.bf16.gmra.mrb[0].mxu0 %v1503
    %v2630 = vpop.f32.mrb[0].mxu0
    %v2631 = vadd.f32 %v2438, %v2630
    %v2632 = vpop.f32.mrb[0].mxu0
    %v2633 = vadd.f32 %v2440, %v2632
    %v2634 = vpop.f32.mrb[0].mxu0
    %v2635 = vadd.f32 %v2442, %v2634
    %v2636 = vpop.f32.mrb[0].mxu0
    %v2637 = vadd.f32 %v2444, %v2636
    %2638 = vmatprep.mubr.bf16.mxu0 %v1508
    %2639 = vmatmul.mubr.bf16.gmra.mrb[0].mxu0 %v1507
    %v2640 = vpop.f32.mrb[0].mxu0
    %v2641 = vadd.f32 %v2448, %v2640
    %v2642 = vpop.f32.mrb[0].mxu0
    %v2643 = vadd.f32 %v2450, %v2642
    %v2644 = vpop.f32.mrb[0].mxu0
    %v2645 = vadd.f32 %v2452, %v2644
    %v2646 = vpop.f32.mrb[0].mxu0
    %v2647 = vadd.f32 %v2454, %v2646
    %2648 = vmatprep.mubr.bf16.mxu0 %v1512
    %2649 = vmatmul.mubr.bf16.gmra.mrb[0].mxu0 %v1511
    %v2650 = vpop.f32.mrb[0].mxu0
    %v2651 = vadd.f32 %v2458, %v2650
    %v2652 = vpop.f32.mrb[0].mxu0
    %v2653 = vadd.f32 %v2460, %v2652
    %v2654 = vpop.f32.mrb[0].mxu0
    %v2655 = vadd.f32 %v2462, %v2654
    %v2656 = vpop.f32.mrb[0].mxu0
    %v2657 = vadd.f32 %v2464, %v2656
    %2658 = vmatprep.mubr.bf16.mxu0 %v1516
    %2659 = vmatmul.mubr.bf16.gmra.mrb[0].mxu0 %v1515
    %v2660 = vpop.f32.mrb[0].mxu0
    %v2661 = vadd.f32 %v2468, %v2660
    %v2662 = vpop.f32.mrb[0].mxu0
    %v2663 = vadd.f32 %v2470, %v2662
    %v2664 = vpop.f32.mrb[0].mxu0
    %v2665 = vadd.f32 %v2472, %v2664
    %v2666 = vpop.f32.mrb[0].mxu0
    %v2667 = vadd.f32 %v2474, %v2666
    %2668 = vmatprep.mubr.bf16.mxu0 %v1520
    %2669 = vmatmul.mubr.bf16.gmra.mrb[0].mxu0 %v1519
    %v2670 = vpop.f32.mrb[0].mxu0
    %v2671 = vadd.f32 %v2478, %v2670
    %v2672 = vpop.f32.mrb[0].mxu0
    %v2673 = vadd.f32 %v2480, %v2672
    %v2674 = vpop.f32.mrb[0].mxu0
    %v2675 = vadd.f32 %v2482, %v2674
    %v2676 = vpop.f32.mrb[0].mxu0
    %v2677 = vadd.f32 %v2484, %v2676
    %2678 = vmatprep.mubr.bf16.mxu0 %v1524
    %2679 = vmatmul.mubr.bf16.gmra.mrb[0].mxu0 %v1523
    %v2680 = vpop.f32.mrb[0].mxu0
    %v2681 = vadd.f32 %v2488, %v2680
    %v2682 = vpop.f32.mrb[0].mxu0
    %v2683 = vadd.f32 %v2490, %v2682
    %v2684 = vpop.f32.mrb[0].mxu0
    %v2685 = vadd.f32 %v2492, %v2684
    %v2686 = vpop.f32.mrb[0].mxu0
    %v2687 = vadd.f32 %v2494, %v2686
    %2688 = vmatprep.mubr.bf16.mxu0 %v1528
    %2689 = vmatmul.mubr.bf16.gmra.mrb[0].mxu0 %v1527
    %v2690 = vpop.f32.mrb[0].mxu0
    %v2691 = vadd.f32 %v2498, %v2690
    %v2692 = vpop.f32.mrb[0].mxu0
    %v2693 = vadd.f32 %v2500, %v2692
    %v2694 = vpop.f32.mrb[0].mxu0
    %v2695 = vadd.f32 %v2502, %v2694
    %v2696 = vpop.f32.mrb[0].mxu0
    %v2697 = vadd.f32 %v2504, %v2696
    %2698 = vmatprep.mubr.bf16.mxu0 %v1532
    %2699 = vmatmul.mubr.bf16.gmra.mrb[0].mxu0 %v1531
    %v2700 = vpop.f32.mrb[0].mxu0
    %v2701 = vadd.f32 %v2508, %v2700
    %v2702 = vpop.f32.mrb[0].mxu0
    %v2703 = vadd.f32 %v2510, %v2702
    %v2704 = vpop.f32.mrb[0].mxu0
    %v2705 = vadd.f32 %v2512, %v2704
    %v2706 = vpop.f32.mrb[0].mxu0
    %v2707 = vadd.f32 %v2514, %v2706
    %2708 = vdwg.mxu0
    %2709 = vmatprep.subr.bf16.mxu0 %v2070
    %2710 = vmatpush1.bf16.msra.mxu0 %v2069
    %2711 = vmatprep.subr.bf16.mxu0 %v2074
    %2712 = vmatpush1.bf16.msra.mxu0 %v2073
    %2713 = vmatprep.subr.bf16.mxu0 %v2078
    %2714 = vmatpush1.bf16.msra.mxu0 %v2077
    %2715 = vmatprep.subr.bf16.mxu0 %v2082
    %2716 = vmatpush1.bf16.msra.mxu0 %v2081
    %2717 = vmatprep.subr.bf16.mxu0 %v2086
    %2718 = vmatpush1.bf16.msra.mxu0 %v2085
    %2719 = vmatprep.subr.bf16.mxu0 %v2090
    %2720 = vmatpush1.bf16.msra.mxu0 %v2089
    %2721 = vmatprep.subr.bf16.mxu0 %v2094
    %2722 = vmatpush1.bf16.msra.mxu0 %v2093
    %2723 = vmatprep.subr.bf16.mxu0 %v2098
    %2724 = vmatpush1.bf16.msra.mxu0 %v2097
    %2725 = vmatprep.subr.bf16.mxu0 %v2102
    %2726 = vmatpush1.bf16.msra.mxu0 %v2101
    %2727 = vmatprep.subr.bf16.mxu0 %v2106
    %2728 = vmatpush1.bf16.msra.mxu0 %v2105
    %2729 = vmatprep.subr.bf16.mxu0 %v2110
    %2730 = vmatpush1.bf16.msra.mxu0 %v2109
    %2731 = vmatprep.subr.bf16.mxu0 %v2114
    %2732 = vmatpush1.bf16.msra.mxu0 %v2113
    %2733 = vmatprep.subr.bf16.mxu0 %v2118
    %2734 = vmatpush1.bf16.msra.mxu0 %v2117
    %2735 = vmatprep.subr.bf16.mxu0 %v2122
    %2736 = vmatpush1.bf16.msra.mxu0 %v2121
    %2737 = vmatprep.subr.bf16.mxu0 %v2126
    %2738 = vmatpush1.bf16.msra.mxu0 %v2125
    %2739 = vmatprep.subr.bf16.mxu0 %v2130
    %2740 = vmatpush1.bf16.msra.mxu0 %v2129
    %2741 = vmatprep.mubr.bf16.mxu0 %v1470
    %2742 = vmatmul.mubr.bf16.gmra.mrb[0].mxu0 %v1469
    %v2743 = vpop.f32.mrb[0].mxu0
    %v2744 = vadd.f32 %v1674, %v2743
    %v2745 = vpop.f32.mrb[0].mxu0
    %v2746 = vadd.f32 %v1678, %v2745
    %v2747 = vpop.f32.mrb[0].mxu0
    %v2748 = vadd.f32 %v1674, %v2747
    %v2749 = vpop.f32.mrb[0].mxu0
    %v2750 = vadd.f32 %v1678, %v2749
    %2751 = vmatprep.mubr.bf16.mxu0 %v1474
    %2752 = vmatmul.mubr.bf16.gmra.mrb[0].mxu0 %v1473
    %v2753 = vpop.f32.mrb[0].mxu0
    %v2754 = vadd.f32 %v1674, %v2753
    %v2755 = vpop.f32.mrb[0].mxu0
    %v2756 = vadd.f32 %v1678, %v2755
    %v2757 = vpop.f32.mrb[0].mxu0
    %v2758 = vadd.f32 %v1674, %v2757
    %v2759 = vpop.f32.mrb[0].mxu0
    %v2760 = vadd.f32 %v1678, %v2759
    %2761 = vmatprep.mubr.bf16.mxu0 %v1478
    %2762 = vmatmul.mubr.bf16.gmra.mrb[0].mxu0 %v1477
    %v2763 = vpop.f32.mrb[0].mxu0
    %v2764 = vadd.f32 %v1674, %v2763
    %v2765 = vpop.f32.mrb[0].mxu0
    %v2766 = vadd.f32 %v1678, %v2765
    %v2767 = vpop.f32.mrb[0].mxu0
    %v2768 = vadd.f32 %v1674, %v2767
    %v2769 = vpop.f32.mrb[0].mxu0
    %v2770 = vadd.f32 %v1678, %v2769
    %2771 = vmatprep.mubr.bf16.mxu0 %v1482
    %2772 = vmatmul.mubr.bf16.gmra.mrb[0].mxu0 %v1481
    %v2773 = vpop.f32.mrb[0].mxu0
    %v2774 = vadd.f32 %v1674, %v2773
    %v2775 = vpop.f32.mrb[0].mxu0
    %v2776 = vadd.f32 %v1678, %v2775
    %v2777 = vpop.f32.mrb[0].mxu0
    %v2778 = vadd.f32 %v1674, %v2777
    %v2779 = vpop.f32.mrb[0].mxu0
    %v2780 = vadd.f32 %v1678, %v2779
    %2781 = vmatprep.mubr.bf16.mxu0 %v1486
    %2782 = vmatmul.mubr.bf16.gmra.mrb[0].mxu0 %v1485
    %v2783 = vpop.f32.mrb[0].mxu0
    %v2784 = vadd.f32 %v1674, %v2783
    %v2785 = vpop.f32.mrb[0].mxu0
    %v2786 = vadd.f32 %v1678, %v2785
    %v2787 = vpop.f32.mrb[0].mxu0
    %v2788 = vadd.f32 %v1674, %v2787
    %v2789 = vpop.f32.mrb[0].mxu0
    %v2790 = vadd.f32 %v1678, %v2789
    %2791 = vmatprep.mubr.bf16.mxu0 %v1490
    %2792 = vmatmul.mubr.bf16.gmra.mrb[0].mxu0 %v1489
    %v2793 = vpop.f32.mrb[0].mxu0
    %v2794 = vadd.f32 %v1674, %v2793
    %v2795 = vpop.f32.mrb[0].mxu0
    %v2796 = vadd.f32 %v1678, %v2795
    %v2797 = vpop.f32.mrb[0].mxu0
    %v2798 = vadd.f32 %v1674, %v2797
    %v2799 = vpop.f32.mrb[0].mxu0
    %v2800 = vadd.f32 %v1678, %v2799
    %2801 = vmatprep.mubr.bf16.mxu0 %v1494
    %2802 = vmatmul.mubr.bf16.gmra.mrb[0].mxu0 %v1493
    %v2803 = vpop.f32.mrb[0].mxu0
    %v2804 = vadd.f32 %v1674, %v2803
    %v2805 = vpop.f32.mrb[0].mxu0
    %v2806 = vadd.f32 %v1678, %v2805
    %v2807 = vpop.f32.mrb[0].mxu0
    %v2808 = vadd.f32 %v1674, %v2807
    %v2809 = vpop.f32.mrb[0].mxu0
    %v2810 = vadd.f32 %v1678, %v2809
    %2811 = vmatprep.mubr.bf16.mxu0 %v1498
    %2812 = vmatmul.mubr.bf16.gmra.mrb[0].mxu0 %v1497
    %v2813 = vpop.f32.mrb[0].mxu0
    %v2814 = vadd.f32 %v1674, %v2813
    %v2815 = vpop.f32.mrb[0].mxu0
    %v2816 = vadd.f32 %v1678, %v2815
    %v2817 = vpop.f32.mrb[0].mxu0
    %v2818 = vadd.f32 %v1674, %v2817
    %v2819 = vpop.f32.mrb[0].mxu0
    %v2820 = vadd.f32 %v1678, %v2819
    %2821 = vmatprep.mubr.bf16.mxu0 %v1502
    %2822 = vmatmul.mubr.bf16.gmra.mrb[0].mxu0 %v1501
    %v2823 = vpop.f32.mrb[0].mxu0
    %v2824 = vadd.f32 %v1674, %v2823
    %v2825 = vpop.f32.mrb[0].mxu0
    %v2826 = vadd.f32 %v1678, %v2825
    %v2827 = vpop.f32.mrb[0].mxu0
    %v2828 = vadd.f32 %v1674, %v2827
    %v2829 = vpop.f32.mrb[0].mxu0
    %v2830 = vadd.f32 %v1678, %v2829
    %2831 = vmatprep.mubr.bf16.mxu0 %v1506
    %2832 = vmatmul.mubr.bf16.gmra.mrb[0].mxu0 %v1505
    %v2833 = vpop.f32.mrb[0].mxu0
    %v2834 = vadd.f32 %v1674, %v2833
    %v2835 = vpop.f32.mrb[0].mxu0
    %v2836 = vadd.f32 %v1678, %v2835
    %v2837 = vpop.f32.mrb[0].mxu0
    %v2838 = vadd.f32 %v1674, %v2837
    %v2839 = vpop.f32.mrb[0].mxu0
    %v2840 = vadd.f32 %v1678, %v2839
    %2841 = vmatprep.mubr.bf16.mxu0 %v1510
    %2842 = vmatmul.mubr.bf16.gmra.mrb[0].mxu0 %v1509
    %v2843 = vpop.f32.mrb[0].mxu0
    %v2844 = vadd.f32 %v1674, %v2843
    %v2845 = vpop.f32.mrb[0].mxu0
    %v2846 = vadd.f32 %v1678, %v2845
    %v2847 = vpop.f32.mrb[0].mxu0
    %v2848 = vadd.f32 %v1674, %v2847
    %v2849 = vpop.f32.mrb[0].mxu0
    %v2850 = vadd.f32 %v1678, %v2849
    %2851 = vmatprep.mubr.bf16.mxu0 %v1514
    %2852 = vmatmul.mubr.bf16.gmra.mrb[0].mxu0 %v1513
    %v2853 = vpop.f32.mrb[0].mxu0
    %v2854 = vadd.f32 %v1674, %v2853
    %v2855 = vpop.f32.mrb[0].mxu0
    %v2856 = vadd.f32 %v1678, %v2855
    %v2857 = vpop.f32.mrb[0].mxu0
    %v2858 = vadd.f32 %v1674, %v2857
    %v2859 = vpop.f32.mrb[0].mxu0
    %v2860 = vadd.f32 %v1678, %v2859
    %2861 = vmatprep.mubr.bf16.mxu0 %v1518
    %2862 = vmatmul.mubr.bf16.gmra.mrb[0].mxu0 %v1517
    %v2863 = vpop.f32.mrb[0].mxu0
    %v2864 = vadd.f32 %v1674, %v2863
    %v2865 = vpop.f32.mrb[0].mxu0
    %v2866 = vadd.f32 %v1678, %v2865
    %v2867 = vpop.f32.mrb[0].mxu0
    %v2868 = vadd.f32 %v1674, %v2867
    %v2869 = vpop.f32.mrb[0].mxu0
    %v2870 = vadd.f32 %v1678, %v2869
    %2871 = vmatprep.mubr.bf16.mxu0 %v1522
    %2872 = vmatmul.mubr.bf16.gmra.mrb[0].mxu0 %v1521
    %v2873 = vpop.f32.mrb[0].mxu0
    %v2874 = vadd.f32 %v1674, %v2873
    %v2875 = vpop.f32.mrb[0].mxu0
    %v2876 = vadd.f32 %v1678, %v2875
    %v2877 = vpop.f32.mrb[0].mxu0
    %v2878 = vadd.f32 %v1674, %v2877
    %v2879 = vpop.f32.mrb[0].mxu0
    %v2880 = vadd.f32 %v1678, %v2879
    %2881 = vmatprep.mubr.bf16.mxu0 %v1526
    %2882 = vmatmul.mubr.bf16.gmra.mrb[0].mxu0 %v1525
    %v2883 = vpop.f32.mrb[0].mxu0
    %v2884 = vadd.f32 %v1674, %v2883
    %v2885 = vpop.f32.mrb[0].mxu0
    %v2886 = vadd.f32 %v1678, %v2885
    %v2887 = vpop.f32.mrb[0].mxu0
    %v2888 = vadd.f32 %v1674, %v2887
    %v2889 = vpop.f32.mrb[0].mxu0
    %v2890 = vadd.f32 %v1678, %v2889
    %2891 = vmatprep.mubr.bf16.mxu0 %v1530
    %2892 = vmatmul.mubr.bf16.gmra.mrb[0].mxu0 %v1529
    %v2893 = vpop.f32.mrb[0].mxu0
    %v2894 = vadd.f32 %v1674, %v2893
    %v2895 = vpop.f32.mrb[0].mxu0
    %v2896 = vadd.f32 %v1678, %v2895
    %v2897 = vpop.f32.mrb[0].mxu0
    %v2898 = vadd.f32 %v1674, %v2897
    %v2899 = vpop.f32.mrb[0].mxu0
    %v2900 = vadd.f32 %v1678, %v2899
    %2901 = vdwg.mxu0
    %2902 = vmatprep.subr.bf16.mxu0 %v2134
    %2903 = vmatpush1.bf16.msra.mxu0 %v2133
    %2904 = vmatprep.subr.bf16.mxu0 %v2138
    %2905 = vmatpush1.bf16.msra.mxu0 %v2137
    %2906 = vmatprep.subr.bf16.mxu0 %v2142
    %2907 = vmatpush1.bf16.msra.mxu0 %v2141
    %2908 = vmatprep.subr.bf16.mxu0 %v2146
    %2909 = vmatpush1.bf16.msra.mxu0 %v2145
    %2910 = vmatprep.subr.bf16.mxu0 %v2150
    %2911 = vmatpush1.bf16.msra.mxu0 %v2149
    %2912 = vmatprep.subr.bf16.mxu0 %v2154
    %2913 = vmatpush1.bf16.msra.mxu0 %v2153
    %2914 = vmatprep.subr.bf16.mxu0 %v2158
    %2915 = vmatpush1.bf16.msra.mxu0 %v2157
    %2916 = vmatprep.subr.bf16.mxu0 %v2162
    %2917 = vmatpush1.bf16.msra.mxu0 %v2161
    %2918 = vmatprep.subr.bf16.mxu0 %v2166
    %2919 = vmatpush1.bf16.msra.mxu0 %v2165
    %2920 = vmatprep.subr.bf16.mxu0 %v2170
    %2921 = vmatpush1.bf16.msra.mxu0 %v2169
    %2922 = vmatprep.subr.bf16.mxu0 %v2174
    %2923 = vmatpush1.bf16.msra.mxu0 %v2173
    %2924 = vmatprep.subr.bf16.mxu0 %v2178
    %2925 = vmatpush1.bf16.msra.mxu0 %v2177
    %2926 = vmatprep.subr.bf16.mxu0 %v2182
    %2927 = vmatpush1.bf16.msra.mxu0 %v2181
    %2928 = vmatprep.subr.bf16.mxu0 %v2186
    %2929 = vmatpush1.bf16.msra.mxu0 %v2185
    %2930 = vmatprep.subr.bf16.mxu0 %v2190
    %2931 = vmatpush1.bf16.msra.mxu0 %v2189
    %2932 = vmatprep.subr.bf16.mxu0 %v2194
    %2933 = vmatpush1.bf16.msra.mxu0 %v2193
    %2934 = vmatprep.mubr.bf16.mxu0 %v1472
    %2935 = vmatmul.mubr.bf16.gmra.mrb[0].mxu0 %v1471
    %v2936 = vpop.f32.mrb[0].mxu0
    %v2937 = vadd.f32 %v2744, %v2936
    %v2938 = vpop.f32.mrb[0].mxu0
    %v2939 = vadd.f32 %v2746, %v2938
    %v2940 = vpop.f32.mrb[0].mxu0
    %v2941 = vadd.f32 %v2748, %v2940
    %v2942 = vpop.f32.mrb[0].mxu0
    %v2943 = vadd.f32 %v2750, %v2942
    %2944 = vmatprep.mubr.bf16.mxu0 %v1476
    %2945 = vmatmul.mubr.bf16.gmra.mrb[0].mxu0 %v1475
    %v2946 = vpop.f32.mrb[0].mxu0
    %v2947 = vadd.f32 %v2754, %v2946
    %v2948 = vpop.f32.mrb[0].mxu0
    %v2949 = vadd.f32 %v2756, %v2948
    %v2950 = vpop.f32.mrb[0].mxu0
    %v2951 = vadd.f32 %v2758, %v2950
    %v2952 = vpop.f32.mrb[0].mxu0
    %v2953 = vadd.f32 %v2760, %v2952
    %2954 = vmatprep.mubr.bf16.mxu0 %v1480
    %2955 = vmatmul.mubr.bf16.gmra.mrb[0].mxu0 %v1479
    %v2956 = vpop.f32.mrb[0].mxu0
    %v2957 = vadd.f32 %v2764, %v2956
    %v2958 = vpop.f32.mrb[0].mxu0
    %v2959 = vadd.f32 %v2766, %v2958
    %v2960 = vpop.f32.mrb[0].mxu0
    %v2961 = vadd.f32 %v2768, %v2960
    %v2962 = vpop.f32.mrb[0].mxu0
    %v2963 = vadd.f32 %v2770, %v2962
    %2964 = vmatprep.mubr.bf16.mxu0 %v1484
    %2965 = vmatmul.mubr.bf16.gmra.mrb[0].mxu0 %v1483
    %v2966 = vpop.f32.mrb[0].mxu0
    %v2967 = vadd.f32 %v2774, %v2966
    %v2968 = vpop.f32.mrb[0].mxu0
    %v2969 = vadd.f32 %v2776, %v2968
    %v2970 = vpop.f32.mrb[0].mxu0
    %v2971 = vadd.f32 %v2778, %v2970
    %v2972 = vpop.f32.mrb[0].mxu0
    %v2973 = vadd.f32 %v2780, %v2972
    %2974 = vmatprep.mubr.bf16.mxu0 %v1488
    %2975 = vmatmul.mubr.bf16.gmra.mrb[0].mxu0 %v1487
    %v2976 = vpop.f32.mrb[0].mxu0
    %v2977 = vadd.f32 %v2784, %v2976
    %v2978 = vpop.f32.mrb[0].mxu0
    %v2979 = vadd.f32 %v2786, %v2978
    %v2980 = vpop.f32.mrb[0].mxu0
    %v2981 = vadd.f32 %v2788, %v2980
    %v2982 = vpop.f32.mrb[0].mxu0
    %v2983 = vadd.f32 %v2790, %v2982
    %2984 = vmatprep.mubr.bf16.mxu0 %v1492
    %2985 = vmatmul.mubr.bf16.gmra.mrb[0].mxu0 %v1491
    %v2986 = vpop.f32.mrb[0].mxu0
    %v2987 = vadd.f32 %v2794, %v2986
    %v2988 = vpop.f32.mrb[0].mxu0
    %v2989 = vadd.f32 %v2796, %v2988
    %v2990 = vpop.f32.mrb[0].mxu0
    %v2991 = vadd.f32 %v2798, %v2990
    %v2992 = vpop.f32.mrb[0].mxu0
    %v2993 = vadd.f32 %v2800, %v2992
    %2994 = vmatprep.mubr.bf16.mxu0 %v1496
    %2995 = vmatmul.mubr.bf16.gmra.mrb[0].mxu0 %v1495
    %v2996 = vpop.f32.mrb[0].mxu0
    %v2997 = vadd.f32 %v2804, %v2996
    %v2998 = vpop.f32.mrb[0].mxu0
    %v2999 = vadd.f32 %v2806, %v2998
    %v3000 = vpop.f32.mrb[0].mxu0
    %v3001 = vadd.f32 %v2808, %v3000
    %v3002 = vpop.f32.mrb[0].mxu0
    %v3003 = vadd.f32 %v2810, %v3002
    %3004 = vmatprep.mubr.bf16.mxu0 %v1500
    %3005 = vmatmul.mubr.bf16.gmra.mrb[0].mxu0 %v1499
    %v3006 = vpop.f32.mrb[0].mxu0
    %v3007 = vadd.f32 %v2814, %v3006
    %v3008 = vpop.f32.mrb[0].mxu0
    %v3009 = vadd.f32 %v2816, %v3008
    %v3010 = vpop.f32.mrb[0].mxu0
    %v3011 = vadd.f32 %v2818, %v3010
    %v3012 = vpop.f32.mrb[0].mxu0
    %v3013 = vadd.f32 %v2820, %v3012
    %3014 = vmatprep.mubr.bf16.mxu0 %v1504
    %3015 = vmatmul.mubr.bf16.gmra.mrb[0].mxu0 %v1503
    %v3016 = vpop.f32.mrb[0].mxu0
    %v3017 = vadd.f32 %v2824, %v3016
    %v3018 = vpop.f32.mrb[0].mxu0
    %v3019 = vadd.f32 %v2826, %v3018
    %v3020 = vpop.f32.mrb[0].mxu0
    %v3021 = vadd.f32 %v2828, %v3020
    %v3022 = vpop.f32.mrb[0].mxu0
    %v3023 = vadd.f32 %v2830, %v3022
    %3024 = vmatprep.mubr.bf16.mxu0 %v1508
    %3025 = vmatmul.mubr.bf16.gmra.mrb[0].mxu0 %v1507
    %v3026 = vpop.f32.mrb[0].mxu0
    %v3027 = vadd.f32 %v2834, %v3026
    %v3028 = vpop.f32.mrb[0].mxu0
    %v3029 = vadd.f32 %v2836, %v3028
    %v3030 = vpop.f32.mrb[0].mxu0
    %v3031 = vadd.f32 %v2838, %v3030
    %v3032 = vpop.f32.mrb[0].mxu0
    %v3033 = vadd.f32 %v2840, %v3032
    %3034 = vmatprep.mubr.bf16.mxu0 %v1512
    %3035 = vmatmul.mubr.bf16.gmra.mrb[0].mxu0 %v1511
    %v3036 = vpop.f32.mrb[0].mxu0
    %v3037 = vadd.f32 %v2844, %v3036
    %v3038 = vpop.f32.mrb[0].mxu0
    %v3039 = vadd.f32 %v2846, %v3038
    %v3040 = vpop.f32.mrb[0].mxu0
    %v3041 = vadd.f32 %v2848, %v3040
    %v3042 = vpop.f32.mrb[0].mxu0
    %v3043 = vadd.f32 %v2850, %v3042
    %3044 = vmatprep.mubr.bf16.mxu0 %v1516
    %3045 = vmatmul.mubr.bf16.gmra.mrb[0].mxu0 %v1515
    %v3046 = vpop.f32.mrb[0].mxu0
    %v3047 = vadd.f32 %v2854, %v3046
    %v3048 = vpop.f32.mrb[0].mxu0
    %v3049 = vadd.f32 %v2856, %v3048
    %v3050 = vpop.f32.mrb[0].mxu0
    %v3051 = vadd.f32 %v2858, %v3050
    %v3052 = vpop.f32.mrb[0].mxu0
    %v3053 = vadd.f32 %v2860, %v3052
    %3054 = vmatprep.mubr.bf16.mxu0 %v1520
    %3055 = vmatmul.mubr.bf16.gmra.mrb[0].mxu0 %v1519
    %v3056 = vpop.f32.mrb[0].mxu0
    %v3057 = vadd.f32 %v2864, %v3056
    %v3058 = vpop.f32.mrb[0].mxu0
    %v3059 = vadd.f32 %v2866, %v3058
    %v3060 = vpop.f32.mrb[0].mxu0
    %v3061 = vadd.f32 %v2868, %v3060
    %v3062 = vpop.f32.mrb[0].mxu0
    %v3063 = vadd.f32 %v2870, %v3062
    %3064 = vmatprep.mubr.bf16.mxu0 %v1524
    %3065 = vmatmul.mubr.bf16.gmra.mrb[0].mxu0 %v1523
    %v3066 = vpop.f32.mrb[0].mxu0
    %v3067 = vadd.f32 %v2874, %v3066
    %v3068 = vpop.f32.mrb[0].mxu0
    %v3069 = vadd.f32 %v2876, %v3068
    %v3070 = vpop.f32.mrb[0].mxu0
    %v3071 = vadd.f32 %v2878, %v3070
    %v3072 = vpop.f32.mrb[0].mxu0
    %v3073 = vadd.f32 %v2880, %v3072
    %3074 = vmatprep.mubr.bf16.mxu0 %v1528
    %3075 = vmatmul.mubr.bf16.gmra.mrb[0].mxu0 %v1527
    %v3076 = vpop.f32.mrb[0].mxu0
    %v3077 = vadd.f32 %v2884, %v3076
    %v3078 = vpop.f32.mrb[0].mxu0
    %v3079 = vadd.f32 %v2886, %v3078
    %v3080 = vpop.f32.mrb[0].mxu0
    %v3081 = vadd.f32 %v2888, %v3080
    %v3082 = vpop.f32.mrb[0].mxu0
    %v3083 = vadd.f32 %v2890, %v3082
    %3084 = vmatprep.mubr.bf16.mxu0 %v1532
    %3085 = vmatmul.mubr.bf16.gmra.mrb[0].mxu0 %v1531
    %v3086 = vpop.f32.mrb[0].mxu0
    %v3087 = vadd.f32 %v2894, %v3086
    %v3088 = vpop.f32.mrb[0].mxu0
    %v3089 = vadd.f32 %v2896, %v3088
    %v3090 = vpop.f32.mrb[0].mxu0
    %v3091 = vadd.f32 %v2898, %v3090
    %v3092 = vpop.f32.mrb[0].mxu0
    %v3093 = vadd.f32 %v2900, %v3092
    %3094 = vdwg.mxu0
    %v3095 = vmax.f32 %v2551, 0.0
    %v3096 = vmax.f32 %v2553, 0.0
    %v3097 = vmax.f32 %v2937, 0.0
    %v3098 = vmax.f32 %v2939, 0.0
    %v3099 = vmax.f32 %v2555, 0.0
    %v3100 = vmax.f32 %v2557, 0.0
    %v3101 = vmax.f32 %v2941, 0.0
    %v3102 = vmax.f32 %v2943, 0.0
    %v3103 = vmax.f32 %v2561, 0.0
    %v3104 = vmax.f32 %v2563, 0.0
    %v3105 = vmax.f32 %v2947, 0.0
    %v3106 = vmax.f32 %v2949, 0.0
    %v3107 = vmax.f32 %v2565, 0.0
    %v3108 = vmax.f32 %v2567, 0.0
    %v3109 = vmax.f32 %v2951, 0.0
    %v3110 = vmax.f32 %v2953, 0.0
    %v3111 = vmax.f32 %v2571, 0.0
    %v3112 = vmax.f32 %v2573, 0.0
    %v3113 = vmax.f32 %v2957, 0.0
    %v3114 = vmax.f32 %v2959, 0.0
    %v3115 = vmax.f32 %v2575, 0.0
    %v3116 = vmax.f32 %v2577, 0.0
    %v3117 = vmax.f32 %v2961, 0.0
    %v3118 = vmax.f32 %v2963, 0.0
    %v3119 = vmax.f32 %v2581, 0.0
    %v3120 = vmax.f32 %v2583, 0.0
    %v3121 = vmax.f32 %v2967, 0.0
    %v3122 = vmax.f32 %v2969, 0.0
    %v3123 = vmax.f32 %v2585, 0.0
    %v3124 = vmax.f32 %v2587, 0.0
    %v3125 = vmax.f32 %v2971, 0.0
    %v3126 = vmax.f32 %v2973, 0.0
    %v3127 = vmax.f32 %v2591, 0.0
    %v3128 = vmax.f32 %v2593, 0.0
    %v3129 = vmax.f32 %v2977, 0.0
    %v3130 = vmax.f32 %v2979, 0.0
    %v3131 = vmax.f32 %v2595, 0.0
    %v3132 = vmax.f32 %v2597, 0.0
    %v3133 = vmax.f32 %v2981, 0.0
    %v3134 = vmax.f32 %v2983, 0.0
    %v3135 = vmax.f32 %v2601, 0.0
    %v3136 = vmax.f32 %v2603, 0.0
    %v3137 = vmax.f32 %v2987, 0.0
    %v3138 = vmax.f32 %v2989, 0.0
    %v3139 = vmax.f32 %v2605, 0.0
    %v3140 = vmax.f32 %v2607, 0.0
    %v3141 = vmax.f32 %v2991, 0.0
    %v3142 = vmax.f32 %v2993, 0.0
    %v3143 = vmax.f32 %v2611, 0.0
    %v3144 = vmax.f32 %v2613, 0.0
    %v3145 = vmax.f32 %v2997, 0.0
    %v3146 = vmax.f32 %v2999, 0.0
    %v3147 = vmax.f32 %v2615, 0.0
    %v3148 = vmax.f32 %v2617, 0.0
    %v3149 = vmax.f32 %v3001, 0.0
    %v3150 = vmax.f32 %v3003, 0.0
    %v3151 = vmax.f32 %v2621, 0.0
    %v3152 = vmax.f32 %v2623, 0.0
    %v3153 = vmax.f32 %v3007, 0.0
    %v3154 = vmax.f32 %v3009, 0.0
    %v3155 = vmax.f32 %v2625, 0.0
    %v3156 = vmax.f32 %v2627, 0.0
    %v3157 = vmax.f32 %v3011, 0.0
    %v3158 = vmax.f32 %v3013, 0.0
    %v3159 = vmax.f32 %v2631, 0.0
    %v3160 = vmax.f32 %v2633, 0.0
    %v3161 = vmax.f32 %v3017, 0.0
    %v3162 = vmax.f32 %v3019, 0.0
    %v3163 = vmax.f32 %v2635, 0.0
    %v3164 = vmax.f32 %v2637, 0.0
    %v3165 = vmax.f32 %v3021, 0.0
    %v3166 = vmax.f32 %v3023, 0.0
    %v3167 = vmax.f32 %v2641, 0.0
    %v3168 = vmax.f32 %v2643, 0.0
    %v3169 = vmax.f32 %v3027, 0.0
    %v3170 = vmax.f32 %v3029, 0.0
    %v3171 = vmax.f32 %v2645, 0.0
    %v3172 = vmax.f32 %v2647, 0.0
    %v3173 = vmax.f32 %v3031, 0.0
    %v3174 = vmax.f32 %v3033, 0.0
    %v3175 = vmax.f32 %v2651, 0.0
    %v3176 = vmax.f32 %v2653, 0.0
    %v3177 = vmax.f32 %v3037, 0.0
    %v3178 = vmax.f32 %v3039, 0.0
    %v3179 = vmax.f32 %v2655, 0.0
    %v3180 = vmax.f32 %v2657, 0.0
    %v3181 = vmax.f32 %v3041, 0.0
    %v3182 = vmax.f32 %v3043, 0.0
    %v3183 = vmax.f32 %v2661, 0.0
    %v3184 = vmax.f32 %v2663, 0.0
    %v3185 = vmax.f32 %v3047, 0.0
    %v3186 = vmax.f32 %v3049, 0.0
    %v3187 = vmax.f32 %v2665, 0.0
    %v3188 = vmax.f32 %v2667, 0.0
    %v3189 = vmax.f32 %v3051, 0.0
    %v3190 = vmax.f32 %v3053, 0.0
    %v3191 = vmax.f32 %v2671, 0.0
    %v3192 = vmax.f32 %v2673, 0.0
    %v3193 = vmax.f32 %v3057, 0.0
    %v3194 = vmax.f32 %v3059, 0.0
    %v3195 = vmax.f32 %v2675, 0.0
    %v3196 = vmax.f32 %v2677, 0.0
    %v3197 = vmax.f32 %v3061, 0.0
    %v3198 = vmax.f32 %v3063, 0.0
    %v3199 = vmax.f32 %v2681, 0.0
    %v3200 = vmax.f32 %v2683, 0.0
    %v3201 = vmax.f32 %v3067, 0.0
    %v3202 = vmax.f32 %v3069, 0.0
    %v3203 = vmax.f32 %v2685, 0.0
    %v3204 = vmax.f32 %v2687, 0.0
    %v3205 = vmax.f32 %v3071, 0.0
    %v3206 = vmax.f32 %v3073, 0.0
    %v3207 = vmax.f32 %v2691, 0.0
    %v3208 = vmax.f32 %v2693, 0.0
    %v3209 = vmax.f32 %v3077, 0.0
    %v3210 = vmax.f32 %v3079, 0.0
    %v3211 = vmax.f32 %v2695, 0.0
    %v3212 = vmax.f32 %v2697, 0.0
    %v3213 = vmax.f32 %v3081, 0.0
    %v3214 = vmax.f32 %v3083, 0.0
    %v3215 = vmax.f32 %v2701, 0.0
    %v3216 = vmax.f32 %v2703, 0.0
    %v3217 = vmax.f32 %v3087, 0.0
    %v3218 = vmax.f32 %v3089, 0.0
    %v3219 = vmax.f32 %v2705, 0.0
    %v3220 = vmax.f32 %v2707, 0.0
    %v3221 = vmax.f32 %v3091, 0.0
    %v3222 = vmax.f32 %v3093, 0.0
    %v3223 = vld [vmem:[#allocation15] sm:$0xf]
    %v3225 = vlaneseq
    %v3226 = vshrl.u32 %v3225, 7
    %v3227 = vsub.s32 0, %v3226
    %v3228 = vrot.slane %v3223, %v3227
    %v3229 = vlaneseq
    %v3230 = vshrl.u32 %v3229, 7
    %v3231 = vsub.s32 1, %v3230
    %v3232 = vrot.slane %v3223, %v3231
    %v3233 = vlaneseq
    %v3234 = vshrl.u32 %v3233, 7
    %v3235 = vsub.s32 2, %v3234
    %v3236 = vrot.slane %v3223, %v3235
    %v3237 = vlaneseq
    %v3238 = vshrl.u32 %v3237, 7
    %v3239 = vsub.s32 3, %v3238
    %v3240 = vrot.slane %v3223, %v3239
    %v3245 = vmul.f32 %v3095, %v3228
    %v3246 = vmul.f32 %v3096, %v3232
    %v3247 = vmul.f32 %v3097, %v3236
    %v3248 = vmul.f32 %v3098, %v3240
    %v3249 = vmul.f32 %v3099, %v3228
    %v3250 = vmul.f32 %v3100, %v3232
    %v3251 = vmul.f32 %v3101, %v3236
    %v3252 = vmul.f32 %v3102, %v3240
    %v3253 = vmul.f32 %v3103, %v3228
    %v3254 = vmul.f32 %v3104, %v3232
    %v3255 = vmul.f32 %v3105, %v3236
    %v3256 = vmul.f32 %v3106, %v3240
    %v3257 = vmul.f32 %v3107, %v3228
    %v3258 = vmul.f32 %v3108, %v3232
    %v3259 = vmul.f32 %v3109, %v3236
    %v3260 = vmul.f32 %v3110, %v3240
    %v3261 = vmul.f32 %v3111, %v3228
    %v3262 = vmul.f32 %v3112, %v3232
    %v3263 = vmul.f32 %v3113, %v3236
    %v3264 = vmul.f32 %v3114, %v3240
    %v3265 = vmul.f32 %v3115, %v3228
    %v3266 = vmul.f32 %v3116, %v3232
    %v3267 = vmul.f32 %v3117, %v3236
    %v3268 = vmul.f32 %v3118, %v3240
    %v3269 = vmul.f32 %v3119, %v3228
    %v3270 = vmul.f32 %v3120, %v3232
    %v3271 = vmul.f32 %v3121, %v3236
    %v3272 = vmul.f32 %v3122, %v3240
    %v3273 = vmul.f32 %v3123, %v3228
    %v3274 = vmul.f32 %v3124, %v3232
    %v3275 = vmul.f32 %v3125, %v3236
    %v3276 = vmul.f32 %v3126, %v3240
    %v3277 = vmul.f32 %v3127, %v3228
    %v3278 = vmul.f32 %v3128, %v3232
    %v3279 = vmul.f32 %v3129, %v3236
    %v3280 = vmul.f32 %v3130, %v3240
    %v3281 = vmul.f32 %v3131, %v3228
    %v3282 = vmul.f32 %v3132, %v3232
    %v3283 = vmul.f32 %v3133, %v3236
    %v3284 = vmul.f32 %v3134, %v3240
    %v3285 = vmul.f32 %v3135, %v3228
    %v3286 = vmul.f32 %v3136, %v3232
    %v3287 = vmul.f32 %v3137, %v3236
    %v3288 = vmul.f32 %v3138, %v3240
    %v3289 = vmul.f32 %v3139, %v3228
    %v3290 = vmul.f32 %v3140, %v3232
    %v3291 = vmul.f32 %v3141, %v3236
    %v3292 = vmul.f32 %v3142, %v3240
    %v3293 = vmul.f32 %v3143, %v3228
    %v3294 = vmul.f32 %v3144, %v3232
    %v3295 = vmul.f32 %v3145, %v3236
    %v3296 = vmul.f32 %v3146, %v3240
    %v3297 = vmul.f32 %v3147, %v3228
    %v3298 = vmul.f32 %v3148, %v3232
    %v3299 = vmul.f32 %v3149, %v3236
    %v3300 = vmul.f32 %v3150, %v3240
    %v3301 = vmul.f32 %v3151, %v3228
    %v3302 = vmul.f32 %v3152, %v3232
    %v3303 = vmul.f32 %v3153, %v3236
    %v3304 = vmul.f32 %v3154, %v3240
    %v3305 = vmul.f32 %v3155, %v3228
    %v3306 = vmul.f32 %v3156, %v3232
    %v3307 = vmul.f32 %v3157, %v3236
    %v3308 = vmul.f32 %v3158, %v3240
    %v3309 = vmul.f32 %v3159, %v3228
    %v3310 = vmul.f32 %v3160, %v3232
    %v3311 = vmul.f32 %v3161, %v3236
    %v3312 = vmul.f32 %v3162, %v3240
    %v3313 = vmul.f32 %v3163, %v3228
    %v3314 = vmul.f32 %v3164, %v3232
    %v3315 = vmul.f32 %v3165, %v3236
    %v3316 = vmul.f32 %v3166, %v3240
    %v3317 = vmul.f32 %v3167, %v3228
    %v3318 = vmul.f32 %v3168, %v3232
    %v3319 = vmul.f32 %v3169, %v3236
    %v3320 = vmul.f32 %v3170, %v3240
    %v3321 = vmul.f32 %v3171, %v3228
    %v3322 = vmul.f32 %v3172, %v3232
    %v3323 = vmul.f32 %v3173, %v3236
    %v3324 = vmul.f32 %v3174, %v3240
    %v3325 = vmul.f32 %v3175, %v3228
    %v3326 = vmul.f32 %v3176, %v3232
    %v3327 = vmul.f32 %v3177, %v3236
    %v3328 = vmul.f32 %v3178, %v3240
    %v3329 = vmul.f32 %v3179, %v3228
    %v3330 = vmul.f32 %v3180, %v3232
    %v3331 = vmul.f32 %v3181, %v3236
    %v3332 = vmul.f32 %v3182, %v3240
    %v3333 = vmul.f32 %v3183, %v3228
    %v3334 = vmul.f32 %v3184, %v3232
    %v3335 = vmul.f32 %v3185, %v3236
    %v3336 = vmul.f32 %v3186, %v3240
    %v3337 = vmul.f32 %v3187, %v3228
    %v3338 = vmul.f32 %v3188, %v3232
    %v3339 = vmul.f32 %v3189, %v3236
    %v3340 = vmul.f32 %v3190, %v3240
    %v3341 = vmul.f32 %v3191, %v3228
    %v3342 = vmul.f32 %v3192, %v3232
    %v3343 = vmul.f32 %v3193, %v3236
    %v3344 = vmul.f32 %v3194, %v3240
    %v3345 = vmul.f32 %v3195, %v3228
    %v3346 = vmul.f32 %v3196, %v3232
    %v3347 = vmul.f32 %v3197, %v3236
    %v3348 = vmul.f32 %v3198, %v3240
    %v3349 = vmul.f32 %v3199, %v3228
    %v3350 = vmul.f32 %v3200, %v3232
    %v3351 = vmul.f32 %v3201, %v3236
    %v3352 = vmul.f32 %v3202, %v3240
    %v3353 = vmul.f32 %v3203, %v3228
    %v3354 = vmul.f32 %v3204, %v3232
    %v3355 = vmul.f32 %v3205, %v3236
    %v3356 = vmul.f32 %v3206, %v3240
    %v3357 = vmul.f32 %v3207, %v3228
    %v3358 = vmul.f32 %v3208, %v3232
    %v3359 = vmul.f32 %v3209, %v3236
    %v3360 = vmul.f32 %v3210, %v3240
    %v3361 = vmul.f32 %v3211, %v3228
    %v3362 = vmul.f32 %v3212, %v3232
    %v3363 = vmul.f32 %v3213, %v3236
    %v3364 = vmul.f32 %v3214, %v3240
    %v3365 = vmul.f32 %v3215, %v3228
    %v3366 = vmul.f32 %v3216, %v3232
    %v3367 = vmul.f32 %v3217, %v3236
    %v3368 = vmul.f32 %v3218, %v3240
    %v3369 = vmul.f32 %v3219, %v3228
    %v3370 = vmul.f32 %v3220, %v3232
    %v3371 = vmul.f32 %v3221, %v3236
    %v3372 = vmul.f32 %v3222, %v3240
    %v3373 = vadd.f32 %v3245, %v3246
    %v3374 = vadd.f32 %v3373, %v3247
    %v3375 = vadd.f32 %v3374, %v3248
    %3376 = vadd.xlane.f32.xlu0 %v3375
    %v3377 = vpop.xlane.xlu0 %3376
    %v3378 = vadd.f32 %v3249, %v3250
    %v3379 = vadd.f32 %v3378, %v3251
    %v3380 = vadd.f32 %v3379, %v3252
    %3381 = vadd.xlane.f32.xlu0 %v3380
    %v3382 = vpop.xlane.xlu0 %3381
    %v3383 = vadd.f32 %v3253, %v3254
    %v3384 = vadd.f32 %v3383, %v3255
    %v3385 = vadd.f32 %v3384, %v3256
    %3386 = vadd.xlane.f32.xlu0 %v3385
    %v3387 = vpop.xlane.xlu0 %3386
    %v3388 = vadd.f32 %v3257, %v3258
    %v3389 = vadd.f32 %v3388, %v3259
    %v3390 = vadd.f32 %v3389, %v3260
    %3391 = vadd.xlane.f32.xlu0 %v3390
    %v3392 = vpop.xlane.xlu0 %3391
    %v3393 = vadd.f32 %v3261, %v3262
    %v3394 = vadd.f32 %v3393, %v3263
    %v3395 = vadd.f32 %v3394, %v3264
    %3396 = vadd.xlane.f32.xlu0 %v3395
    %v3397 = vpop.xlane.xlu0 %3396
    %v3398 = vadd.f32 %v3265, %v3266
    %v3399 = vadd.f32 %v3398, %v3267
    %v3400 = vadd.f32 %v3399, %v3268
    %3401 = vadd.xlane.f32.xlu0 %v3400
    %v3402 = vpop.xlane.xlu0 %3401
    %v3403 = vadd.f32 %v3269, %v3270
    %v3404 = vadd.f32 %v3403, %v3271
    %v3405 = vadd.f32 %v3404, %v3272
    %3406 = vadd.xlane.f32.xlu0 %v3405
    %v3407 = vpop.xlane.xlu0 %3406
    %v3408 = vadd.f32 %v3273, %v3274
    %v3409 = vadd.f32 %v3408, %v3275
    %v3410 = vadd.f32 %v3409, %v3276
    %3411 = vadd.xlane.f32.xlu0 %v3410
    %v3412 = vpop.xlane.xlu0 %3411
    %v3413 = vadd.f32 %v3277, %v3278
    %v3414 = vadd.f32 %v3413, %v3279
    %v3415 = vadd.f32 %v3414, %v3280
    %3416 = vadd.xlane.f32.xlu0 %v3415
    %v3417 = vpop.xlane.xlu0 %3416
    %v3418 = vadd.f32 %v3281, %v3282
    %v3419 = vadd.f32 %v3418, %v3283
    %v3420 = vadd.f32 %v3419, %v3284
    %3421 = vadd.xlane.f32.xlu0 %v3420
    %v3422 = vpop.xlane.xlu0 %3421
    %v3423 = vadd.f32 %v3285, %v3286
    %v3424 = vadd.f32 %v3423, %v3287
    %v3425 = vadd.f32 %v3424, %v3288
    %3426 = vadd.xlane.f32.xlu0 %v3425
    %v3427 = vpop.xlane.xlu0 %3426
    %v3428 = vadd.f32 %v3289, %v3290
    %v3429 = vadd.f32 %v3428, %v3291
    %v3430 = vadd.f32 %v3429, %v3292
    %3431 = vadd.xlane.f32.xlu0 %v3430
    %v3432 = vpop.xlane.xlu0 %3431
    %v3433 = vadd.f32 %v3293, %v3294
    %v3434 = vadd.f32 %v3433, %v3295
    %v3435 = vadd.f32 %v3434, %v3296
    %3436 = vadd.xlane.f32.xlu0 %v3435
    %v3437 = vpop.xlane.xlu0 %3436
    %v3438 = vadd.f32 %v3297, %v3298
    %v3439 = vadd.f32 %v3438, %v3299
    %v3440 = vadd.f32 %v3439, %v3300
    %3441 = vadd.xlane.f32.xlu0 %v3440
    %v3442 = vpop.xlane.xlu0 %3441
    %v3443 = vadd.f32 %v3301, %v3302
    %v3444 = vadd.f32 %v3443, %v3303
    %v3445 = vadd.f32 %v3444, %v3304
    %3446 = vadd.xlane.f32.xlu0 %v3445
    %v3447 = vpop.xlane.xlu0 %3446
    %v3448 = vadd.f32 %v3305, %v3306
    %v3449 = vadd.f32 %v3448, %v3307
    %v3450 = vadd.f32 %v3449, %v3308
    %3451 = vadd.xlane.f32.xlu0 %v3450
    %v3452 = vpop.xlane.xlu0 %3451
    %v3453 = vadd.f32 %v3309, %v3310
    %v3454 = vadd.f32 %v3453, %v3311
    %v3455 = vadd.f32 %v3454, %v3312
    %3456 = vadd.xlane.f32.xlu0 %v3455
    %v3457 = vpop.xlane.xlu0 %3456
    %v3458 = vadd.f32 %v3313, %v3314
    %v3459 = vadd.f32 %v3458, %v3315
    %v3460 = vadd.f32 %v3459, %v3316
    %3461 = vadd.xlane.f32.xlu0 %v3460
    %v3462 = vpop.xlane.xlu0 %3461
    %v3463 = vadd.f32 %v3317, %v3318
    %v3464 = vadd.f32 %v3463, %v3319
    %v3465 = vadd.f32 %v3464, %v3320
    %3466 = vadd.xlane.f32.xlu0 %v3465
    %v3467 = vpop.xlane.xlu0 %3466
    %v3468 = vadd.f32 %v3321, %v3322
    %v3469 = vadd.f32 %v3468, %v3323
    %v3470 = vadd.f32 %v3469, %v3324
    %3471 = vadd.xlane.f32.xlu0 %v3470
    %v3472 = vpop.xlane.xlu0 %3471
    %v3473 = vadd.f32 %v3325, %v3326
    %v3474 = vadd.f32 %v3473, %v3327
    %v3475 = vadd.f32 %v3474, %v3328
    %3476 = vadd.xlane.f32.xlu0 %v3475
    %v3477 = vpop.xlane.xlu0 %3476
    %v3478 = vadd.f32 %v3329, %v3330
    %v3479 = vadd.f32 %v3478, %v3331
    %v3480 = vadd.f32 %v3479, %v3332
    %3481 = vadd.xlane.f32.xlu0 %v3480
    %v3482 = vpop.xlane.xlu0 %3481
    %v3483 = vadd.f32 %v3333, %v3334
    %v3484 = vadd.f32 %v3483, %v3335
    %v3485 = vadd.f32 %v3484, %v3336
    %3486 = vadd.xlane.f32.xlu0 %v3485
    %v3487 = vpop.xlane.xlu0 %3486
    %v3488 = vadd.f32 %v3337, %v3338
    %v3489 = vadd.f32 %v3488, %v3339
    %v3490 = vadd.f32 %v3489, %v3340
    %3491 = vadd.xlane.f32.xlu0 %v3490
    %v3492 = vpop.xlane.xlu0 %3491
    %v3493 = vadd.f32 %v3341, %v3342
    %v3494 = vadd.f32 %v3493, %v3343
    %v3495 = vadd.f32 %v3494, %v3344
    %3496 = vadd.xlane.f32.xlu0 %v3495
    %v3497 = vpop.xlane.xlu0 %3496
    %v3498 = vadd.f32 %v3345, %v3346
    %v3499 = vadd.f32 %v3498, %v3347
    %v3500 = vadd.f32 %v3499, %v3348
    %3501 = vadd.xlane.f32.xlu0 %v3500
    %v3502 = vpop.xlane.xlu0 %3501
    %v3503 = vadd.f32 %v3349, %v3350
    %v3504 = vadd.f32 %v3503, %v3351
    %v3505 = vadd.f32 %v3504, %v3352
    %3506 = vadd.xlane.f32.xlu0 %v3505
    %v3507 = vpop.xlane.xlu0 %3506
    %v3508 = vadd.f32 %v3353, %v3354
    %v3509 = vadd.f32 %v3508, %v3355
    %v3510 = vadd.f32 %v3509, %v3356
    %3511 = vadd.xlane.f32.xlu0 %v3510
    %v3512 = vpop.xlane.xlu0 %3511
    %v3513 = vadd.f32 %v3357, %v3358
    %v3514 = vadd.f32 %v3513, %v3359
    %v3515 = vadd.f32 %v3514, %v3360
    %3516 = vadd.xlane.f32.xlu0 %v3515
    %v3517 = vpop.xlane.xlu0 %3516
    %v3518 = vadd.f32 %v3361, %v3362
    %v3519 = vadd.f32 %v3518, %v3363
    %v3520 = vadd.f32 %v3519, %v3364
    %3521 = vadd.xlane.f32.xlu0 %v3520
    %v3522 = vpop.xlane.xlu0 %3521
    %v3523 = vadd.f32 %v3365, %v3366
    %v3524 = vadd.f32 %v3523, %v3367
    %v3525 = vadd.f32 %v3524, %v3368
    %3526 = vadd.xlane.f32.xlu0 %v3525
    %v3527 = vpop.xlane.xlu0 %3526
    %v3528 = vadd.f32 %v3369, %v3370
    %v3529 = vadd.f32 %v3528, %v3371
    %v3530 = vadd.f32 %v3529, %v3372
    %3531 = vadd.xlane.f32.xlu0 %v3530
    %v3532 = vpop.xlane.xlu0 %3531
    %v3533 = vadd.f32 %v1406, %v3377
    %v3534 = vadd.f32 %v1408, %v3382
    %v3535 = vadd.f32 %v1410, %v3387
    %v3536 = vadd.f32 %v1412, %v3392
    %v3537 = vadd.f32 %v1414, %v3397
    %v3538 = vadd.f32 %v1416, %v3402
    %v3539 = vadd.f32 %v1418, %v3407
    %v3540 = vadd.f32 %v1420, %v3412
    %v3541 = vadd.f32 %v1422, %v3417
    %v3542 = vadd.f32 %v1424, %v3422
    %v3543 = vadd.f32 %v1426, %v3427
    %v3544 = vadd.f32 %v1428, %v3432
    %v3545 = vadd.f32 %v1430, %v3437
    %v3546 = vadd.f32 %v1432, %v3442
    %v3547 = vadd.f32 %v1434, %v3447
    %v3548 = vadd.f32 %v1436, %v3452
    %v3549 = vadd.f32 %v1438, %v3457
    %v3550 = vadd.f32 %v1440, %v3462
    %v3551 = vadd.f32 %v1442, %v3467
    %v3552 = vadd.f32 %v1444, %v3472
    %v3553 = vadd.f32 %v1446, %v3477
    %v3554 = vadd.f32 %v1448, %v3482
    %v3555 = vadd.f32 %v1450, %v3487
    %v3556 = vadd.f32 %v1452, %v3492
    %v3557 = vadd.f32 %v1454, %v3497
    %v3558 = vadd.f32 %v1456, %v3502
    %v3559 = vadd.f32 %v1458, %v3507
    %v3560 = vadd.f32 %v1460, %v3512
    %v3561 = vadd.f32 %v1462, %v3517
    %v3562 = vadd.f32 %v1464, %v3522
    %v3563 = vadd.f32 %v1466, %v3527
    %v3564 = vadd.f32 %v1468, %v3532
    %s3565 = sld [smem:[#allocation2]]
    %v3566 = vstv %s3565
    %v3567 = vadd.f32 %v3533, %v3566
    %v3568 = vadd.f32 %v3534, %v3566
    %v3569 = vadd.f32 %v3535, %v3566
    %v3570 = vadd.f32 %v3536, %v3566
    %v3571 = vadd.f32 %v3537, %v3566
    %v3572 = vadd.f32 %v3538, %v3566
    %v3573 = vadd.f32 %v3539, %v3566
    %v3574 = vadd.f32 %v3540, %v3566
    %v3575 = vadd.f32 %v3541, %v3566
    %v3576 = vadd.f32 %v3542, %v3566
    %v3577 = vadd.f32 %v3543, %v3566
    %v3578 = vadd.f32 %v3544, %v3566
    %v3579 = vadd.f32 %v3545, %v3566
    %v3580 = vadd.f32 %v3546, %v3566
    %v3581 = vadd.f32 %v3547, %v3566
    %v3582 = vadd.f32 %v3548, %v3566
    %v3583 = vadd.f32 %v3549, %v3566
    %v3584 = vadd.f32 %v3550, %v3566
    %v3585 = vadd.f32 %v3551, %v3566
    %v3586 = vadd.f32 %v3552, %v3566
    %v3587 = vadd.f32 %v3553, %v3566
    %v3588 = vadd.f32 %v3554, %v3566
    %v3589 = vadd.f32 %v3555, %v3566
    %v3590 = vadd.f32 %v3556, %v3566
    %v3591 = vadd.f32 %v3557, %v3566
    %v3592 = vadd.f32 %v3558, %v3566
    %v3593 = vadd.f32 %v3559, %v3566
    %v3594 = vadd.f32 %v3560, %v3566
    %v3595 = vadd.f32 %v3561, %v3566
    %v3596 = vadd.f32 %v3562, %v3566
    %v3597 = vadd.f32 %v3563, %v3566
    %v3598 = vadd.f32 %v3564, %v3566
    %vm3599 = vcmask 7168
    %3600 = vst.msk [vmem:[#allocation17] sm:$0xff] %vm3599, %v3567
    %3601 = vst.msk [vmem:[#allocation17 + $0x8] sm:$0xff] %vm3599, %v3568
    %3602 = vst.msk [vmem:[#allocation17 + $0x10] sm:$0xff] %vm3599, %v3569
    %3603 = vst.msk [vmem:[#allocation17 + $0x18] sm:$0xff] %vm3599, %v3570
    %3604 = vst.msk [vmem:[#allocation17 + $0x20] sm:$0xff] %vm3599, %v3571
    %3605 = vst.msk [vmem:[#allocation17 + $0x28] sm:$0xff] %vm3599, %v3572
    %3606 = vst.msk [vmem:[#allocation17 + $0x30] sm:$0xff] %vm3599, %v3573
    %3607 = vst.msk [vmem:[#allocation17 + $0x38] sm:$0xff] %vm3599, %v3574
    %3608 = vst.msk [vmem:[#allocation17 + $0x40] sm:$0xff] %vm3599, %v3575
    %3609 = vst.msk [vmem:[#allocation17 + $0x48] sm:$0xff] %vm3599, %v3576
    %3610 = vst.msk [vmem:[#allocation17 + $0x50] sm:$0xff] %vm3599, %v3577
    %3611 = vst.msk [vmem:[#allocation17 + $0x58] sm:$0xff] %vm3599, %v3578
    %3612 = vst.msk [vmem:[#allocation17 + $0x60] sm:$0xff] %vm3599, %v3579
    %3613 = vst.msk [vmem:[#allocation17 + $0x68] sm:$0xff] %vm3599, %v3580
    %3614 = vst.msk [vmem:[#allocation17 + $0x70] sm:$0xff] %vm3599, %v3581
    %3615 = vst.msk [vmem:[#allocation17 + $0x78] sm:$0xff] %vm3599, %v3582
    %3616 = vst.msk [vmem:[#allocation17 + $0x80] sm:$0xff] %vm3599, %v3583
    %3617 = vst.msk [vmem:[#allocation17 + $0x88] sm:$0xff] %vm3599, %v3584
    %3618 = vst.msk [vmem:[#allocation17 + $0x90] sm:$0xff] %vm3599, %v3585
    %3619 = vst.msk [vmem:[#allocation17 + $0x98] sm:$0xff] %vm3599, %v3586
    %3620 = vst.msk [vmem:[#allocation17 + $0xa0] sm:$0xff] %vm3599, %v3587
    %3621 = vst.msk [vmem:[#allocation17 + $0xa8] sm:$0xff] %vm3599, %v3588
    %3622 = vst.msk [vmem:[#allocation17 + $0xb0] sm:$0xff] %vm3599, %v3589
    %3623 = vst.msk [vmem:[#allocation17 + $0xb8] sm:$0xff] %vm3599, %v3590
    %3624 = vst.msk [vmem:[#allocation17 + $0xc0] sm:$0xff] %vm3599, %v3591
    %3625 = vst.msk [vmem:[#allocation17 + $0xc8] sm:$0xff] %vm3599, %v3592
    %3626 = vst.msk [vmem:[#allocation17 + $0xd0] sm:$0xff] %vm3599, %v3593
    %3627 = vst.msk [vmem:[#allocation17 + $0xd8] sm:$0xff] %vm3599, %v3594
    %3628 = vst.msk [vmem:[#allocation17 + $0xe0] sm:$0xff] %vm3599, %v3595
    %3629 = vst.msk [vmem:[#allocation17 + $0xe8] sm:$0xff] %vm3599, %v3596
    %3630 = vst.msk [vmem:[#allocation17 + $0xf0] sm:$0xff] %vm3599, %v3597
    %3631 = vst.msk [vmem:[#allocation17 + $0xf8] sm:$0xff] %vm3599, %v3598
    // Predicated region
    $region70: #{tpu_custom_call.1} parent=1 // pred_check
      _
    $region71: #{tpu_custom_call.1} parent=1 // pred_check_branch
      %3633 = sbr.rel (0) target = $region73
    $region72: #{tpu_custom_call.1} parent=1 // pred_region
      %s3635 = ssub.s32 4096, 4096
      %3636 = vsyncadd [#allocation5], %s3635
      %s3637 = sshll.u32 [#allocation17], 4
      %s3638 = int_to_ptr.vmem [resolvable:$true] %s3637
      %3643 = dma.vmem_to_hbm [thread:$0]  %s3638, 4096, %s9, [#allocation5], 128, 128, 8
    $region73: #{tpu_custom_call.1} parent=1 // pred_fallthru
      _
    // Predicated region
    $region74: #{tpu_custom_call.1} parent=1 // pred_check
      _
    $region75: #{tpu_custom_call.1} parent=1 // pred_check_branch
      %3645 = sbr.rel (0) target = $region77
    $region76: #{tpu_custom_call.1} parent=1 // pred_region
      %3646 = dma.done [#allocation5], 4096
    $region77: #{tpu_custom_call.1} parent=1 // pred_fallthru
      _
    %3647 = vsyncpa [#allocation4], 1
    %3648 = vsyncpa [#allocation7], 1
    %3649 = vsyncpa [#allocation10], 1
    %3650 = vsyncpa [#allocation13], 1
    %3651 = vsyncpa [#allocation16], 1
    %3652 = vsyncpa [#allocation5], 1

</llo_original>
